<compile_context>
chip_gen: v7x
topology: tpu7x:2x2x1
jax: 0.10.0
libtpu: 0.0.40
codegen_flags: <defaults>
</compile_context>

<pallas_src>
import math
from functools import partial

import jax
import jax.numpy as jnp
from jax.experimental import pallas as pl
from jax.experimental.pallas import tpu as pltpu


# ----------------------------------------------------------------------------
# small in-kernel helpers
# ----------------------------------------------------------------------------

def _mm(a, b):
    """MXU matmul: bf16 operands, f32 accumulate."""
    return jnp.dot(a.astype(jnp.bfloat16), b.astype(jnp.bfloat16),
                   preferred_element_type=jnp.float32)


def _rmsnorm(x, w_row, eps):
    """x: (..., D) f32, w_row: (1, D) f32."""
    ms = jnp.mean(x * x, axis=-1, keepdims=True)
    w = w_row.reshape((1,) * (x.ndim - 1) + (w_row.shape[-1],))
    return w * (x * jax.lax.rsqrt(ms + eps))


# ----------------------------------------------------------------------------
# Kernel 1: SentenceLevelGlobalAttention (fully fused) + text residual
# ----------------------------------------------------------------------------

def _sga_kernel(text_ref, gaw_ref, pool_ref, scat_ref,
                wq_ref, bq_ref, wkv_ref, bkv_ref, wo_ref, bo_ref, normw_ref,
                o_ref, *, nh, eps):
    text = text_ref[...]                                   # (B, S, D) f32
    B, S, D = text.shape
    hd = D // nh
    gaw = gaw_ref[...]                                     # (1, D)

    # query = sum_b(text * w) / sum(w)                     -> (S, D)
    query = jnp.sum(text * gaw[None, :, :], axis=0) / jnp.sum(gaw)

    # projections (K and V fused into one matmul)
    q = _mm(query, wq_ref[...]) + bq_ref[...]              # (S, D)
    kv = _mm(text.reshape(B * S, D), wkv_ref[...]) + bkv_ref[...]   # (B*S, 2D)
    k = kv[:, :D].reshape(B, S, D)
    v = kv[:, D:].reshape(B, S, D)

    # per-head attention, Lq = 1, Lk = B.  Head grouping done with a (D, nh)
    # pooling matmul (no lane-splitting reshape).
    pool = pool_ref[...]                                   # (D, nh), 0/1
    scat = scat_ref[...]                                   # (nh, D), 0/1
    scale = 1.0 / math.sqrt(float(hd))
    prod = q[None, :, :] * k                               # (B, S, D)
    scores = (jnp.dot(prod.reshape(B * S, D), pool,
                      preferred_element_type=jnp.float32)
              .reshape(B, S, nh)) * scale                  # (B, S, nh)
    m = jnp.max(scores, axis=0, keepdims=True)
    e = jnp.exp(scores - m)
    p = e * pl.reciprocal(jnp.sum(e, axis=0, keepdims=True), approx=True)
    p_full = (jnp.dot(p.reshape(B * S, nh), scat,
                      preferred_element_type=jnp.float32)
              .reshape(B, S, D))                           # p[b,s,head(d)]
    ctx = jnp.sum(p_full * v, axis=0)                      # (S, D)

    gc = _mm(ctx, wo_ref[...]) + bo_ref[...]               # (S, D)

    # norm1(gc + text) broadcast over batch, then the outer text residual
    res = gc[None, :, :] + text                            # (B, S, D)
    o_ref[...] = (text + _rmsnorm(res, normw_ref[...], eps)).astype(o_ref.dtype)


def sga_pallas(text, sp, num_heads):
    B, S, D = text.shape
    return pl.pallas_call(
        partial(_sga_kernel, nh=num_heads, eps=1e-8),
        out_shape=jax.ShapeDtypeStruct((B, S, D), jnp.float32),
    )(text, sp['gaw'], sp['head_pool'], sp['head_scat'],
      sp['wq'], sp['bq'], sp['wkv'], sp['bkv'], sp['wo'], sp['bo'], sp['norm_w'])


# ----------------------------------------------------------------------------
# Kernel 2/3: generic fused linear kernels (pre-transposed weights)
# ----------------------------------------------------------------------------

def _linear_kernel(x_ref, w_ref, b_ref, o_ref):
    o_ref[...] = (_mm(x_ref[...], w_ref[...]) + b_ref[...]).astype(o_ref.dtype)


def linear_pallas(x2, w_t, b_row):
    M = x2.shape[0]
    N = w_t.shape[1]
    return pl.pallas_call(
        _linear_kernel,
        out_shape=jax.ShapeDtypeStruct((M, N), jnp.float32),
    )(x2, w_t, b_row)


def _linear2_kernel(x1_ref, x2_ref, w1_ref, w2_ref, b_ref, o_ref):
    acc = _mm(x1_ref[...], w1_ref[...]) + _mm(x2_ref[...], w2_ref[...])
    o_ref[...] = (acc + b_ref[...]).astype(o_ref.dtype)


def linear2_pallas(x1, x2, w1_t, w2_t, b_row):
    M = x1.shape[0]
    N = w1_t.shape[1]
    return pl.pallas_call(
        _linear2_kernel,
        out_shape=jax.ShapeDtypeStruct((M, N), jnp.float32),
    )(x1, x2, w1_t, w2_t, b_row)


# ----------------------------------------------------------------------------
# Kernel 4: bidirectional GRU recurrence (both directions in one pipeline)
# ----------------------------------------------------------------------------

def _bigru_kernel(gxf_ref, gxb_ref, whh_ref, bhh_ref, of_ref, ob_ref, h_ref, *, H):
    t = pl.program_id(0)

    @pl.when(t == 0)
    def _():
        h_ref[...] = jnp.zeros_like(h_ref)

    h = h_ref[...]                                         # (B, 2H) f32  [h_f | h_b]
    # single hidden matmul for both directions (block-diagonal W_hh)
    gh = jnp.dot(h, whh_ref[...], preferred_element_type=jnp.float32) + bhh_ref[...]
    gxf = gxf_ref[...]                                     # (B, 3H)  fwd gates @ t
    gxb = gxb_ref[...]                                     # (B, 3H)  bwd gates @ T-1-t

    h_f = h[:, :H]
    h_b = h[:, H:]
    ghf = gh[:, :3 * H]
    ghb = gh[:, 3 * H:]

    r_f = jax.nn.sigmoid(gxf[:, :H] + ghf[:, :H])
    z_f = jax.nn.sigmoid(gxf[:, H:2 * H] + ghf[:, H:2 * H])
    n_f = jnp.tanh(gxf[:, 2 * H:] + r_f * ghf[:, 2 * H:])
    r_b = jax.nn.sigmoid(gxb[:, :H] + ghb[:, :H])
    z_b = jax.nn.sigmoid(gxb[:, H:2 * H] + ghb[:, H:2 * H])
    n_b = jnp.tanh(gxb[:, 2 * H:] + r_b * ghb[:, 2 * H:])

    hf_new = (1.0 - z_f) * n_f + z_f * h_f
    hb_new = (1.0 - z_b) * n_b + z_b * h_b
    h_ref[...] = jnp.concatenate([hf_new, hb_new], axis=-1)
    of_ref[...] = hf_new.astype(of_ref.dtype)
    ob_ref[...] = hb_new.astype(ob_ref.dtype)


def bigru_encode(x, gp, H):
    """x: (B, T, I) batch-first -> (B, T, D): bidirectional GRU + output linear."""
    B, T, I = x.shape
    D = gp['b_lin'].shape[-1]

    # 1) input gate projection for both directions, whole sequence, one matmul
    gates = linear_pallas(x.reshape(B * T, I), gp['w_ih'], gp['b_ih'])  # (B*T, 6H)
    gates = gates.reshape(B, T, 6 * H).transpose(1, 0, 2)               # (T, B, 6H)
    gx_f = gates[..., :3 * H]                                           # (T, B, 3H)
    gx_b = gates[..., 3 * H:]                                           # (T, B, 3H)

    # 2) sequential recurrence; backward lane reads/writes reversed time blocks
    out_f, out_b = pl.pallas_call(
        partial(_bigru_kernel, H=H),
        grid=(T,),
        in_specs=[
            pl.BlockSpec((None, B, 3 * H), lambda t: (t, 0, 0)),
            pl.BlockSpec((None, B, 3 * H), lambda t: (T - 1 - t, 0, 0)),
            pl.BlockSpec((2 * H, 6 * H), lambda t: (0, 0)),
            pl.BlockSpec((1, 6 * H), lambda t: (0, 0)),
        ],
        out_specs=(
            pl.BlockSpec((None, B, H), lambda t: (t, 0, 0)),
            pl.BlockSpec((None, B, H), lambda t: (T - 1 - t, 0, 0)),
        ),
        out_shape=(
            jax.ShapeDtypeStruct((T, B, H), jnp.float32),
            jax.ShapeDtypeStruct((T, B, H), jnp.float32),
        ),
        scratch_shapes=[pltpu.VMEM((B, 2 * H), jnp.float32)],
        compiler_params=pltpu.CompilerParams(dimension_semantics=("arbitrary",)),
    )(gx_f, gx_b, gp['w_hh'], gp['b_hh'])

    # 3) output projection (concat fwd/bwd implicitly by splitting the weight)
    ef = out_f.transpose(1, 0, 2).reshape(B * T, H)
    eb = out_b.transpose(1, 0, 2).reshape(B * T, H)
    enc = linear2_pallas(ef, eb, gp['w_lin_f'], gp['w_lin_b'], gp['b_lin'])
    return enc.reshape(B, T, D)


# ----------------------------------------------------------------------------
# Kernel 5: both cross-modal attentions + cat_connect + final RMSNorm fused
# ----------------------------------------------------------------------------

def _fusion_kernel(tgc_ref, text_ref, venc_ref, aenc_ref,
                   wq_ref, bq_ref, wkv_ref, bkv_ref, wfc_ref, bfc_ref, cnorm_ref,
                   wcv_ref, wca_ref, bcat_ref, fnorm_ref, o_ref, *, eps):
    tgc = tgc_ref[...]                                      # (B, S, D)
    B, S, D = tgc.shape
    scale = 1.0 / math.sqrt(float(D))                       # CrossAttention: 1/sqrt(hidden)

    # shared Q projection (same module, same q for both modalities)
    q = (_mm(tgc.reshape(B * S, D), wq_ref[...]) + bq_ref[...]).reshape(B, S, D)
    q_b = q.astype(jnp.bfloat16)
    cnorm = cnorm_ref[...]

    def cross(enc):
        T = enc.shape[1]
        kv = (_mm(enc.reshape(B * T, D), wkv_ref[...]) + bkv_ref[...]).reshape(B, T, 2 * D)
        k = kv[..., :D]
        v = kv[..., D:]
        s = jnp.einsum('bsd,btd->bst', q_b, k.astype(jnp.bfloat16),
                       preferred_element_type=jnp.float32) * scale
        m = jnp.max(s, axis=-1, keepdims=True)
        e = jnp.exp(s - m)
        p = e * pl.reciprocal(jnp.sum(e, axis=-1, keepdims=True), approx=True)
        attn = jnp.einsum('bst,btd->bsd', p.astype(jnp.bfloat16), v.astype(jnp.bfloat16),
                          preferred_element_type=jnp.float32)
        out = (_mm(attn.reshape(B * S, D), wfc_ref[...]) + bfc_ref[...]).reshape(B, S, D)
        return _rmsnorm(out + tgc, cnorm, eps)

    ctv = cross(venc_ref[...])
    cta = cross(aenc_ref[...])

    # cat_connect on the implicit concat [ctv | cta]
    shift = (_mm(ctv.reshape(B * S, D), wcv_ref[...]) +
             _mm(cta.reshape(B * S, D), wca_ref[...]) + bcat_ref[...]).reshape(B, S, D)
    res = shift + text_ref[...]
    o_ref[...] = _rmsnorm(res, fnorm_ref[...], eps).astype(o_ref.dtype)


def fusion_pallas(text_gc, text, v_enc, a_enc, fp):
    B, S, D = text.shape
    return pl.pallas_call(
        partial(_fusion_kernel, eps=1e-8),
        out_shape=jax.ShapeDtypeStruct((B, S, D), jnp.float32),
    )(text_gc, text, v_enc, a_enc,
      fp['wq'], fp['bq'], fp['wkv'], fp['bkv'], fp['fc'], fp['bfc'], fp['cnorm'],
      fp['wcat_v'], fp['wcat_a'], fp['bcat'], fp['fnorm'])


# ----------------------------------------------------------------------------
# Forward pass
# ----------------------------------------------------------------------------

def gcaa_forward(prep, text, visual, acoustic, *, hidden_gru):
    text_gc = sga_pallas(text, prep['sga'], prep['num_heads'])            # (B, S, D)
    v_enc = bigru_encode(visual, prep['vgru'], hidden_gru)                # (B, Tv, D)
    a_enc = bigru_encode(acoustic, prep['agru'], hidden_gru)              # (B, Ta, D)
    output = fusion_pallas(text_gc, text, v_enc, a_enc, prep['fusion'])   # (B, S, D)
    return output, text_gc, a_enc, v_enc


# ----------------------------------------------------------------------------
# Parameters: PyTorch-convention init + one-time fused/pre-transposed prepare
# ----------------------------------------------------------------------------

def init_params(key, text_dim, hidden_gru, visual_dim=47, acoustic_dim=74):
    def nxt():
        nonlocal key
        key, sub = jax.random.split(key)
        return sub

    def lin(out_f, in_f):
        return (jax.random.normal(nxt(), (out_f, in_f), jnp.float32) * 0.05,
                jax.random.normal(nxt(), (out_f,), jnp.float32) * 0.05)

    def gru_dir(in_f, H):
        return (jax.random.normal(nxt(), (3 * H, in_f), jnp.float32) * 0.1,
                jax.random.normal(nxt(), (3 * H, H), jnp.float32) * 0.1,
                jax.random.normal(nxt(), (3 * H,), jnp.float32) * 0.1,
                jax.random.normal(nxt(), (3 * H,), jnp.float32) * 0.1)

    D = text_dim
    p = {}
    p['ga_weights'] = jnp.ones((D,), jnp.float32)
    p['ga_norm_w'] = jnp.ones((D,), jnp.float32)
    mha = {}
    mha['wq'], mha['bq'] = lin(D, D)
    mha['wk'], mha['bk'] = lin(D, D)
    mha['wv'], mha['bv'] = lin(D, D)
    mha['wo'], mha['bo'] = lin(D, D)
    p['mha'] = mha
    p['vgru_f'] = gru_dir(visual_dim, hidden_gru)
    p['vgru_b'] = gru_dir(visual_dim, hidden_gru)
    p['agru_f'] = gru_dir(acoustic_dim, hidden_gru)
    p['agru_b'] = gru_dir(acoustic_dim, hidden_gru)
    p['vlin_w'], p['vlin_b'] = lin(D, 2 * hidden_gru)
    p['alin_w'], p['alin_b'] = lin(D, 2 * hidden_gru)
    cma = {}
    cma['wq'], cma['bq'] = lin(D, D)
    cma['wk'], cma['bk'] = lin(D, D)
    cma['wv'], cma['bv'] = lin(D, D)
    cma['fc_w'], cma['fc_b'] = lin(D, D)
    cma['norm_w'] = jnp.ones((D,), jnp.float32)
    p['cma'] = cma
    p['cat_w'], p['cat_b'] = lin(D, 2 * D)
    p['norm_w'] = jnp.ones((D,), jnp.float32)
    return p


def prepare_params(p, text_dim, num_heads, H):
    """One-time weight fusion / pre-transposition (no per-call w.T in kernels)."""
    D = text_dim
    hd = D // num_heads
    head_pool = (jnp.arange(D)[:, None] // hd
                 == jnp.arange(num_heads)[None, :]).astype(jnp.float32)    # (D, nh)

    mha = p['mha']
    sga = dict(
        gaw=p['ga_weights'].reshape(1, D),
        head_pool=head_pool,
        head_scat=head_pool.T,
        wq=mha['wq'].T, bq=mha['bq'].reshape(1, D),
        wkv=jnp.concatenate([mha['wk'].T, mha['wv'].T], axis=1),
        bkv=jnp.concatenate([mha['bk'], mha['bv']]).reshape(1, 2 * D),
        wo=mha['wo'].T, bo=mha['bo'].reshape(1, D),
        norm_w=p['ga_norm_w'].reshape(1, D),
    )

    def gru_prep(fwd, bwd, lin_w, lin_b):
        w_ih_f, w_hh_f, b_ih_f, b_hh_f = fwd
        w_ih_b, w_hh_b, b_ih_b, b_hh_b = bwd
        Dm = lin_w.shape[0]
        w_ih = jnp.concatenate([w_ih_f.T, w_ih_b.T], axis=1)              # (I, 6H)
        b_ih = jnp.concatenate([b_ih_f, b_ih_b]).reshape(1, 6 * H)
        w_hh = jnp.zeros((2 * H, 6 * H), jnp.float32)                     # block-diag
        w_hh = w_hh.at[:H, :3 * H].set(w_hh_f.T)
        w_hh = w_hh.at[H:, 3 * H:].set(w_hh_b.T)
        b_hh = jnp.concatenate([b_hh_f, b_hh_b]).reshape(1, 6 * H)
        return dict(w_ih=w_ih, b_ih=b_ih, w_hh=w_hh, b_hh=b_hh,
                    w_lin_f=lin_w[:, :H].T, w_lin_b=lin_w[:, H:].T,
                    b_lin=lin_b.reshape(1, Dm))

    cma = p['cma']
    fusion = dict(
        wq=cma['wq'].T, bq=cma['bq'].reshape(1, D),
        wkv=jnp.concatenate([cma['wk'].T, cma['wv'].T], axis=1),
        bkv=jnp.concatenate([cma['bk'], cma['bv']]).reshape(1, 2 * D),
        fc=cma['fc_w'].T, bfc=cma['fc_b'].reshape(1, D),
        cnorm=cma['norm_w'].reshape(1, D),
        wcat_v=p['cat_w'][:, :D].T, wcat_a=p['cat_w'][:, D:].T,
        bcat=p['cat_b'].reshape(1, D),
        fnorm=p['norm_w'].reshape(1, D),
    )
    return dict(
        num_heads=num_heads,
        sga=sga,
        vgru=gru_prep(p['vgru_f'], p['vgru_b'], p['vlin_w'], p['vlin_b']),
        agru=gru_prep(p['agru_f'], p['agru_b'], p['alin_w'], p['alin_b']),
        fusion=fusion,
    )


# ----------------------------------------------------------------------------
if __name__ == "__main__":
    TEXT_DIM = 32          # scaled-down text_dim (divisible by num_heads=8)
    NUM_HEADS = 8
    H_GRU = 16             # scaled-down hidden_size_gru
    B, S, Tv, Ta = 2, 8, 8, 6

    key = jax.random.PRNGKey(0)
    k1, k2, k3, kp = jax.random.split(key, 4)
    text = jax.random.normal(k1, (B, S, TEXT_DIM), jnp.float32)
    visual = jax.random.normal(k2, (B, Tv, 47), jnp.float32)
    acoustic = jax.random.normal(k3, (B, Ta, 74), jnp.float32)

    params = init_params(kp, TEXT_DIM, H_GRU)
    prep = prepare_params(params, TEXT_DIM, NUM_HEADS, H_GRU)
    # num_heads baked into prep; only hidden_gru is a static kwarg of the forward.
    prep_arrays = {k: v for k, v in prep.items() if k != 'num_heads'}

    def fwd(prep_arr, t, v, a):
        full = dict(prep_arr, num_heads=NUM_HEADS)
        return gcaa_forward(full, t, v, a, hidden_gru=H_GRU)

    fwd_jit = jax.jit(fwd)
    out, text_gc, a_enc, v_enc = fwd_jit(prep_arrays, text, visual, acoustic)
    jax.tree_util.tree_map(jax.block_until_ready, (out, text_gc, a_enc, v_enc))

    assert out.shape == (B, S, TEXT_DIM)
    assert text_gc.shape == (B, S, TEXT_DIM)
    assert a_enc.shape == (B, Ta, TEXT_DIM)
    assert v_enc.shape == (B, Tv, TEXT_DIM)
    assert all(bool(jnp.all(jnp.isfinite(x))) for x in (out, text_gc, a_enc, v_enc))
    print("KERNEL_OK")
</pallas_src>

<mosaic_0001>
module attributes {stable_mosaic.version = 11 : i64} {
  func.func @_linear_kernel(%arg0: memref<16x47xf32, #tpu.memory_space<vmem>>, %arg1: memref<47x96xf32, #tpu.memory_space<vmem>>, %arg2: memref<1x96xf32, #tpu.memory_space<vmem>>, %arg3: memref<16x96xf32, #tpu.memory_space<vmem>>) attributes {dimension_semantics = [], scalar_prefetch = 0 : i64, scratch_operands = 0 : i64, tpu.core_type = #tpu.core_type<tc>} {
    %c0 = arith.constant 0 : index
    %c0_0 = arith.constant 0 : index
    %0 = vector.load %arg0[%c0, %c0_0] : memref<16x47xf32, #tpu.memory_space<vmem>>, vector<16x47xf32>
    %c0_1 = arith.constant 0 : index
    %c0_2 = arith.constant 0 : index
    %1 = vector.load %arg1[%c0_1, %c0_2] : memref<47x96xf32, #tpu.memory_space<vmem>>, vector<47x96xf32>
    %2 = arith.truncf %0 : vector<16x47xf32> to vector<16x47xbf16>
    %3 = arith.truncf %1 : vector<47x96xf32> to vector<47x96xbf16>
    %cst = arith.constant dense<0.000000e+00> : vector<16x96xf32>
    %4 = tpu.matmul %2, %3, %cst {dimension_numbers = #tpu.dot_dimension_numbers<[1], [0], [0], [1], [0, 0, 1, 1], [], []>} : vector<16x47xbf16>, vector<47x96xbf16>, vector<16x96xf32> -> vector<16x96xf32>
    %c0_3 = arith.constant 0 : index
    %c0_4 = arith.constant 0 : index
    %5 = vector.load %arg2[%c0_3, %c0_4] : memref<1x96xf32, #tpu.memory_space<vmem>>, vector<1x96xf32>
    %6 = vector.broadcast %5 : vector<1x96xf32> to vector<16x96xf32>
    %7 = arith.addf %4, %6 : vector<16x96xf32>
    %c0_5 = arith.constant 0 : index
    %c0_6 = arith.constant 0 : index
    %8 = vector.load %arg3[%c0_5, %c0_6] : memref<16x96xf32, #tpu.memory_space<vmem>>, vector<16x96xf32>
    tpu.vector_store %arg3[%c0_5, %c0_6], %7 {strides = array<i32>} : memref<16x96xf32, #tpu.memory_space<vmem>>, vector<16x96xf32>,
    return
  }
}

module attributes {stable_mosaic.version = 11 : i64} {
  func.func @_bigru_kernel(%arg0: i32, %arg1: memref<1x2x48xf32, #tpu.memory_space<vmem>>, %arg2: memref<1x2x48xf32, #tpu.memory_space<vmem>>, %arg3: memref<32x96xf32, #tpu.memory_space<vmem>>, %arg4: memref<1x96xf32, #tpu.memory_space<vmem>>, %arg5: memref<1x2x16xf32, #tpu.memory_space<vmem>>, %arg6: memref<1x2x16xf32, #tpu.memory_space<vmem>>, %arg7: memref<2x32xf32, #tpu.memory_space<vmem>>) attributes {dimension_semantics = [#tpu.dimension_semantics<arbitrary>], iteration_bounds = array<i64: 8>, scalar_prefetch = 0 : i64, scratch_operands = 1 : i64, tpu.core_type = #tpu.core_type<tc>, window_params = [{transform_indices = @transform_0, window_bounds = array<i64: 1, 2, 48>}, {transform_indices = @transform_1, window_bounds = array<i64: 1, 2, 48>}, {pipeline_mode = #tpu.pipeline_mode<synchronous>, transform_indices = @transform_2, window_bounds = array<i64: 32, 96>}, {pipeline_mode = #tpu.pipeline_mode<synchronous>, transform_indices = @transform_3, window_bounds = array<i64: 1, 96>}, {transform_indices = @transform_4, window_bounds = array<i64: 1, 2, 16>}, {transform_indices = @transform_5, window_bounds = array<i64: 1, 2, 16>}]} {
    %c0_i32 = arith.constant 0 : i32
    %0 = arith.cmpi eq, %arg0, %c0_i32 : i32
    %1 = arith.extui %0 : i1 to i32
    %c0_i32_0 = arith.constant 0 : i32
    %2 = arith.cmpi ne, %1, %c0_i32_0 : i32
    scf.if %2 {
      %cst_26 = arith.constant 0.000000e+00 : f32
      %77 = vector.broadcast %cst_26 : f32 to vector<2x32xf32>
      %c0_27 = arith.constant 0 : index
      %c0_28 = arith.constant 0 : index
      %78 = vector.load %arg7[%c0_27, %c0_28] : memref<2x32xf32, #tpu.memory_space<vmem>>, vector<2x32xf32>
      tpu.vector_store %arg7[%c0_27, %c0_28], %77 {strides = array<i32>} : memref<2x32xf32, #tpu.memory_space<vmem>>, vector<2x32xf32>,
    } else {
    }
    %c0 = arith.constant 0 : index
    %c0_1 = arith.constant 0 : index
    %3 = vector.load %arg7[%c0, %c0_1] : memref<2x32xf32, #tpu.memory_space<vmem>>, vector<2x32xf32>
    %c0_2 = arith.constant 0 : index
    %c0_3 = arith.constant 0 : index
    %4 = vector.load %arg3[%c0_2, %c0_3] : memref<32x96xf32, #tpu.memory_space<vmem>>, vector<32x96xf32>
    %cst = arith.constant dense<0.000000e+00> : vector<2x96xf32>
    %5 = tpu.matmul %3, %4, %cst {dimension_numbers = #tpu.dot_dimension_numbers<[1], [0], [0], [1], [0, 0, 1, 1], [], []>} : vector<2x32xf32>, vector<32x96xf32>, vector<2x96xf32> -> vector<2x96xf32>
    %c0_4 = arith.constant 0 : index
    %c0_5 = arith.constant 0 : index
    %6 = vector.load %arg4[%c0_4, %c0_5] : memref<1x96xf32, #tpu.memory_space<vmem>>, vector<1x96xf32>
    %7 = vector.broadcast %6 : vector<1x96xf32> to vector<2x96xf32>
    %8 = arith.addf %5, %7 : vector<2x96xf32>
    %c0_6 = arith.constant 0 : index
    %c0_7 = arith.constant 0 : index
    %c0_8 = arith.constant 0 : index
    %9 = vector.load %arg1[%c0_6, %c0_7, %c0_8] : memref<1x2x48xf32, #tpu.memory_space<vmem>>, vector<1x2x48xf32>
    %10 = vector.shape_cast %9 : vector<1x2x48xf32> to vector<2x48xf32>
    %c0_9 = arith.constant 0 : index
    %c0_10 = arith.constant 0 : index
    %c0_11 = arith.constant 0 : index
    %11 = vector.load %arg2[%c0_9, %c0_10, %c0_11] : memref<1x2x48xf32, #tpu.memory_space<vmem>>, vector<1x2x48xf32>
    %12 = vector.shape_cast %11 : vector<1x2x48xf32> to vector<2x48xf32>
    %13 = vector.extract_strided_slice %3 {offsets = [0, 0], sizes = [2, 16], strides = [1, 1]} : vector<2x32xf32> to vector<2x16xf32>
    %14 = vector.extract_strided_slice %3 {offsets = [0, 16], sizes = [2, 16], strides = [1, 1]} : vector<2x32xf32> to vector<2x16xf32>
    %15 = vector.extract_strided_slice %8 {offsets = [0, 0], sizes = [2, 48], strides = [1, 1]} : vector<2x96xf32> to vector<2x48xf32>
    %16 = vector.extract_strided_slice %8 {offsets = [0, 48], sizes = [2, 48], strides = [1, 1]} : vector<2x96xf32> to vector<2x48xf32>
    %17 = vector.extract_strided_slice %10 {offsets = [0, 0], sizes = [2, 16], strides = [1, 1]} : vector<2x48xf32> to vector<2x16xf32>
    %18 = vector.extract_strided_slice %15 {offsets = [0, 0], sizes = [2, 16], strides = [1, 1]} : vector<2x48xf32> to vector<2x16xf32>
    %19 = arith.addf %17, %18 : vector<2x16xf32>
    %20 = arith.negf %19 : vector<2x16xf32>
    %21 = math.exp %20 : vector<2x16xf32>
    %cst_12 = arith.constant 1.000000e+00 : f32
    %22 = vector.broadcast %cst_12 : f32 to vector<2x16xf32>
    %23 = arith.addf %22, %21 : vector<2x16xf32>
    %24 = arith.divf %22, %23 : vector<2x16xf32>
    %25 = vector.extract_strided_slice %10 {offsets = [0, 16], sizes = [2, 16], strides = [1, 1]} : vector<2x48xf32> to vector<2x16xf32>
    %26 = vector.extract_strided_slice %15 {offsets = [0, 16], sizes = [2, 16], strides = [1, 1]} : vector<2x48xf32> to vector<2x16xf32>
    %27 = arith.addf %25, %26 : vector<2x16xf32>
    %28 = arith.negf %27 : vector<2x16xf32>
    %29 = math.exp %28 : vector<2x16xf32>
    %cst_13 = arith.constant 1.000000e+00 : f32
    %30 = vector.broadcast %cst_13 : f32 to vector<2x16xf32>
    %31 = arith.addf %30, %29 : vector<2x16xf32>
    %32 = arith.divf %30, %31 : vector<2x16xf32>
    %33 = vector.extract_strided_slice %10 {offsets = [0, 32], sizes = [2, 16], strides = [1, 1]} : vector<2x48xf32> to vector<2x16xf32>
    %34 = vector.extract_strided_slice %15 {offsets = [0, 32], sizes = [2, 16], strides = [1, 1]} : vector<2x48xf32> to vector<2x16xf32>
    %35 = arith.mulf %24, %34 : vector<2x16xf32>
    %36 = arith.addf %33, %35 : vector<2x16xf32>
    %37 = math.tanh %36 : vector<2x16xf32>
    %38 = vector.extract_strided_slice %12 {offsets = [0, 0], sizes = [2, 16], strides = [1, 1]} : vector<2x48xf32> to vector<2x16xf32>
    %39 = vector.extract_strided_slice %16 {offsets = [0, 0], sizes = [2, 16], strides = [1, 1]} : vector<2x48xf32> to vector<2x16xf32>
    %40 = arith.addf %38, %39 : vector<2x16xf32>
    %41 = arith.negf %40 : vector<2x16xf32>
    %42 = math.exp %41 : vector<2x16xf32>
    %cst_14 = arith.constant 1.000000e+00 : f32
    %43 = vector.broadcast %cst_14 : f32 to vector<2x16xf32>
    %44 = arith.addf %43, %42 : vector<2x16xf32>
    %45 = arith.divf %43, %44 : vector<2x16xf32>
    %46 = vector.extract_strided_slice %12 {offsets = [0, 16], sizes = [2, 16], strides = [1, 1]} : vector<2x48xf32> to vector<2x16xf32>
    %47 = vector.extract_strided_slice %16 {offsets = [0, 16], sizes = [2, 16], strides = [1, 1]} : vector<2x48xf32> to vector<2x16xf32>
    %48 = arith.addf %46, %47 : vector<2x16xf32>
    %49 = arith.negf %48 : vector<2x16xf32>
    %50 = math.exp %49 : vector<2x16xf32>
    %cst_15 = arith.constant 1.000000e+00 : f32
    %51 = vector.broadcast %cst_15 : f32 to vector<2x16xf32>
    %52 = arith.addf %51, %50 : vector<2x16xf32>
    %53 = arith.divf %51, %52 : vector<2x16xf32>
    %54 = vector.extract_strided_slice %12 {offsets = [0, 32], sizes = [2, 16], strides = [1, 1]} : vector<2x48xf32> to vector<2x16xf32>
    %55 = vector.extract_strided_slice %16 {offsets = [0, 32], sizes = [2, 16], strides = [1, 1]} : vector<2x48xf32> to vector<2x16xf32>
    %56 = arith.mulf %45, %55 : vector<2x16xf32>
    %57 = arith.addf %54, %56 : vector<2x16xf32>
    %58 = math.tanh %57 : vector<2x16xf32>
    %cst_16 = arith.constant 1.000000e+00 : f32
    %59 = vector.broadcast %cst_16 : f32 to vector<2x16xf32>
    %60 = arith.subf %59, %32 : vector<2x16xf32>
    %61 = arith.mulf %60, %37 : vector<2x16xf32>
    %62 = arith.mulf %32, %13 : vector<2x16xf32>
    %63 = arith.addf %61, %62 : vector<2x16xf32>
    %cst_17 = arith.constant 1.000000e+00 : f32
    %64 = vector.broadcast %cst_17 : f32 to vector<2x16xf32>
    %65 = arith.subf %64, %53 : vector<2x16xf32>
    %66 = arith.mulf %65, %58 : vector<2x16xf32>
    %67 = arith.mulf %53, %14 : vector<2x16xf32>
    %68 = arith.addf %66, %67 : vector<2x16xf32>
    %69 = tpu.concatenate %63, %68 in 1 : vector<2x16xf32>, vector<2x16xf32> -> vector<2x32xf32>
    %c0_18 = arith.constant 0 : index
    %c0_19 = arith.constant 0 : index
    %70 = vector.load %arg7[%c0_18, %c0_19] : memref<2x32xf32, #tpu.memory_space<vmem>>, vector<2x32xf32>
    tpu.vector_store %arg7[%c0_18, %c0_19], %69 {strides = array<i32>} : memref<2x32xf32, #tpu.memory_space<vmem>>, vector<2x32xf32>,
    %c0_20 = arith.constant 0 : index
    %c0_21 = arith.constant 0 : index
    %c0_22 = arith.constant 0 : index
    %71 = vector.load %arg5[%c0_20, %c0_21, %c0_22] : memref<1x2x16xf32, #tpu.memory_space<vmem>>, vector<1x2x16xf32>
    %72 = vector.shape_cast %71 : vector<1x2x16xf32> to vector<2x16xf32>
    %73 = vector.shape_cast %63 : vector<2x16xf32> to vector<1x2x16xf32>
    tpu.vector_store %arg5[%c0_20, %c0_21, %c0_22], %73 {strides = array<i32>} : memref<1x2x16xf32, #tpu.memory_space<vmem>>, vector<1x2x16xf32>,
    %c0_23 = arith.constant 0 : index
    %c0_24 = arith.constant 0 : index
    %c0_25 = arith.constant 0 : index
    %74 = vector.load %arg6[%c0_23, %c0_24, %c0_25] : memref<1x2x16xf32, #tpu.memory_space<vmem>>, vector<1x2x16xf32>
    %75 = vector.shape_cast %74 : vector<1x2x16xf32> to vector<2x16xf32>
    %76 = vector.shape_cast %68 : vector<2x16xf32> to vector<1x2x16xf32>
    tpu.vector_store %arg6[%c0_23, %c0_24, %c0_25], %76 {strides = array<i32>} : memref<1x2x16xf32, #tpu.memory_space<vmem>>, vector<1x2x16xf32>,
    return
  }
  func.func @transform_0(%arg0: i32) -> (i32, i32, i32) {
    %c0_i32 = arith.constant 0 : i32
    %c0_i32_0 = arith.constant 0 : i32
    %c0_i32_1 = arith.constant 0 : i32
    return %arg0, %c0_i32, %c0_i32_0 : i32, i32, i32
  }
  func.func @transform_1(%arg0: i32) -> (i32, i32, i32) {
    %c7_i32 = arith.constant 7 : i32
    %0 = arith.subi %c7_i32, %arg0 : i32
    %c0_i32 = arith.constant 0 : i32
    %c0_i32_0 = arith.constant 0 : i32
    %c0_i32_1 = arith.constant 0 : i32
    return %0, %c0_i32, %c0_i32_0 : i32, i32, i32
  }
  func.func @transform_2(%arg0: i32) -> (i32, i32) {
    %c0_i32 = arith.constant 0 : i32
    %c0_i32_0 = arith.constant 0 : i32
    %c0_i32_1 = arith.constant 0 : i32
    return %c0_i32, %c0_i32_0 : i32, i32
  }
  func.func @transform_3(%arg0: i32) -> (i32, i32) {
    %c0_i32 = arith.constant 0 : i32
    %c0_i32_0 = arith.constant 0 : i32
    %c0_i32_1 = arith.constant 0 : i32
    return %c0_i32, %c0_i32_0 : i32, i32
  }
  func.func @transform_4(%arg0: i32) -> (i32, i32, i32) {
    %c0_i32 = arith.constant 0 : i32
    %c0_i32_0 = arith.constant 0 : i32
    %c0_i32_1 = arith.constant 0 : i32
    return %arg0, %c0_i32, %c0_i32_0 : i32, i32, i32
  }
  func.func @transform_5(%arg0: i32) -> (i32, i32, i32) {
    %c7_i32 = arith.constant 7 : i32
    %0 = arith.subi %c7_i32, %arg0 : i32
    %c0_i32 = arith.constant 0 : i32
    %c0_i32_0 = arith.constant 0 : i32
    %c0_i32_1 = arith.constant 0 : i32
    return %0, %c0_i32, %c0_i32_0 : i32, i32, i32
  }
}

module attributes {stable_mosaic.version = 11 : i64} {
  func.func @_linear2_kernel(%arg0: memref<16x16xf32, #tpu.memory_space<vmem>>, %arg1: memref<16x16xf32, #tpu.memory_space<vmem>>, %arg2: memref<16x32xf32, #tpu.memory_space<vmem>>, %arg3: memref<16x32xf32, #tpu.memory_space<vmem>>, %arg4: memref<1x32xf32, #tpu.memory_space<vmem>>, %arg5: memref<16x32xf32, #tpu.memory_space<vmem>>) attributes {dimension_semantics = [], scalar_prefetch = 0 : i64, scratch_operands = 0 : i64, tpu.core_type = #tpu.core_type<tc>} {
    %c0 = arith.constant 0 : index
    %c0_0 = arith.constant 0 : index
    %0 = vector.load %arg0[%c0, %c0_0] : memref<16x16xf32, #tpu.memory_space<vmem>>, vector<16x16xf32>
    %c0_1 = arith.constant 0 : index
    %c0_2 = arith.constant 0 : index
    %1 = vector.load %arg2[%c0_1, %c0_2] : memref<16x32xf32, #tpu.memory_space<vmem>>, vector<16x32xf32>
    %2 = arith.truncf %0 : vector<16x16xf32> to vector<16x16xbf16>
    %3 = arith.truncf %1 : vector<16x32xf32> to vector<16x32xbf16>
    %cst = arith.constant dense<0.000000e+00> : vector<16x32xf32>
    %4 = tpu.matmul %2, %3, %cst {dimension_numbers = #tpu.dot_dimension_numbers<[1], [0], [0], [1], [0, 0, 1, 1], [], []>} : vector<16x16xbf16>, vector<16x32xbf16>, vector<16x32xf32> -> vector<16x32xf32>
    %c0_3 = arith.constant 0 : index
    %c0_4 = arith.constant 0 : index
    %5 = vector.load %arg1[%c0_3, %c0_4] : memref<16x16xf32, #tpu.memory_space<vmem>>, vector<16x16xf32>
    %c0_5 = arith.constant 0 : index
    %c0_6 = arith.constant 0 : index
    %6 = vector.load %arg3[%c0_5, %c0_6] : memref<16x32xf32, #tpu.memory_space<vmem>>, vector<16x32xf32>
    %7 = arith.truncf %5 : vector<16x16xf32> to vector<16x16xbf16>
    %8 = arith.truncf %6 : vector<16x32xf32> to vector<16x32xbf16>
    %cst_7 = arith.constant dense<0.000000e+00> : vector<16x32xf32>
    %9 = tpu.matmul %7, %8, %cst_7 {dimension_numbers = #tpu.dot_dimension_numbers<[1], [0], [0], [1], [0, 0, 1, 1], [], []>} : vector<16x16xbf16>, vector<16x32xbf16>, vector<16x32xf32> -> vector<16x32xf32>
    %10 = arith.addf %4, %9 : vector<16x32xf32>
    %c0_8 = arith.constant 0 : index
    %c0_9 = arith.constant 0 : index
    %11 = vector.load %arg4[%c0_8, %c0_9] : memref<1x32xf32, #tpu.memory_space<vmem>>, vector<1x32xf32>
    %12 = vector.broadcast %11 : vector<1x32xf32> to vector<16x32xf32>
    %13 = arith.addf %10, %12 : vector<16x32xf32>
    %c0_10 = arith.constant 0 : index
    %c0_11 = arith.constant 0 : index
    %14 = vector.load %arg5[%c0_10, %c0_11] : memref<16x32xf32, #tpu.memory_space<vmem>>, vector<16x32xf32>
    tpu.vector_store %arg5[%c0_10, %c0_11], %13 {strides = array<i32>} : memref<16x32xf32, #tpu.memory_space<vmem>>, vector<16x32xf32>,
    return
  }
}

module attributes {stable_mosaic.version = 11 : i64} {
  func.func @_linear_kernel(%arg0: memref<12x74xf32, #tpu.memory_space<vmem>>, %arg1: memref<74x96xf32, #tpu.memory_space<vmem>>, %arg2: memref<1x96xf32, #tpu.memory_space<vmem>>, %arg3: memref<12x96xf32, #tpu.memory_space<vmem>>) attributes {dimension_semantics = [], scalar_prefetch = 0 : i64, scratch_operands = 0 : i64, tpu.core_type = #tpu.core_type<tc>} {
    %c0 = arith.constant 0 : index
    %c0_0 = arith.constant 0 : index
    %0 = vector.load %arg0[%c0, %c0_0] : memref<12x74xf32, #tpu.memory_space<vmem>>, vector<12x74xf32>
    %c0_1 = arith.constant 0 : index
    %c0_2 = arith.constant 0 : index
    %1 = vector.load %arg1[%c0_1, %c0_2] : memref<74x96xf32, #tpu.memory_space<vmem>>, vector<74x96xf32>
    %2 = arith.truncf %0 : vector<12x74xf32> to vector<12x74xbf16>
    %3 = arith.truncf %1 : vector<74x96xf32> to vector<74x96xbf16>
    %cst = arith.constant dense<0.000000e+00> : vector<12x96xf32>
    %4 = tpu.matmul %2, %3, %cst {dimension_numbers = #tpu.dot_dimension_numbers<[1], [0], [0], [1], [0, 0, 1, 1], [], []>} : vector<12x74xbf16>, vector<74x96xbf16>, vector<12x96xf32> -> vector<12x96xf32>
    %c0_3 = arith.constant 0 : index
    %c0_4 = arith.constant 0 : index
    %5 = vector.load %arg2[%c0_3, %c0_4] : memref<1x96xf32, #tpu.memory_space<vmem>>, vector<1x96xf32>
    %6 = vector.broadcast %5 : vector<1x96xf32> to vector<12x96xf32>
    %7 = arith.addf %4, %6 : vector<12x96xf32>
    %c0_5 = arith.constant 0 : index
    %c0_6 = arith.constant 0 : index
    %8 = vector.load %arg3[%c0_5, %c0_6] : memref<12x96xf32, #tpu.memory_space<vmem>>, vector<12x96xf32>
    tpu.vector_store %arg3[%c0_5, %c0_6], %7 {strides = array<i32>} : memref<12x96xf32, #tpu.memory_space<vmem>>, vector<12x96xf32>,
    return
  }
}

module attributes {stable_mosaic.version = 11 : i64} {
  func.func @_sga_kernel(%arg0: memref<2x8x32xf32, #tpu.memory_space<vmem>>, %arg1: memref<1x32xf32, #tpu.memory_space<vmem>>, %arg2: memref<32x8xf32, #tpu.memory_space<vmem>>, %arg3: memref<8x32xf32, #tpu.memory_space<vmem>>, %arg4: memref<32x32xf32, #tpu.memory_space<vmem>>, %arg5: memref<1x32xf32, #tpu.memory_space<vmem>>, %arg6: memref<32x64xf32, #tpu.memory_space<vmem>>, %arg7: memref<1x64xf32, #tpu.memory_space<vmem>>, %arg8: memref<32x32xf32, #tpu.memory_space<vmem>>, %arg9: memref<1x32xf32, #tpu.memory_space<vmem>>, %arg10: memref<1x32xf32, #tpu.memory_space<vmem>>, %arg11: memref<2x8x32xf32, #tpu.memory_space<vmem>>) attributes {dimension_semantics = [], scalar_prefetch = 0 : i64, scratch_operands = 0 : i64, tpu.core_type = #tpu.core_type<tc>} {
    %c0 = arith.constant 0 : index
    %c0_0 = arith.constant 0 : index
    %c0_1 = arith.constant 0 : index
    %0 = vector.load %arg0[%c0, %c0_0, %c0_1] : memref<2x8x32xf32, #tpu.memory_space<vmem>>, vector<2x8x32xf32>
    %c0_2 = arith.constant 0 : index
    %c0_3 = arith.constant 0 : index
    %1 = vector.load %arg1[%c0_2, %c0_3] : memref<1x32xf32, #tpu.memory_space<vmem>>, vector<1x32xf32>
    %2 = vector.shape_cast %1 : vector<1x32xf32> to vector<1x1x32xf32>
    %3 = vector.broadcast %2 : vector<1x1x32xf32> to vector<2x8x32xf32>
    %4 = arith.mulf %0, %3 : vector<2x8x32xf32>
    %cst = arith.constant dense<0.000000e+00> : vector<8x32xf32>
    %5 = vector.multi_reduction <add>, %4, %cst [0] : vector<2x8x32xf32> to vector<8x32xf32>
    %6 = vector.shape_cast %1 : vector<1x32xf32> to vector<1x1x32xf32>
    %cst_4 = arith.constant dense<0.000000e+00> : vector<1xf32>
    %7 = vector.multi_reduction <add>, %6, %cst_4 [1, 2] : vector<1x1x32xf32> to vector<1xf32>
    %8 = vector.shape_cast %7 : vector<1xf32> to vector<1x1x1xf32>
    %9 = vector.extract %8[0, 0, 0] : f32 from vector<1x1x1xf32>
    %10 = vector.broadcast %9 : f32 to vector<8x32xf32>
    %11 = arith.divf %5, %10 : vector<8x32xf32>
    %c0_5 = arith.constant 0 : index
    %c0_6 = arith.constant 0 : index
    %12 = vector.load %arg4[%c0_5, %c0_6] : memref<32x32xf32, #tpu.memory_space<vmem>>, vector<32x32xf32>
    %13 = arith.truncf %11 : vector<8x32xf32> to vector<8x32xbf16>
    %14 = arith.truncf %12 : vector<32x32xf32> to vector<32x32xbf16>
    %cst_7 = arith.constant dense<0.000000e+00> : vector<8x32xf32>
    %15 = tpu.matmul %13, %14, %cst_7 {dimension_numbers = #tpu.dot_dimension_numbers<[1], [0], [0], [1], [0, 0, 1, 1], [], []>} : vector<8x32xbf16>, vector<32x32xbf16>, vector<8x32xf32> -> vector<8x32xf32>
    %c0_8 = arith.constant 0 : index
    %c0_9 = arith.constant 0 : index
    %16 = vector.load %arg5[%c0_8, %c0_9] : memref<1x32xf32, #tpu.memory_space<vmem>>, vector<1x32xf32>
    %17 = vector.broadcast %16 : vector<1x32xf32> to vector<8x32xf32>
    %18 = arith.addf %15, %17 : vector<8x32xf32>
    %19 = vector.shape_cast %0 : vector<2x8x32xf32> to vector<16x32xf32>
    %c0_10 = arith.constant 0 : index
    %c0_11 = arith.constant 0 : index
    %20 = vector.load %arg6[%c0_10, %c0_11] : memref<32x64xf32, #tpu.memory_space<vmem>>, vector<32x64xf32>
    %21 = arith.truncf %19 : vector<16x32xf32> to vector<16x32xbf16>
    %22 = arith.truncf %20 : vector<32x64xf32> to vector<32x64xbf16>
    %cst_12 = arith.constant dense<0.000000e+00> : vector<16x64xf32>
    %23 = tpu.matmul %21, %22, %cst_12 {dimension_numbers = #tpu.dot_dimension_numbers<[1], [0], [0], [1], [0, 0, 1, 1], [], []>} : vector<16x32xbf16>, vector<32x64xbf16>, vector<16x64xf32> -> vector<16x64xf32>
    %c0_13 = arith.constant 0 : index
    %c0_14 = arith.constant 0 : index
    %24 = vector.load %arg7[%c0_13, %c0_14] : memref<1x64xf32, #tpu.memory_space<vmem>>, vector<1x64xf32>
    %25 = vector.broadcast %24 : vector<1x64xf32> to vector<16x64xf32>
    %26 = arith.addf %23, %25 : vector<16x64xf32>
    %27 = vector.extract_strided_slice %26 {offsets = [0, 0], sizes = [16, 32], strides = [1, 1]} : vector<16x64xf32> to vector<16x32xf32>
    %28 = vector.shape_cast %27 : vector<16x32xf32> to vector<2x8x32xf32>
    %29 = vector.extract_strided_slice %26 {offsets = [0, 32], sizes = [16, 32], strides = [1, 1]} : vector<16x64xf32> to vector<16x32xf32>
    %30 = vector.shape_cast %29 : vector<16x32xf32> to vector<2x8x32xf32>
    %c0_15 = arith.constant 0 : index
    %c0_16 = arith.constant 0 : index
    %31 = vector.load %arg2[%c0_15, %c0_16] : memref<32x8xf32, #tpu.memory_space<vmem>>, vector<32x8xf32>
    %c0_17 = arith.constant 0 : index
    %c0_18 = arith.constant 0 : index
    %32 = vector.load %arg3[%c0_17, %c0_18] : memref<8x32xf32, #tpu.memory_space<vmem>>, vector<8x32xf32>
    %33 = vector.shape_cast %18 : vector<8x32xf32> to vector<1x8x32xf32>
    %34 = vector.broadcast %33 : vector<1x8x32xf32> to vector<2x8x32xf32>
    %35 = arith.mulf %34, %28 : vector<2x8x32xf32>
    %36 = vector.shape_cast %35 : vector<2x8x32xf32> to vector<16x32xf32>
    %cst_19 = arith.constant dense<0.000000e+00> : vector<16x8xf32>
    %37 = tpu.matmul %36, %31, %cst_19 {dimension_numbers = #tpu.dot_dimension_numbers<[1], [0], [0], [1], [0, 0, 1, 1], [], []>} : vector<16x32xf32>, vector<32x8xf32>, vector<16x8xf32> -> vector<16x8xf32>
    %38 = vector.shape_cast %37 : vector<16x8xf32> to vector<2x8x8xf32>
    %cst_20 = arith.constant 5.000000e-01 : f32
    %39 = vector.broadcast %cst_20 : f32 to vector<2x8x8xf32>
    %40 = arith.mulf %38, %39 : vector<2x8x8xf32>
    %cst_21 = arith.constant dense<0xFF800000> : vector<8x8xf32>
    %41 = vector.multi_reduction <maximumf>, %40, %cst_21 [0] : vector<2x8x8xf32> to vector<8x8xf32>
    %42 = vector.shape_cast %41 : vector<8x8xf32> to vector<1x8x8xf32>
    %43 = vector.broadcast %42 : vector<1x8x8xf32> to vector<2x8x8xf32>
    %44 = arith.subf %40, %43 : vector<2x8x8xf32>
    %45 = math.exp %44 : vector<2x8x8xf32>
    %cst_22 = arith.constant dense<0.000000e+00> : vector<8x8xf32>
    %46 = vector.multi_reduction <add>, %45, %cst_22 [0] : vector<2x8x8xf32> to vector<8x8xf32>
    %47 = vector.shape_cast %46 : vector<8x8xf32> to vector<1x8x8xf32>
    %48 = tpu.reciprocal %47 {approx = true} : vector<1x8x8xf32> -> vector<1x8x8xf32>
    %49 = vector.broadcast %48 : vector<1x8x8xf32> to vector<2x8x8xf32>
    %50 = arith.mulf %45, %49 : vector<2x8x8xf32>
    %51 = vector.shape_cast %50 : vector<2x8x8xf32> to vector<16x8xf32>
    %cst_23 = arith.constant dense<0.000000e+00> : vector<16x32xf32>
    %52 = tpu.matmul %51, %32, %cst_23 {dimension_numbers = #tpu.dot_dimension_numbers<[1], [0], [0], [1], [0, 0, 1, 1], [], []>} : vector<16x8xf32>, vector<8x32xf32>, vector<16x32xf32> -> vector<16x32xf32>
    %53 = vector.shape_cast %52 : vector<16x32xf32> to vector<2x8x32xf32>
    %54 = arith.mulf %53, %30 : vector<2x8x32xf32>
    %cst_24 = arith.constant dense<0.000000e+00> : vector<8x32xf32>
    %55 = vector.multi_reduction <add>, %54, %cst_24 [0] : vector<2x8x32xf32> to vector<8x32xf32>
    %c0_25 = arith.constant 0 : index
    %c0_26 = arith.constant 0 : index
    %56 = vector.load %arg8[%c0_25, %c0_26] : memref<32x32xf32, #tpu.memory_space<vmem>>, vector<32x32xf32>
    %57 = arith.truncf %55 : vector<8x32xf32> to vector<8x32xbf16>
    %58 = arith.truncf %56 : vector<32x32xf32> to vector<32x32xbf16>
    %cst_27 = arith.constant dense<0.000000e+00> : vector<8x32xf32>
    %59 = tpu.matmul %57, %58, %cst_27 {dimension_numbers = #tpu.dot_dimension_numbers<[1], [0], [0], [1], [0, 0, 1, 1], [], []>} : vector<8x32xbf16>, vector<32x32xbf16>, vector<8x32xf32> -> vector<8x32xf32>
    %c0_28 = arith.constant 0 : index
    %c0_29 = arith.constant 0 : index
    %60 = vector.load %arg9[%c0_28, %c0_29] : memref<1x32xf32, #tpu.memory_space<vmem>>, vector<1x32xf32>
    %61 = vector.broadcast %60 : vector<1x32xf32> to vector<8x32xf32>
    %62 = arith.addf %59, %61 : vector<8x32xf32>
    %63 = vector.shape_cast %62 : vector<8x32xf32> to vector<1x8x32xf32>
    %64 = vector.broadcast %63 : vector<1x8x32xf32> to vector<2x8x32xf32>
    %65 = arith.addf %64, %0 : vector<2x8x32xf32>
    %c0_30 = arith.constant 0 : index
    %c0_31 = arith.constant 0 : index
    %66 = vector.load %arg10[%c0_30, %c0_31] : memref<1x32xf32, #tpu.memory_space<vmem>>, vector<1x32xf32>
    %67 = arith.mulf %65, %65 : vector<2x8x32xf32>
    %cst_32 = arith.constant dense<0.000000e+00> : vector<2x8xf32>
    %68 = vector.multi_reduction <add>, %67, %cst_32 [2] : vector<2x8x32xf32> to vector<2x8xf32>
    %69 = vector.shape_cast %68 : vector<2x8xf32> to vector<2x8x1xf32>
    %cst_33 = arith.constant 3.200000e+01 : f32
    %70 = vector.broadcast %cst_33 : f32 to vector<2x8x1xf32>
    %71 = arith.divf %69, %70 : vector<2x8x1xf32>
    %72 = vector.shape_cast %66 : vector<1x32xf32> to vector<1x1x32xf32>
    %cst_34 = arith.constant 9.99999993E-9 : f32
    %73 = vector.broadcast %cst_34 : f32 to vector<2x8x1xf32>
    %74 = arith.addf %71, %73 : vector<2x8x1xf32>
    %75 = math.rsqrt %74 : vector<2x8x1xf32>
    %76 = vector.broadcast %75 : vector<2x8x1xf32> to vector<2x8x32xf32>
    %77 = arith.mulf %65, %76 : vector<2x8x32xf32>
    %78 = vector.broadcast %72 : vector<1x1x32xf32> to vector<2x8x32xf32>
    %79 = arith.mulf %78, %77 : vector<2x8x32xf32>
    %80 = arith.addf %0, %79 : vector<2x8x32xf32>
    %c0_35 = arith.constant 0 : index
    %c0_36 = arith.constant 0 : index
    %c0_37 = arith.constant 0 : index
    %81 = vector.load %arg11[%c0_35, %c0_36, %c0_37] : memref<2x8x32xf32, #tpu.memory_space<vmem>>, vector<2x8x32xf32>
    tpu.vector_store %arg11[%c0_35, %c0_36, %c0_37], %80 {strides = array<i32>} : memref<2x8x32xf32, #tpu.memory_space<vmem>>, vector<2x8x32xf32>,
    return
  }
}

module attributes {stable_mosaic.version = 11 : i64} {
  func.func @_linear2_kernel(%arg0: memref<12x16xf32, #tpu.memory_space<vmem>>, %arg1: memref<12x16xf32, #tpu.memory_space<vmem>>, %arg2: memref<16x32xf32, #tpu.memory_space<vmem>>, %arg3: memref<16x32xf32, #tpu.memory_space<vmem>>, %arg4: memref<1x32xf32, #tpu.memory_space<vmem>>, %arg5: memref<12x32xf32, #tpu.memory_space<vmem>>) attributes {dimension_semantics = [], scalar_prefetch = 0 : i64, scratch_operands = 0 : i64, tpu.core_type = #tpu.core_type<tc>} {
    %c0 = arith.constant 0 : index
    %c0_0 = arith.constant 0 : index
    %0 = vector.load %arg0[%c0, %c0_0] : memref<12x16xf32, #tpu.memory_space<vmem>>, vector<12x16xf32>
    %c0_1 = arith.constant 0 : index
    %c0_2 = arith.constant 0 : index
    %1 = vector.load %arg2[%c0_1, %c0_2] : memref<16x32xf32, #tpu.memory_space<vmem>>, vector<16x32xf32>
    %2 = arith.truncf %0 : vector<12x16xf32> to vector<12x16xbf16>
    %3 = arith.truncf %1 : vector<16x32xf32> to vector<16x32xbf16>
    %cst = arith.constant dense<0.000000e+00> : vector<12x32xf32>
    %4 = tpu.matmul %2, %3, %cst {dimension_numbers = #tpu.dot_dimension_numbers<[1], [0], [0], [1], [0, 0, 1, 1], [], []>} : vector<12x16xbf16>, vector<16x32xbf16>, vector<12x32xf32> -> vector<12x32xf32>
    %c0_3 = arith.constant 0 : index
    %c0_4 = arith.constant 0 : index
    %5 = vector.load %arg1[%c0_3, %c0_4] : memref<12x16xf32, #tpu.memory_space<vmem>>, vector<12x16xf32>
    %c0_5 = arith.constant 0 : index
    %c0_6 = arith.constant 0 : index
    %6 = vector.load %arg3[%c0_5, %c0_6] : memref<16x32xf32, #tpu.memory_space<vmem>>, vector<16x32xf32>
    %7 = arith.truncf %5 : vector<12x16xf32> to vector<12x16xbf16>
    %8 = arith.truncf %6 : vector<16x32xf32> to vector<16x32xbf16>
    %cst_7 = arith.constant dense<0.000000e+00> : vector<12x32xf32>
    %9 = tpu.matmul %7, %8, %cst_7 {dimension_numbers = #tpu.dot_dimension_numbers<[1], [0], [0], [1], [0, 0, 1, 1], [], []>} : vector<12x16xbf16>, vector<16x32xbf16>, vector<12x32xf32> -> vector<12x32xf32>
    %10 = arith.addf %4, %9 : vector<12x32xf32>
    %c0_8 = arith.constant 0 : index
    %c0_9 = arith.constant 0 : index
    %11 = vector.load %arg4[%c0_8, %c0_9] : memref<1x32xf32, #tpu.memory_space<vmem>>, vector<1x32xf32>
    %12 = vector.broadcast %11 : vector<1x32xf32> to vector<12x32xf32>
    %13 = arith.addf %10, %12 : vector<12x32xf32>
    %c0_10 = arith.constant 0 : index
    %c0_11 = arith.constant 0 : index
    %14 = vector.load %arg5[%c0_10, %c0_11] : memref<12x32xf32, #tpu.memory_space<vmem>>, vector<12x32xf32>
    tpu.vector_store %arg5[%c0_10, %c0_11], %13 {strides = array<i32>} : memref<12x32xf32, #tpu.memory_space<vmem>>, vector<12x32xf32>,
    return
  }
}

module attributes {stable_mosaic.version = 11 : i64} {
  func.func @_bigru_kernel(%arg0: i32, %arg1: memref<1x2x48xf32, #tpu.memory_space<vmem>>, %arg2: memref<1x2x48xf32, #tpu.memory_space<vmem>>, %arg3: memref<32x96xf32, #tpu.memory_space<vmem>>, %arg4: memref<1x96xf32, #tpu.memory_space<vmem>>, %arg5: memref<1x2x16xf32, #tpu.memory_space<vmem>>, %arg6: memref<1x2x16xf32, #tpu.memory_space<vmem>>, %arg7: memref<2x32xf32, #tpu.memory_space<vmem>>) attributes {dimension_semantics = [#tpu.dimension_semantics<arbitrary>], iteration_bounds = array<i64: 6>, scalar_prefetch = 0 : i64, scratch_operands = 1 : i64, tpu.core_type = #tpu.core_type<tc>, window_params = [{transform_indices = @transform_0, window_bounds = array<i64: 1, 2, 48>}, {transform_indices = @transform_1, window_bounds = array<i64: 1, 2, 48>}, {pipeline_mode = #tpu.pipeline_mode<synchronous>, transform_indices = @transform_2, window_bounds = array<i64: 32, 96>}, {pipeline_mode = #tpu.pipeline_mode<synchronous>, transform_indices = @transform_3, window_bounds = array<i64: 1, 96>}, {transform_indices = @transform_4, window_bounds = array<i64: 1, 2, 16>}, {transform_indices = @transform_5, window_bounds = array<i64: 1, 2, 16>}]} {
    %c0_i32 = arith.constant 0 : i32
    %0 = arith.cmpi eq, %arg0, %c0_i32 : i32
    %1 = arith.extui %0 : i1 to i32
    %c0_i32_0 = arith.constant 0 : i32
    %2 = arith.cmpi ne, %1, %c0_i32_0 : i32
    scf.if %2 {
      %cst_26 = arith.constant 0.000000e+00 : f32
      %77 = vector.broadcast %cst_26 : f32 to vector<2x32xf32>
      %c0_27 = arith.constant 0 : index
      %c0_28 = arith.constant 0 : index
      %78 = vector.load %arg7[%c0_27, %c0_28] : memref<2x32xf32, #tpu.memory_space<vmem>>, vector<2x32xf32>
      tpu.vector_store %arg7[%c0_27, %c0_28], %77 {strides = array<i32>} : memref<2x32xf32, #tpu.memory_space<vmem>>, vector<2x32xf32>,
    } else {
    }
    %c0 = arith.constant 0 : index
    %c0_1 = arith.constant 0 : index
    %3 = vector.load %arg7[%c0, %c0_1] : memref<2x32xf32, #tpu.memory_space<vmem>>, vector<2x32xf32>
    %c0_2 = arith.constant 0 : index
    %c0_3 = arith.constant 0 : index
    %4 = vector.load %arg3[%c0_2, %c0_3] : memref<32x96xf32, #tpu.memory_space<vmem>>, vector<32x96xf32>
    %cst = arith.constant dense<0.000000e+00> : vector<2x96xf32>
    %5 = tpu.matmul %3, %4, %cst {dimension_numbers = #tpu.dot_dimension_numbers<[1], [0], [0], [1], [0, 0, 1, 1], [], []>} : vector<2x32xf32>, vector<32x96xf32>, vector<2x96xf32> -> vector<2x96xf32>
    %c0_4 = arith.constant 0 : index
    %c0_5 = arith.constant 0 : index
    %6 = vector.load %arg4[%c0_4, %c0_5] : memref<1x96xf32, #tpu.memory_space<vmem>>, vector<1x96xf32>
    %7 = vector.broadcast %6 : vector<1x96xf32> to vector<2x96xf32>
    %8 = arith.addf %5, %7 : vector<2x96xf32>
    %c0_6 = arith.constant 0 : index
    %c0_7 = arith.constant 0 : index
    %c0_8 = arith.constant 0 : index
    %9 = vector.load %arg1[%c0_6, %c0_7, %c0_8] : memref<1x2x48xf32, #tpu.memory_space<vmem>>, vector<1x2x48xf32>
    %10 = vector.shape_cast %9 : vector<1x2x48xf32> to vector<2x48xf32>
    %c0_9 = arith.constant 0 : index
    %c0_10 = arith.constant 0 : index
    %c0_11 = arith.constant 0 : index
    %11 = vector.load %arg2[%c0_9, %c0_10, %c0_11] : memref<1x2x48xf32, #tpu.memory_space<vmem>>, vector<1x2x48xf32>
    %12 = vector.shape_cast %11 : vector<1x2x48xf32> to vector<2x48xf32>
    %13 = vector.extract_strided_slice %3 {offsets = [0, 0], sizes = [2, 16], strides = [1, 1]} : vector<2x32xf32> to vector<2x16xf32>
    %14 = vector.extract_strided_slice %3 {offsets = [0, 16], sizes = [2, 16], strides = [1, 1]} : vector<2x32xf32> to vector<2x16xf32>
    %15 = vector.extract_strided_slice %8 {offsets = [0, 0], sizes = [2, 48], strides = [1, 1]} : vector<2x96xf32> to vector<2x48xf32>
    %16 = vector.extract_strided_slice %8 {offsets = [0, 48], sizes = [2, 48], strides = [1, 1]} : vector<2x96xf32> to vector<2x48xf32>
    %17 = vector.extract_strided_slice %10 {offsets = [0, 0], sizes = [2, 16], strides = [1, 1]} : vector<2x48xf32> to vector<2x16xf32>
    %18 = vector.extract_strided_slice %15 {offsets = [0, 0], sizes = [2, 16], strides = [1, 1]} : vector<2x48xf32> to vector<2x16xf32>
    %19 = arith.addf %17, %18 : vector<2x16xf32>
    %20 = arith.negf %19 : vector<2x16xf32>
    %21 = math.exp %20 : vector<2x16xf32>
    %cst_12 = arith.constant 1.000000e+00 : f32
    %22 = vector.broadcast %cst_12 : f32 to vector<2x16xf32>
    %23 = arith.addf %22, %21 : vector<2x16xf32>
    %24 = arith.divf %22, %23 : vector<2x16xf32>
    %25 = vector.extract_strided_slice %10 {offsets = [0, 16], sizes = [2, 16], strides = [1, 1]} : vector<2x48xf32> to vector<2x16xf32>
    %26 = vector.extract_strided_slice %15 {offsets = [0, 16], sizes = [2, 16], strides = [1, 1]} : vector<2x48xf32> to vector<2x16xf32>
    %27 = arith.addf %25, %26 : vector<2x16xf32>
    %28 = arith.negf %27 : vector<2x16xf32>
    %29 = math.exp %28 : vector<2x16xf32>
    %cst_13 = arith.constant 1.000000e+00 : f32
    %30 = vector.broadcast %cst_13 : f32 to vector<2x16xf32>
    %31 = arith.addf %30, %29 : vector<2x16xf32>
    %32 = arith.divf %30, %31 : vector<2x16xf32>
    %33 = vector.extract_strided_slice %10 {offsets = [0, 32], sizes = [2, 16], strides = [1, 1]} : vector<2x48xf32> to vector<2x16xf32>
    %34 = vector.extract_strided_slice %15 {offsets = [0, 32], sizes = [2, 16], strides = [1, 1]} : vector<2x48xf32> to vector<2x16xf32>
    %35 = arith.mulf %24, %34 : vector<2x16xf32>
    %36 = arith.addf %33, %35 : vector<2x16xf32>
    %37 = math.tanh %36 : vector<2x16xf32>
    %38 = vector.extract_strided_slice %12 {offsets = [0, 0], sizes = [2, 16], strides = [1, 1]} : vector<2x48xf32> to vector<2x16xf32>
    %39 = vector.extract_strided_slice %16 {offsets = [0, 0], sizes = [2, 16], strides = [1, 1]} : vector<2x48xf32> to vector<2x16xf32>
    %40 = arith.addf %38, %39 : vector<2x16xf32>
    %41 = arith.negf %40 : vector<2x16xf32>
    %42 = math.exp %41 : vector<2x16xf32>
    %cst_14 = arith.constant 1.000000e+00 : f32
    %43 = vector.broadcast %cst_14 : f32 to vector<2x16xf32>
    %44 = arith.addf %43, %42 : vector<2x16xf32>
    %45 = arith.divf %43, %44 : vector<2x16xf32>
    %46 = vector.extract_strided_slice %12 {offsets = [0, 16], sizes = [2, 16], strides = [1, 1]} : vector<2x48xf32> to vector<2x16xf32>
    %47 = vector.extract_strided_slice %16 {offsets = [0, 16], sizes = [2, 16], strides = [1, 1]} : vector<2x48xf32> to vector<2x16xf32>
    %48 = arith.addf %46, %47 : vector<2x16xf32>
    %49 = arith.negf %48 : vector<2x16xf32>
    %50 = math.exp %49 : vector<2x16xf32>
    %cst_15 = arith.constant 1.000000e+00 : f32
    %51 = vector.broadcast %cst_15 : f32 to vector<2x16xf32>
    %52 = arith.addf %51, %50 : vector<2x16xf32>
    %53 = arith.divf %51, %52 : vector<2x16xf32>
    %54 = vector.extract_strided_slice %12 {offsets = [0, 32], sizes = [2, 16], strides = [1, 1]} : vector<2x48xf32> to vector<2x16xf32>
    %55 = vector.extract_strided_slice %16 {offsets = [0, 32], sizes = [2, 16], strides = [1, 1]} : vector<2x48xf32> to vector<2x16xf32>
    %56 = arith.mulf %45, %55 : vector<2x16xf32>
    %57 = arith.addf %54, %56 : vector<2x16xf32>
    %58 = math.tanh %57 : vector<2x16xf32>
    %cst_16 = arith.constant 1.000000e+00 : f32
    %59 = vector.broadcast %cst_16 : f32 to vector<2x16xf32>
    %60 = arith.subf %59, %32 : vector<2x16xf32>
    %61 = arith.mulf %60, %37 : vector<2x16xf32>
    %62 = arith.mulf %32, %13 : vector<2x16xf32>
    %63 = arith.addf %61, %62 : vector<2x16xf32>
    %cst_17 = arith.constant 1.000000e+00 : f32
    %64 = vector.broadcast %cst_17 : f32 to vector<2x16xf32>
    %65 = arith.subf %64, %53 : vector<2x16xf32>
    %66 = arith.mulf %65, %58 : vector<2x16xf32>
    %67 = arith.mulf %53, %14 : vector<2x16xf32>
    %68 = arith.addf %66, %67 : vector<2x16xf32>
    %69 = tpu.concatenate %63, %68 in 1 : vector<2x16xf32>, vector<2x16xf32> -> vector<2x32xf32>
    %c0_18 = arith.constant 0 : index
    %c0_19 = arith.constant 0 : index
    %70 = vector.load %arg7[%c0_18, %c0_19] : memref<2x32xf32, #tpu.memory_space<vmem>>, vector<2x32xf32>
    tpu.vector_store %arg7[%c0_18, %c0_19], %69 {strides = array<i32>} : memref<2x32xf32, #tpu.memory_space<vmem>>, vector<2x32xf32>,
    %c0_20 = arith.constant 0 : index
    %c0_21 = arith.constant 0 : index
    %c0_22 = arith.constant 0 : index
    %71 = vector.load %arg5[%c0_20, %c0_21, %c0_22] : memref<1x2x16xf32, #tpu.memory_space<vmem>>, vector<1x2x16xf32>
    %72 = vector.shape_cast %71 : vector<1x2x16xf32> to vector<2x16xf32>
    %73 = vector.shape_cast %63 : vector<2x16xf32> to vector<1x2x16xf32>
    tpu.vector_store %arg5[%c0_20, %c0_21, %c0_22], %73 {strides = array<i32>} : memref<1x2x16xf32, #tpu.memory_space<vmem>>, vector<1x2x16xf32>,
    %c0_23 = arith.constant 0 : index
    %c0_24 = arith.constant 0 : index
    %c0_25 = arith.constant 0 : index
    %74 = vector.load %arg6[%c0_23, %c0_24, %c0_25] : memref<1x2x16xf32, #tpu.memory_space<vmem>>, vector<1x2x16xf32>
    %75 = vector.shape_cast %74 : vector<1x2x16xf32> to vector<2x16xf32>
    %76 = vector.shape_cast %68 : vector<2x16xf32> to vector<1x2x16xf32>
    tpu.vector_store %arg6[%c0_23, %c0_24, %c0_25], %76 {strides = array<i32>} : memref<1x2x16xf32, #tpu.memory_space<vmem>>, vector<1x2x16xf32>,
    return
  }
  func.func @transform_0(%arg0: i32) -> (i32, i32, i32) {
    %c0_i32 = arith.constant 0 : i32
    %c0_i32_0 = arith.constant 0 : i32
    %c0_i32_1 = arith.constant 0 : i32
    return %arg0, %c0_i32, %c0_i32_0 : i32, i32, i32
  }
  func.func @transform_1(%arg0: i32) -> (i32, i32, i32) {
    %c5_i32 = arith.constant 5 : i32
    %0 = arith.subi %c5_i32, %arg0 : i32
    %c0_i32 = arith.constant 0 : i32
    %c0_i32_0 = arith.constant 0 : i32
    %c0_i32_1 = arith.constant 0 : i32
    return %0, %c0_i32, %c0_i32_0 : i32, i32, i32
  }
  func.func @transform_2(%arg0: i32) -> (i32, i32) {
    %c0_i32 = arith.constant 0 : i32
    %c0_i32_0 = arith.constant 0 : i32
    %c0_i32_1 = arith.constant 0 : i32
    return %c0_i32, %c0_i32_0 : i32, i32
  }
  func.func @transform_3(%arg0: i32) -> (i32, i32) {
    %c0_i32 = arith.constant 0 : i32
    %c0_i32_0 = arith.constant 0 : i32
    %c0_i32_1 = arith.constant 0 : i32
    return %c0_i32, %c0_i32_0 : i32, i32
  }
  func.func @transform_4(%arg0: i32) -> (i32, i32, i32) {
    %c0_i32 = arith.constant 0 : i32
    %c0_i32_0 = arith.constant 0 : i32
    %c0_i32_1 = arith.constant 0 : i32
    return %arg0, %c0_i32, %c0_i32_0 : i32, i32, i32
  }
  func.func @transform_5(%arg0: i32) -> (i32, i32, i32) {
    %c5_i32 = arith.constant 5 : i32
    %0 = arith.subi %c5_i32, %arg0 : i32
    %c0_i32 = arith.constant 0 : i32
    %c0_i32_0 = arith.constant 0 : i32
    %c0_i32_1 = arith.constant 0 : i32
    return %0, %c0_i32, %c0_i32_0 : i32, i32, i32
  }
}

module attributes {stable_mosaic.version = 11 : i64} {
  func.func @_fusion_kernel(%arg0: memref<2x8x32xf32, #tpu.memory_space<vmem>>, %arg1: memref<2x8x32xf32, #tpu.memory_space<vmem>>, %arg2: memref<2x8x32xf32, #tpu.memory_space<vmem>>, %arg3: memref<2x6x32xf32, #tpu.memory_space<vmem>>, %arg4: memref<32x32xf32, #tpu.memory_space<vmem>>, %arg5: memref<1x32xf32, #tpu.memory_space<vmem>>, %arg6: memref<32x64xf32, #tpu.memory_space<vmem>>, %arg7: memref<1x64xf32, #tpu.memory_space<vmem>>, %arg8: memref<32x32xf32, #tpu.memory_space<vmem>>, %arg9: memref<1x32xf32, #tpu.memory_space<vmem>>, %arg10: memref<1x32xf32, #tpu.memory_space<vmem>>, %arg11: memref<32x32xf32, #tpu.memory_space<vmem>>, %arg12: memref<32x32xf32, #tpu.memory_space<vmem>>, %arg13: memref<1x32xf32, #tpu.memory_space<vmem>>, %arg14: memref<1x32xf32, #tpu.memory_space<vmem>>, %arg15: memref<2x8x32xf32, #tpu.memory_space<vmem>>) attributes {dimension_semantics = [], scalar_prefetch = 0 : i64, scratch_operands = 0 : i64, tpu.core_type = #tpu.core_type<tc>} {
    %c0 = arith.constant 0 : index
    %c0_0 = arith.constant 0 : index
    %c0_1 = arith.constant 0 : index
    %0 = vector.load %arg0[%c0, %c0_0, %c0_1] : memref<2x8x32xf32, #tpu.memory_space<vmem>>, vector<2x8x32xf32>
    %1 = vector.shape_cast %0 : vector<2x8x32xf32> to vector<16x32xf32>
    %c0_2 = arith.constant 0 : index
    %c0_3 = arith.constant 0 : index
    %2 = vector.load %arg4[%c0_2, %c0_3] : memref<32x32xf32, #tpu.memory_space<vmem>>, vector<32x32xf32>
    %3 = arith.truncf %1 : vector<16x32xf32> to vector<16x32xbf16>
    %4 = arith.truncf %2 : vector<32x32xf32> to vector<32x32xbf16>
    %cst = arith.constant dense<0.000000e+00> : vector<16x32xf32>
    %5 = tpu.matmul %3, %4, %cst {dimension_numbers = #tpu.dot_dimension_numbers<[1], [0], [0], [1], [0, 0, 1, 1], [], []>} : vector<16x32xbf16>, vector<32x32xbf16>, vector<16x32xf32> -> vector<16x32xf32>
    %c0_4 = arith.constant 0 : index
    %c0_5 = arith.constant 0 : index
    %6 = vector.load %arg5[%c0_4, %c0_5] : memref<1x32xf32, #tpu.memory_space<vmem>>, vector<1x32xf32>
    %7 = vector.broadcast %6 : vector<1x32xf32> to vector<16x32xf32>
    %8 = arith.addf %5, %7 : vector<16x32xf32>
    %9 = vector.shape_cast %8 : vector<16x32xf32> to vector<2x8x32xf32>
    %10 = arith.truncf %9 : vector<2x8x32xf32> to vector<2x8x32xbf16>
    %c0_6 = arith.constant 0 : index
    %c0_7 = arith.constant 0 : index
    %11 = vector.load %arg10[%c0_6, %c0_7] : memref<1x32xf32, #tpu.memory_space<vmem>>, vector<1x32xf32>
    %c0_8 = arith.constant 0 : index
    %c0_9 = arith.constant 0 : index
    %c0_10 = arith.constant 0 : index
    %12 = vector.load %arg2[%c0_8, %c0_9, %c0_10] : memref<2x8x32xf32, #tpu.memory_space<vmem>>, vector<2x8x32xf32>
    %13 = vector.shape_cast %12 : vector<2x8x32xf32> to vector<16x32xf32>
    %c0_11 = arith.constant 0 : index
    %c0_12 = arith.constant 0 : index
    %14 = vector.load %arg6[%c0_11, %c0_12] : memref<32x64xf32, #tpu.memory_space<vmem>>, vector<32x64xf32>
    %15 = arith.truncf %13 : vector<16x32xf32> to vector<16x32xbf16>
    %16 = arith.truncf %14 : vector<32x64xf32> to vector<32x64xbf16>
    %cst_13 = arith.constant dense<0.000000e+00> : vector<16x64xf32>
    %17 = tpu.matmul %15, %16, %cst_13 {dimension_numbers = #tpu.dot_dimension_numbers<[1], [0], [0], [1], [0, 0, 1, 1], [], []>} : vector<16x32xbf16>, vector<32x64xbf16>, vector<16x64xf32> -> vector<16x64xf32>
    %c0_14 = arith.constant 0 : index
    %c0_15 = arith.constant 0 : index
    %18 = vector.load %arg7[%c0_14, %c0_15] : memref<1x64xf32, #tpu.memory_space<vmem>>, vector<1x64xf32>
    %19 = vector.broadcast %18 : vector<1x64xf32> to vector<16x64xf32>
    %20 = arith.addf %17, %19 : vector<16x64xf32>
    %21 = vector.shape_cast %20 : vector<16x64xf32> to vector<2x8x64xf32>
    %22 = vector.extract_strided_slice %21 {offsets = [0, 0, 0], sizes = [2, 8, 32], strides = [1, 1, 1]} : vector<2x8x64xf32> to vector<2x8x32xf32>
    %23 = vector.extract_strided_slice %21 {offsets = [0, 0, 32], sizes = [2, 8, 32], strides = [1, 1, 1]} : vector<2x8x64xf32> to vector<2x8x32xf32>
    %24 = arith.truncf %22 : vector<2x8x32xf32> to vector<2x8x32xbf16>
    "tpu.trace_start"() <{level = 10 : i32, message = "bsd,btd->bst"}> : () -> ()
    %cst_16 = arith.constant dense<0.000000e+00> : vector<2x8x8xf32>
    %25 = tpu.matmul %10, %24, %cst_16 {dimension_numbers = #tpu.dot_dimension_numbers<[2], [2], [1], [1], [0, 0, 0, 1, 1, 1], [0], [0]>} : vector<2x8x32xbf16>, vector<2x8x32xbf16>, vector<2x8x8xf32> -> vector<2x8x8xf32>
    "tpu.trace_stop"() : () -> ()
    %cst_17 = arith.constant 0.176776692 : f32
    %26 = vector.broadcast %cst_17 : f32 to vector<2x8x8xf32>
    %27 = arith.mulf %25, %26 : vector<2x8x8xf32>
    %cst_18 = arith.constant dense<0xFF800000> : vector<2x8xf32>
    %28 = vector.multi_reduction <maximumf>, %27, %cst_18 [2] : vector<2x8x8xf32> to vector<2x8xf32>
    %29 = vector.shape_cast %28 : vector<2x8xf32> to vector<2x8x1xf32>
    %30 = vector.broadcast %29 : vector<2x8x1xf32> to vector<2x8x8xf32>
    %31 = arith.subf %27, %30 : vector<2x8x8xf32>
    %32 = math.exp %31 : vector<2x8x8xf32>
    %cst_19 = arith.constant dense<0.000000e+00> : vector<2x8xf32>
    %33 = vector.multi_reduction <add>, %32, %cst_19 [2] : vector<2x8x8xf32> to vector<2x8xf32>
    %34 = vector.shape_cast %33 : vector<2x8xf32> to vector<2x8x1xf32>
    %35 = tpu.reciprocal %34 {approx = true} : vector<2x8x1xf32> -> vector<2x8x1xf32>
    %36 = vector.broadcast %35 : vector<2x8x1xf32> to vector<2x8x8xf32>
    %37 = arith.mulf %32, %36 : vector<2x8x8xf32>
    %38 = arith.truncf %37 : vector<2x8x8xf32> to vector<2x8x8xbf16>
    %39 = arith.truncf %23 : vector<2x8x32xf32> to vector<2x8x32xbf16>
    "tpu.trace_start"() <{level = 10 : i32, message = "bst,btd->bsd"}> : () -> ()
    %cst_20 = arith.constant dense<0.000000e+00> : vector<2x8x32xf32>
    %40 = tpu.matmul %38, %39, %cst_20 {dimension_numbers = #tpu.dot_dimension_numbers<[2], [1], [1], [2], [0, 0, 0, 1, 1, 2], [0], [0]>} : vector<2x8x8xbf16>, vector<2x8x32xbf16>, vector<2x8x32xf32> -> vector<2x8x32xf32>
    "tpu.trace_stop"() : () -> ()
    %41 = vector.shape_cast %40 : vector<2x8x32xf32> to vector<16x32xf32>
    %c0_21 = arith.constant 0 : index
    %c0_22 = arith.constant 0 : index
    %42 = vector.load %arg8[%c0_21, %c0_22] : memref<32x32xf32, #tpu.memory_space<vmem>>, vector<32x32xf32>
    %43 = arith.truncf %41 : vector<16x32xf32> to vector<16x32xbf16>
    %44 = arith.truncf %42 : vector<32x32xf32> to vector<32x32xbf16>
    %cst_23 = arith.constant dense<0.000000e+00> : vector<16x32xf32>
    %45 = tpu.matmul %43, %44, %cst_23 {dimension_numbers = #tpu.dot_dimension_numbers<[1], [0], [0], [1], [0, 0, 1, 1], [], []>} : vector<16x32xbf16>, vector<32x32xbf16>, vector<16x32xf32> -> vector<16x32xf32>
    %c0_24 = arith.constant 0 : index
    %c0_25 = arith.constant 0 : index
    %46 = vector.load %arg9[%c0_24, %c0_25] : memref<1x32xf32, #tpu.memory_space<vmem>>, vector<1x32xf32>
    %47 = vector.broadcast %46 : vector<1x32xf32> to vector<16x32xf32>
    %48 = arith.addf %45, %47 : vector<16x32xf32>
    %49 = vector.shape_cast %48 : vector<16x32xf32> to vector<2x8x32xf32>
    %50 = arith.addf %49, %0 : vector<2x8x32xf32>
    %51 = arith.mulf %50, %50 : vector<2x8x32xf32>
    %cst_26 = arith.constant dense<0.000000e+00> : vector<2x8xf32>
    %52 = vector.multi_reduction <add>, %51, %cst_26 [2] : vector<2x8x32xf32> to vector<2x8xf32>
    %53 = vector.shape_cast %52 : vector<2x8xf32> to vector<2x8x1xf32>
    %cst_27 = arith.constant 3.200000e+01 : f32
    %54 = vector.broadcast %cst_27 : f32 to vector<2x8x1xf32>
    %55 = arith.divf %53, %54 : vector<2x8x1xf32>
    %56 = vector.shape_cast %11 : vector<1x32xf32> to vector<1x1x32xf32>
    %cst_28 = arith.constant 9.99999993E-9 : f32
    %57 = vector.broadcast %cst_28 : f32 to vector<2x8x1xf32>
    %58 = arith.addf %55, %57 : vector<2x8x1xf32>
    %59 = math.rsqrt %58 : vector<2x8x1xf32>
    %60 = vector.broadcast %59 : vector<2x8x1xf32> to vector<2x8x32xf32>
    %61 = arith.mulf %50, %60 : vector<2x8x32xf32>
    %62 = vector.broadcast %56 : vector<1x1x32xf32> to vector<2x8x32xf32>
    %63 = arith.mulf %62, %61 : vector<2x8x32xf32>
    %c0_29 = arith.constant 0 : index
    %c0_30 = arith.constant 0 : index
    %c0_31 = arith.constant 0 : index
    %64 = vector.load %arg3[%c0_29, %c0_30, %c0_31] : memref<2x6x32xf32, #tpu.memory_space<vmem>>, vector<2x6x32xf32>
    %65 = vector.shape_cast %64 : vector<2x6x32xf32> to vector<12x32xf32>
    %c0_32 = arith.constant 0 : index
    %c0_33 = arith.constant 0 : index
    %66 = vector.load %arg6[%c0_32, %c0_33] : memref<32x64xf32, #tpu.memory_space<vmem>>, vector<32x64xf32>
    %67 = arith.truncf %65 : vector<12x32xf32> to vector<12x32xbf16>
    %68 = arith.truncf %66 : vector<32x64xf32> to vector<32x64xbf16>
    %cst_34 = arith.constant dense<0.000000e+00> : vector<12x64xf32>
    %69 = tpu.matmul %67, %68, %cst_34 {dimension_numbers = #tpu.dot_dimension_numbers<[1], [0], [0], [1], [0, 0, 1, 1], [], []>} : vector<12x32xbf16>, vector<32x64xbf16>, vector<12x64xf32> -> vector<12x64xf32>
    %c0_35 = arith.constant 0 : index
    %c0_36 = arith.constant 0 : index
    %70 = vector.load %arg7[%c0_35, %c0_36] : memref<1x64xf32, #tpu.memory_space<vmem>>, vector<1x64xf32>
    %71 = vector.broadcast %70 : vector<1x64xf32> to vector<12x64xf32>
    %72 = arith.addf %69, %71 : vector<12x64xf32>
    %73 = vector.shape_cast %72 : vector<12x64xf32> to vector<2x6x64xf32>
    %74 = vector.extract_strided_slice %73 {offsets = [0, 0, 0], sizes = [2, 6, 32], strides = [1, 1, 1]} : vector<2x6x64xf32> to vector<2x6x32xf32>
    %75 = vector.extract_strided_slice %73 {offsets = [0, 0, 32], sizes = [2, 6, 32], strides = [1, 1, 1]} : vector<2x6x64xf32> to vector<2x6x32xf32>
    %76 = arith.truncf %74 : vector<2x6x32xf32> to vector<2x6x32xbf16>
    "tpu.trace_start"() <{level = 10 : i32, message = "bsd,btd->bst"}> : () -> ()
    %cst_37 = arith.constant dense<0.000000e+00> : vector<2x8x6xf32>
    %77 = tpu.matmul %10, %76, %cst_37 {dimension_numbers = #tpu.dot_dimension_numbers<[2], [2], [1], [1], [0, 0, 0, 1, 1, 1], [0], [0]>} : vector<2x8x32xbf16>, vector<2x6x32xbf16>, vector<2x8x6xf32> -> vector<2x8x6xf32>
    "tpu.trace_stop"() : () -> ()
    %cst_38 = arith.constant 0.176776692 : f32
    %78 = vector.broadcast %cst_38 : f32 to vector<2x8x6xf32>
    %79 = arith.mulf %77, %78 : vector<2x8x6xf32>
    %cst_39 = arith.constant dense<0xFF800000> : vector<2x8xf32>
    %80 = vector.multi_reduction <maximumf>, %79, %cst_39 [2] : vector<2x8x6xf32> to vector<2x8xf32>
    %81 = vector.shape_cast %80 : vector<2x8xf32> to vector<2x8x1xf32>
    %82 = vector.broadcast %81 : vector<2x8x1xf32> to vector<2x8x6xf32>
    %83 = arith.subf %79, %82 : vector<2x8x6xf32>
    %84 = math.exp %83 : vector<2x8x6xf32>
    %cst_40 = arith.constant dense<0.000000e+00> : vector<2x8xf32>
    %85 = vector.multi_reduction <add>, %84, %cst_40 [2] : vector<2x8x6xf32> to vector<2x8xf32>
    %86 = vector.shape_cast %85 : vector<2x8xf32> to vector<2x8x1xf32>
    %87 = tpu.reciprocal %86 {approx = true} : vector<2x8x1xf32> -> vector<2x8x1xf32>
    %88 = vector.broadcast %87 : vector<2x8x1xf32> to vector<2x8x6xf32>
    %89 = arith.mulf %84, %88 : vector<2x8x6xf32>
    %90 = arith.truncf %89 : vector<2x8x6xf32> to vector<2x8x6xbf16>
    %91 = arith.truncf %75 : vector<2x6x32xf32> to vector<2x6x32xbf16>
    "tpu.trace_start"() <{level = 10 : i32, message = "bst,btd->bsd"}> : () -> ()
    %cst_41 = arith.constant dense<0.000000e+00> : vector<2x8x32xf32>
    %92 = tpu.matmul %90, %91, %cst_41 {dimension_numbers = #tpu.dot_dimension_numbers<[2], [1], [1], [2], [0, 0, 0, 1, 1, 2], [0], [0]>} : vector<2x8x6xbf16>, vector<2x6x32xbf16>, vector<2x8x32xf32> -> vector<2x8x32xf32>
    "tpu.trace_stop"() : () -> ()
    %93 = vector.shape_cast %92 : vector<2x8x32xf32> to vector<16x32xf32>
    %c0_42 = arith.constant 0 : index
    %c0_43 = arith.constant 0 : index
    %94 = vector.load %arg8[%c0_42, %c0_43] : memref<32x32xf32, #tpu.memory_space<vmem>>, vector<32x32xf32>
    %95 = arith.truncf %93 : vector<16x32xf32> to vector<16x32xbf16>
    %96 = arith.truncf %94 : vector<32x32xf32> to vector<32x32xbf16>
    %cst_44 = arith.constant dense<0.000000e+00> : vector<16x32xf32>
    %97 = tpu.matmul %95, %96, %cst_44 {dimension_numbers = #tpu.dot_dimension_numbers<[1], [0], [0], [1], [0, 0, 1, 1], [], []>} : vector<16x32xbf16>, vector<32x32xbf16>, vector<16x32xf32> -> vector<16x32xf32>
    %c0_45 = arith.constant 0 : index
    %c0_46 = arith.constant 0 : index
    %98 = vector.load %arg9[%c0_45, %c0_46] : memref<1x32xf32, #tpu.memory_space<vmem>>, vector<1x32xf32>
    %99 = vector.broadcast %98 : vector<1x32xf32> to vector<16x32xf32>
    %100 = arith.addf %97, %99 : vector<16x32xf32>
    %101 = vector.shape_cast %100 : vector<16x32xf32> to vector<2x8x32xf32>
    %102 = arith.addf %101, %0 : vector<2x8x32xf32>
    %103 = arith.mulf %102, %102 : vector<2x8x32xf32>
    %cst_47 = arith.constant dense<0.000000e+00> : vector<2x8xf32>
    %104 = vector.multi_reduction <add>, %103, %cst_47 [2] : vector<2x8x32xf32> to vector<2x8xf32>
    %105 = vector.shape_cast %104 : vector<2x8xf32> to vector<2x8x1xf32>
    %cst_48 = arith.constant 3.200000e+01 : f32
    %106 = vector.broadcast %cst_48 : f32 to vector<2x8x1xf32>
    %107 = arith.divf %105, %106 : vector<2x8x1xf32>
    %108 = vector.shape_cast %11 : vector<1x32xf32> to vector<1x1x32xf32>
    %cst_49 = arith.constant 9.99999993E-9 : f32
    %109 = vector.broadcast %cst_49 : f32 to vector<2x8x1xf32>
    %110 = arith.addf %107, %109 : vector<2x8x1xf32>
    %111 = math.rsqrt %110 : vector<2x8x1xf32>
    %112 = vector.broadcast %111 : vector<2x8x1xf32> to vector<2x8x32xf32>
    %113 = arith.mulf %102, %112 : vector<2x8x32xf32>
    %114 = vector.broadcast %108 : vector<1x1x32xf32> to vector<2x8x32xf32>
    %115 = arith.mulf %114, %113 : vector<2x8x32xf32>
    %116 = vector.shape_cast %63 : vector<2x8x32xf32> to vector<16x32xf32>
    %c0_50 = arith.constant 0 : index
    %c0_51 = arith.constant 0 : index
    %117 = vector.load %arg11[%c0_50, %c0_51] : memref<32x32xf32, #tpu.memory_space<vmem>>, vector<32x32xf32>
    %118 = arith.truncf %116 : vector<16x32xf32> to vector<16x32xbf16>
    %119 = arith.truncf %117 : vector<32x32xf32> to vector<32x32xbf16>
    %cst_52 = arith.constant dense<0.000000e+00> : vector<16x32xf32>
    %120 = tpu.matmul %118, %119, %cst_52 {dimension_numbers = #tpu.dot_dimension_numbers<[1], [0], [0], [1], [0, 0, 1, 1], [], []>} : vector<16x32xbf16>, vector<32x32xbf16>, vector<16x32xf32> -> vector<16x32xf32>
    %121 = vector.shape_cast %115 : vector<2x8x32xf32> to vector<16x32xf32>
    %c0_53 = arith.constant 0 : index
    %c0_54 = arith.constant 0 : index
    %122 = vector.load %arg12[%c0_53, %c0_54] : memref<32x32xf32, #tpu.memory_space<vmem>>, vector<32x32xf32>
    %123 = arith.truncf %121 : vector<16x32xf32> to vector<16x32xbf16>
    %124 = arith.truncf %122 : vector<32x32xf32> to vector<32x32xbf16>
    %cst_55 = arith.constant dense<0.000000e+00> : vector<16x32xf32>
    %125 = tpu.matmul %123, %124, %cst_55 {dimension_numbers = #tpu.dot_dimension_numbers<[1], [0], [0], [1], [0, 0, 1, 1], [], []>} : vector<16x32xbf16>, vector<32x32xbf16>, vector<16x32xf32> -> vector<16x32xf32>
    %126 = arith.addf %120, %125 : vector<16x32xf32>
    %c0_56 = arith.constant 0 : index
    %c0_57 = arith.constant 0 : index
    %127 = vector.load %arg13[%c0_56, %c0_57] : memref<1x32xf32, #tpu.memory_space<vmem>>, vector<1x32xf32>
    %128 = vector.broadcast %127 : vector<1x32xf32> to vector<16x32xf32>
    %129 = arith.addf %126, %128 : vector<16x32xf32>
    %130 = vector.shape_cast %129 : vector<16x32xf32> to vector<2x8x32xf32>
    %c0_58 = arith.constant 0 : index
    %c0_59 = arith.constant 0 : index
    %c0_60 = arith.constant 0 : index
    %131 = vector.load %arg1[%c0_58, %c0_59, %c0_60] : memref<2x8x32xf32, #tpu.memory_space<vmem>>, vector<2x8x32xf32>
    %132 = arith.addf %130, %131 : vector<2x8x32xf32>
    %c0_61 = arith.constant 0 : index
    %c0_62 = arith.constant 0 : index
    %133 = vector.load %arg14[%c0_61, %c0_62] : memref<1x32xf32, #tpu.memory_space<vmem>>, vector<1x32xf32>
    %134 = arith.mulf %132, %132 : vector<2x8x32xf32>
    %cst_63 = arith.constant dense<0.000000e+00> : vector<2x8xf32>
    %135 = vector.multi_reduction <add>, %134, %cst_63 [2] : vector<2x8x32xf32> to vector<2x8xf32>
    %136 = vector.shape_cast %135 : vector<2x8xf32> to vector<2x8x1xf32>
    %cst_64 = arith.constant 3.200000e+01 : f32
    %137 = vector.broadcast %cst_64 : f32 to vector<2x8x1xf32>
    %138 = arith.divf %136, %137 : vector<2x8x1xf32>
    %139 = vector.shape_cast %133 : vector<1x32xf32> to vector<1x1x32xf32>
    %cst_65 = arith.constant 9.99999993E-9 : f32
    %140 = vector.broadcast %cst_65 : f32 to vector<2x8x1xf32>
    %141 = arith.addf %138, %140 : vector<2x8x1xf32>
    %142 = math.rsqrt %141 : vector<2x8x1xf32>
    %143 = vector.broadcast %142 : vector<2x8x1xf32> to vector<2x8x32xf32>
    %144 = arith.mulf %132, %143 : vector<2x8x32xf32>
    %145 = vector.broadcast %139 : vector<1x1x32xf32> to vector<2x8x32xf32>
    %146 = arith.mulf %145, %144 : vector<2x8x32xf32>
    %c0_66 = arith.constant 0 : index
    %c0_67 = arith.constant 0 : index
    %c0_68 = arith.constant 0 : index
    %147 = vector.load %arg15[%c0_66, %c0_67, %c0_68] : memref<2x8x32xf32, #tpu.memory_space<vmem>>, vector<2x8x32xf32>
    tpu.vector_store %arg15[%c0_66, %c0_67, %c0_68], %146 {strides = array<i32>} : memref<2x8x32xf32, #tpu.memory_space<vmem>>, vector<2x8x32xf32>,
    return
  }
}

</mosaic_0001>

<llo_original>
// kernel: fwd.11
$region0: #{fwd.11}
  #allocation0 [shape = 'u32[]', space=smem, size = 0x4, offset = 0x4, fixed_abs, tag = 'smem constant byte address 0x4 - core index']
  #allocation1 [shape = 'u32[144,128]{1,0:T(1,128)}', space=vmem, size = 0x12000, scoped, tag = 'internal scratch']
  %s0 = inlined_call_operand.vmem [shape: f32[16,16], index: 0, kind: input, shape index: {}]
  %s1 = inlined_call_operand.vmem [shape: f32[16,16], index: 1, kind: input, shape index: {}]
  %s2 = inlined_call_operand.vmem [shape: f32[16,32], index: 2, kind: input, shape index: {}]
  %s3 = inlined_call_operand.vmem [shape: f32[16,32], index: 3, kind: input, shape index: {}]
  %s4 = inlined_call_operand.vmem [shape: f32[1,32], index: 4, kind: input, shape index: {}]
  %s5 = inlined_call_operand.vmem [shape: f32[16,32], index: 5, kind: output, shape index: {}]
  %s6 = sld [smem:[#allocation0]]
  $region30: #{fwd.11} parent=0
    _
  %s8 = ssub.s32 1, %s6
  %s9 = scalar_select 0, %s8, %s6
  // Predicated region
  $region2: #{fwd.11} parent=0 // pred_check
    _
  $region3: #{fwd.11} parent=0 // pred_check_branch
    %11 = sbr.rel (0) target = $region5
  $region4: #{fwd.11} parent=0 // pred_region
    _
  $region5: #{fwd.11} parent=0 // pred_fallthru
    _
  // Predicated region
  $region6: #{fwd.11} parent=0 // pred_check
    _
  $region7: #{fwd.11} parent=0 // pred_check_branch
    %13 = sbr.rel (0) target = $region9
  $region8: #{fwd.11} parent=0 // pred_region
    _
  $region9: #{fwd.11} parent=0 // pred_fallthru
    _
  // Predicated region
  $region10: #{fwd.11} parent=0 // pred_check
    _
  $region11: #{fwd.11} parent=0 // pred_check_branch
    %15 = sbr.rel (0) target = $region13
  $region12: #{fwd.11} parent=0 // pred_region
    _
  $region13: #{fwd.11} parent=0 // pred_fallthru
    _
  // Predicated region
  $region14: #{fwd.11} parent=0 // pred_check
    _
  $region15: #{fwd.11} parent=0 // pred_check_branch
    %17 = sbr.rel (0) target = $region17
  $region16: #{fwd.11} parent=0 // pred_region
    _
  $region17: #{fwd.11} parent=0 // pred_fallthru
    _
  // Predicated region
  $region18: #{fwd.11} parent=0 // pred_check
    _
  $region19: #{fwd.11} parent=0 // pred_check_branch
    %19 = sbr.rel (0) target = $region21
  $region20: #{fwd.11} parent=0 // pred_region
    _
  $region21: #{fwd.11} parent=0 // pred_fallthru
    _
  %v21 = vld [vmem:[%s0] sm:$0xff]
  %v22 = vld [vmem:[%s0 + $0x8] sm:$0xff]
  %v23 = vld [vmem:[%s2] sm:$0xff]
  %v24 = vld [vmem:[%s2 + $0x8] sm:$0xff]
  %v25 = vpack.c.bf16 %v22, %v21
  %v26 = vpack.c.bf16 %v24, %v23
  %v27 = vld [vmem:[%s1] sm:$0xff]
  %v28 = vld [vmem:[%s1 + $0x8] sm:$0xff]
  %v29 = vld [vmem:[%s3] sm:$0xff]
  %v30 = vld [vmem:[%s3 + $0x8] sm:$0xff]
  %v31 = vpack.c.bf16 %v28, %v27
  %v32 = vpack.c.bf16 %v30, %v29
  %vm33 = vcmask 130048
  %v35 = vsel %vm33, %v31, 0
  %37 = vmatprep.subr.bf16.mxu0 0
  %38 = vmatpush1.bf16.msra.mxu0 %v32
  %39 = vmatprep.subr.bf16.mxu0 0
  %40 = vmatpush1.bf16.msra.mxu0 0
  %41 = vmatprep.subr.bf16.mxu0 0
  %42 = vmatpush1.bf16.msra.mxu0 0
  %43 = vmatprep.subr.bf16.mxu0 0
  %44 = vmatpush1.bf16.msra.mxu0 0
  %45 = vmatprep.subr.bf16.mxu0 0
  %46 = vmatpush1.bf16.msra.mxu0 0
  %47 = vmatprep.subr.bf16.mxu0 0
  %48 = vmatpush1.bf16.msra.mxu0 0
  %49 = vmatprep.subr.bf16.mxu0 0
  %50 = vmatpush1.bf16.msra.mxu0 0
  %51 = vmatprep.subr.bf16.mxu0 0
  %52 = vmatpush1.bf16.msra.mxu0 0
  %53 = vmatprep.subr.bf16.mxu0 0
  %54 = vmatpush1.bf16.msra.mxu0 0
  %55 = vmatprep.subr.bf16.mxu0 0
  %56 = vmatpush1.bf16.msra.mxu0 0
  %57 = vmatprep.subr.bf16.mxu0 0
  %58 = vmatpush1.bf16.msra.mxu0 0
  %59 = vmatprep.subr.bf16.mxu0 0
  %60 = vmatpush1.bf16.msra.mxu0 0
  %61 = vmatprep.subr.bf16.mxu0 0
  %62 = vmatpush1.bf16.msra.mxu0 0
  %63 = vmatprep.subr.bf16.mxu0 0
  %64 = vmatpush1.bf16.msra.mxu0 0
  %65 = vmatprep.subr.bf16.mxu0 0
  %66 = vmatpush1.bf16.msra.mxu0 0
  %67 = vmatprep.subr.bf16.mxu0 0
  %68 = vmatpush1.bf16.msra.mxu0 0
  %69 = vmatprep.mubr.bf16.mxu0 0
  %70 = vmatmul.mubr.bf16.gmra.mrb[0].mxu0 %v35
  %v71 = vpop.f32.mrb[0].mxu0
  %v72 = vadd.f32 0.0, %v71
  %v73 = vpop.f32.mrb[0].mxu0
  %v74 = vpop.f32.mrb[0].mxu0
  %v75 = vadd.f32 0.0, %v74
  %v76 = vpop.f32.mrb[0].mxu0
  %77 = vdwg.mxu0
  %v79 = vsel %vm33, %v25, 0
  %81 = vmatprep.subr.bf16.mxu0 0
  %82 = vmatpush1.bf16.msra.mxu0 %v26
  %83 = vmatprep.subr.bf16.mxu0 0
  %84 = vmatpush1.bf16.msra.mxu0 0
  %85 = vmatprep.subr.bf16.mxu0 0
  %86 = vmatpush1.bf16.msra.mxu0 0
  %87 = vmatprep.subr.bf16.mxu0 0
  %88 = vmatpush1.bf16.msra.mxu0 0
  %89 = vmatprep.subr.bf16.mxu0 0
  %90 = vmatpush1.bf16.msra.mxu0 0
  %91 = vmatprep.subr.bf16.mxu0 0
  %92 = vmatpush1.bf16.msra.mxu0 0
  %93 = vmatprep.subr.bf16.mxu0 0
  %94 = vmatpush1.bf16.msra.mxu0 0
  %95 = vmatprep.subr.bf16.mxu0 0
  %96 = vmatpush1.bf16.msra.mxu0 0
  %97 = vmatprep.subr.bf16.mxu0 0
  %98 = vmatpush1.bf16.msra.mxu0 0
  %99 = vmatprep.subr.bf16.mxu0 0
  %100 = vmatpush1.bf16.msra.mxu0 0
  %101 = vmatprep.subr.bf16.mxu0 0
  %102 = vmatpush1.bf16.msra.mxu0 0
  %103 = vmatprep.subr.bf16.mxu0 0
  %104 = vmatpush1.bf16.msra.mxu0 0
  %105 = vmatprep.subr.bf16.mxu0 0
  %106 = vmatpush1.bf16.msra.mxu0 0
  %107 = vmatprep.subr.bf16.mxu0 0
  %108 = vmatpush1.bf16.msra.mxu0 0
  %109 = vmatprep.subr.bf16.mxu0 0
  %110 = vmatpush1.bf16.msra.mxu0 0
  %111 = vmatprep.subr.bf16.mxu0 0
  %112 = vmatpush1.bf16.msra.mxu0 0
  %113 = vmatprep.mubr.bf16.mxu0 0
  %114 = vmatmul.mubr.bf16.gmra.mrb[0].mxu0 %v79
  %v115 = vpop.f32.mrb[0].mxu0
  %v116 = vadd.f32 %v72, %v115
  %v117 = vpop.f32.mrb[0].mxu0
  %v118 = vpop.f32.mrb[0].mxu0
  %v119 = vadd.f32 %v75, %v118
  %v120 = vpop.f32.mrb[0].mxu0
  %121 = vdwg.mxu0
  %v122 = vld [vmem:[%s4] sm:$0x1]
  %v124 = vlaneseq
  %v125 = vshrl.u32 %v124, 7
  %v126 = vsub.s32 0, %v125
  %v127 = vrot.slane %v122, %v126
  %v129 = vadd.f32 %v116, %v127
  %v130 = vadd.f32 %v119, %v127
  %vm131 = vcmask 261120
  %132 = vst.msk [vmem:[%s5] sm:$0xff] %vm131, %v129
  %133 = vst.msk [vmem:[%s5 + $0x8] sm:$0xff] %vm131, %v130
  // Predicated region
  $region22: #{fwd.11} parent=0 // pred_check
    _
  $region23: #{fwd.11} parent=0 // pred_check_branch
    %135 = sbr.rel (0) target = $region25
  $region24: #{fwd.11} parent=0 // pred_region
    _
  $region25: #{fwd.11} parent=0 // pred_fallthru
    _
  // Predicated region
  $region26: #{fwd.11} parent=0 // pred_check
    _
  $region27: #{fwd.11} parent=0 // pred_check_branch
    %137 = sbr.rel (0) target = $region29
  $region28: #{fwd.11} parent=0 // pred_region
    _
  $region29: #{fwd.11} parent=0 // pred_fallthru
    _

// kernel: fwd.9
$region0: #{fwd.9}
  #allocation0 [shape = 'u32[]', space=smem, size = 0x4, offset = 0x4, fixed_abs, tag = 'smem constant byte address 0x4 - core index']
  #allocation1 [shape = 'u32[144,128]{1,0:T(1,128)}', space=vmem, size = 0x12000, scoped, tag = 'internal scratch']
  %s0 = inlined_call_operand.vmem [shape: f32[16,47], index: 0, kind: input, shape index: {}]
  %s1 = inlined_call_operand.vmem [shape: f32[47,96], index: 1, kind: input, shape index: {}]
  %s2 = inlined_call_operand.vmem [shape: f32[1,96], index: 2, kind: input, shape index: {}]
  %s3 = inlined_call_operand.vmem [shape: f32[16,96], index: 3, kind: output, shape index: {}]
  %s4 = sld [smem:[#allocation0]]
  $region22: #{fwd.9} parent=0
    _
  %s6 = ssub.s32 1, %s4
  %s7 = scalar_select 0, %s6, %s4
  // Predicated region
  $region2: #{fwd.9} parent=0 // pred_check
    _
  $region3: #{fwd.9} parent=0 // pred_check_branch
    %9 = sbr.rel (0) target = $region5
  $region4: #{fwd.9} parent=0 // pred_region
    _
  $region5: #{fwd.9} parent=0 // pred_fallthru
    _
  // Predicated region
  $region6: #{fwd.9} parent=0 // pred_check
    _
  $region7: #{fwd.9} parent=0 // pred_check_branch
    %11 = sbr.rel (0) target = $region9
  $region8: #{fwd.9} parent=0 // pred_region
    _
  $region9: #{fwd.9} parent=0 // pred_fallthru
    _
  // Predicated region
  $region10: #{fwd.9} parent=0 // pred_check
    _
  $region11: #{fwd.9} parent=0 // pred_check_branch
    %13 = sbr.rel (0) target = $region13
  $region12: #{fwd.9} parent=0 // pred_region
    _
  $region13: #{fwd.9} parent=0 // pred_fallthru
    _
  %v15 = vld [vmem:[%s0] sm:$0xff]
  %v16 = vld [vmem:[%s0 + $0x8] sm:$0xff]
  %v17 = vld [vmem:[%s1] sm:$0xff]
  %v18 = vld [vmem:[%s1 + $0x8] sm:$0xff]
  %v19 = vld [vmem:[%s1 + $0x10] sm:$0xff]
  %v20 = vld [vmem:[%s1 + $0x18] sm:$0xff]
  %v21 = vld [vmem:[%s1 + $0x20] sm:$0xff]
  %v22 = vld [vmem:[%s1 + $0x28] sm:$0x7f]
  %v23 = vpack.c.bf16 %v16, %v15
  %v24 = vpack.c.bf16 %v18, %v17
  %v25 = vpack.c.bf16 %v20, %v19
  %v26 = vpack.c.bf16 %v22, %v21
  %v27 = vld [vmem:[%s2] sm:$0x1]
  %v29 = vlaneseq
  %v30 = vshrl.u32 %v29, 7
  %v31 = vsub.s32 0, %v30
  %v32 = vrot.slane %v27, %v31
  %vm34 = vcmask 384000
  %v36 = vsel %vm34, %v23, 0
  %vm38 = vcmask 1046528
  %vm39 = vcmask 1047552
  %v40 = vsel %vm38, 4294967295, 65535
  %v41 = vsel %vm39, %v40, 0
  %v43 = vand.u32 %v26, %v41
  %45 = vmatprep.subr.bf16.mxu0 0
  %46 = vmatpush1.bf16.msra.mxu0 %v24
  %47 = vmatprep.subr.bf16.mxu0 0
  %48 = vmatpush1.bf16.msra.mxu0 %v25
  %49 = vmatprep.subr.bf16.mxu0 0
  %50 = vmatpush1.bf16.msra.mxu0 %v43
  %51 = vmatprep.subr.bf16.mxu0 0
  %52 = vmatpush1.bf16.msra.mxu0 0
  %53 = vmatprep.subr.bf16.mxu0 0
  %54 = vmatpush1.bf16.msra.mxu0 0
  %55 = vmatprep.subr.bf16.mxu0 0
  %56 = vmatpush1.bf16.msra.mxu0 0
  %57 = vmatprep.subr.bf16.mxu0 0
  %58 = vmatpush1.bf16.msra.mxu0 0
  %59 = vmatprep.subr.bf16.mxu0 0
  %60 = vmatpush1.bf16.msra.mxu0 0
  %61 = vmatprep.subr.bf16.mxu0 0
  %62 = vmatpush1.bf16.msra.mxu0 0
  %63 = vmatprep.subr.bf16.mxu0 0
  %64 = vmatpush1.bf16.msra.mxu0 0
  %65 = vmatprep.subr.bf16.mxu0 0
  %66 = vmatpush1.bf16.msra.mxu0 0
  %67 = vmatprep.subr.bf16.mxu0 0
  %68 = vmatpush1.bf16.msra.mxu0 0
  %69 = vmatprep.subr.bf16.mxu0 0
  %70 = vmatpush1.bf16.msra.mxu0 0
  %71 = vmatprep.subr.bf16.mxu0 0
  %72 = vmatpush1.bf16.msra.mxu0 0
  %73 = vmatprep.subr.bf16.mxu0 0
  %74 = vmatpush1.bf16.msra.mxu0 0
  %75 = vmatprep.subr.bf16.mxu0 0
  %76 = vmatpush1.bf16.msra.mxu0 0
  %77 = vmatprep.mubr.bf16.mxu0 0
  %78 = vmatmul.mubr.bf16.gmra.mrb[0].mxu0 %v36
  %v79 = vpop.f32.mrb[0].mxu0
  %v80 = vadd.f32 %v32, %v79
  %v81 = vpop.f32.mrb[0].mxu0
  %v82 = vpop.f32.mrb[0].mxu0
  %v83 = vadd.f32 %v32, %v82
  %v84 = vpop.f32.mrb[0].mxu0
  %85 = vdwg.mxu0
  %vm86 = vcmask 785408
  %87 = vst.msk [vmem:[%s3] sm:$0xff] %vm86, %v80
  %88 = vst.msk [vmem:[%s3 + $0x8] sm:$0xff] %vm86, %v83
  // Predicated region
  $region14: #{fwd.9} parent=0 // pred_check
    _
  $region15: #{fwd.9} parent=0 // pred_check_branch
    %90 = sbr.rel (0) target = $region17
  $region16: #{fwd.9} parent=0 // pred_region
    _
  $region17: #{fwd.9} parent=0 // pred_fallthru
    _
  // Predicated region
  $region18: #{fwd.9} parent=0 // pred_check
    _
  $region19: #{fwd.9} parent=0 // pred_check_branch
    %92 = sbr.rel (0) target = $region21
  $region20: #{fwd.9} parent=0 // pred_region
    _
  $region21: #{fwd.9} parent=0 // pred_fallthru
    _

// kernel: fwd.12
$region0: #{fwd.12}
  #allocation0 [shape = 'u32[]', space=smem, size = 0x4, offset = 0x4, fixed_abs, tag = 'smem constant byte address 0x4 - core index']
  #allocation1 [shape = 'u32[144,128]{1,0:T(1,128)}', space=vmem, size = 0x12000, scoped, tag = 'internal scratch']
  %s0 = inlined_call_operand.vmem [shape: f32[12,74], index: 0, kind: input, shape index: {}]
  %s1 = inlined_call_operand.vmem [shape: f32[74,96], index: 1, kind: input, shape index: {}]
  %s2 = inlined_call_operand.vmem [shape: f32[1,96], index: 2, kind: input, shape index: {}]
  %s3 = inlined_call_operand.vmem [shape: f32[12,96], index: 3, kind: output, shape index: {}]
  %s4 = sld [smem:[#allocation0]]
  $region22: #{fwd.12} parent=0
    _
  %s6 = ssub.s32 1, %s4
  %s7 = scalar_select 0, %s6, %s4
  // Predicated region
  $region2: #{fwd.12} parent=0 // pred_check
    _
  $region3: #{fwd.12} parent=0 // pred_check_branch
    %9 = sbr.rel (0) target = $region5
  $region4: #{fwd.12} parent=0 // pred_region
    _
  $region5: #{fwd.12} parent=0 // pred_fallthru
    _
  // Predicated region
  $region6: #{fwd.12} parent=0 // pred_check
    _
  $region7: #{fwd.12} parent=0 // pred_check_branch
    %11 = sbr.rel (0) target = $region9
  $region8: #{fwd.12} parent=0 // pred_region
    _
  $region9: #{fwd.12} parent=0 // pred_fallthru
    _
  // Predicated region
  $region10: #{fwd.12} parent=0 // pred_check
    _
  $region11: #{fwd.12} parent=0 // pred_check_branch
    %13 = sbr.rel (0) target = $region13
  $region12: #{fwd.12} parent=0 // pred_region
    _
  $region13: #{fwd.12} parent=0 // pred_fallthru
    _
  %v15 = vld [vmem:[%s0] sm:$0xff]
  %v16 = vld [vmem:[%s0 + $0x8] sm:$0xf]
  %v17 = vld [vmem:[%s1] sm:$0xff]
  %v18 = vld [vmem:[%s1 + $0x8] sm:$0xff]
  %v19 = vld [vmem:[%s1 + $0x10] sm:$0xff]
  %v20 = vld [vmem:[%s1 + $0x18] sm:$0xff]
  %v21 = vld [vmem:[%s1 + $0x20] sm:$0xff]
  %v22 = vld [vmem:[%s1 + $0x28] sm:$0xff]
  %v23 = vld [vmem:[%s1 + $0x30] sm:$0xff]
  %v24 = vld [vmem:[%s1 + $0x38] sm:$0xff]
  %v25 = vld [vmem:[%s1 + $0x40] sm:$0xff]
  %v26 = vld [vmem:[%s1 + $0x48] sm:$0x3]
  %v27 = vpack.c.bf16 %v16, %v15
  %v28 = vpack.c.bf16 %v18, %v17
  %v29 = vpack.c.bf16 %v20, %v19
  %v30 = vpack.c.bf16 %v22, %v21
  %v31 = vpack.c.bf16 %v24, %v23
  %v32 = vpack.c.bf16 %v26, %v25
  %v33 = vld [vmem:[%s2] sm:$0x1]
  %v35 = vlaneseq
  %v36 = vshrl.u32 %v35, 7
  %v37 = vsub.s32 0, %v36
  %v38 = vrot.slane %v33, %v37
  %vm40 = vcmask 605184
  %v42 = vsel %vm40, %v27, 0
  %vm44 = vcmask 1044480
  %v46 = vsel %vm44, %v32, 0
  %48 = vmatprep.subr.bf16.mxu0 0
  %49 = vmatpush1.bf16.msra.mxu0 %v28
  %50 = vmatprep.subr.bf16.mxu0 0
  %51 = vmatpush1.bf16.msra.mxu0 %v29
  %52 = vmatprep.subr.bf16.mxu0 0
  %53 = vmatpush1.bf16.msra.mxu0 %v30
  %54 = vmatprep.subr.bf16.mxu0 0
  %55 = vmatpush1.bf16.msra.mxu0 %v31
  %56 = vmatprep.subr.bf16.mxu0 0
  %57 = vmatpush1.bf16.msra.mxu0 %v46
  %58 = vmatprep.subr.bf16.mxu0 0
  %59 = vmatpush1.bf16.msra.mxu0 0
  %60 = vmatprep.subr.bf16.mxu0 0
  %61 = vmatpush1.bf16.msra.mxu0 0
  %62 = vmatprep.subr.bf16.mxu0 0
  %63 = vmatpush1.bf16.msra.mxu0 0
  %64 = vmatprep.subr.bf16.mxu0 0
  %65 = vmatpush1.bf16.msra.mxu0 0
  %66 = vmatprep.subr.bf16.mxu0 0
  %67 = vmatpush1.bf16.msra.mxu0 0
  %68 = vmatprep.subr.bf16.mxu0 0
  %69 = vmatpush1.bf16.msra.mxu0 0
  %70 = vmatprep.subr.bf16.mxu0 0
  %71 = vmatpush1.bf16.msra.mxu0 0
  %72 = vmatprep.subr.bf16.mxu0 0
  %73 = vmatpush1.bf16.msra.mxu0 0
  %74 = vmatprep.subr.bf16.mxu0 0
  %75 = vmatpush1.bf16.msra.mxu0 0
  %76 = vmatprep.subr.bf16.mxu0 0
  %77 = vmatpush1.bf16.msra.mxu0 0
  %78 = vmatprep.subr.bf16.mxu0 0
  %79 = vmatpush1.bf16.msra.mxu0 0
  %80 = vmatprep.mubr.bf16.mxu0 0
  %81 = vmatmul.mubr.bf16.gmra.mrb[0].mxu0 %v42
  %v82 = vpop.f32.mrb[0].mxu0
  %v83 = vadd.f32 %v38, %v82
  %v84 = vpop.f32.mrb[0].mxu0
  %v85 = vpop.f32.mrb[0].mxu0
  %v86 = vadd.f32 %v38, %v85
  %v87 = vpop.f32.mrb[0].mxu0
  %88 = vdwg.mxu0
  %vm89 = vcmask 785408
  %90 = vst.msk [vmem:[%s3] sm:$0xff] %vm89, %v83
  %vm91 = vcmask 781312
  %92 = vst.msk [vmem:[%s3 + $0x8] sm:$0xf] %vm91, %v86
  // Predicated region
  $region14: #{fwd.12} parent=0 // pred_check
    _
  $region15: #{fwd.12} parent=0 // pred_check_branch
    %94 = sbr.rel (0) target = $region17
  $region16: #{fwd.12} parent=0 // pred_region
    _
  $region17: #{fwd.12} parent=0 // pred_fallthru
    _
  // Predicated region
  $region18: #{fwd.12} parent=0 // pred_check
    _
  $region19: #{fwd.12} parent=0 // pred_check_branch
    %96 = sbr.rel (0) target = $region21
  $region20: #{fwd.12} parent=0 // pred_region
    _
  $region21: #{fwd.12} parent=0 // pred_fallthru
    _

// kernel: fwd.10
$region0: #{fwd.10}
  #allocation0 [shape = 'u32[]', space=smem, size = 0x4, offset = 0x4, fixed_abs, tag = 'smem constant byte address 0x4 - core index']
  #allocation1 [shape = 'u32[144,128]{1,0:T(1,128)}', space=vmem, size = 0x12000, scoped, tag = 'internal scratch']
  #allocation2 [shape = 'f32[2,32]{1,0:T(2,128)}', space=vmem, size = 0x400, scoped, tag = 'scratch operand']
  %s0 = inlined_call_operand.vmem [shape: f32[8,2,48], index: 0, kind: input, shape index: {}]
  %s1 = inlined_call_operand.vmem [shape: f32[8,2,48], index: 1, kind: input, shape index: {}]
  %s2 = inlined_call_operand.vmem [shape: f32[32,96], index: 2, kind: input, shape index: {}]
  %s3 = inlined_call_operand.vmem [shape: f32[1,96], index: 3, kind: input, shape index: {}]
  %s4 = inlined_call_operand.vmem [shape: f32[8,2,16], index: 4, kind: output, shape index: {0}]
  %s5 = inlined_call_operand.vmem [shape: f32[8,2,16], index: 5, kind: output, shape index: {1}]
  %6 = xla_tuple %s4, %s5
  %s7 = sld [smem:[#allocation0]]
  $region61: #{fwd.10} parent=0
    _
  %s9 = ssub.s32 1, %s7
  %s10 = scalar_select 0, %s9, %s7
  loop: start=0, step=1, limit=10
  $region2: #{fwd.10} parent=0 // loop_pre_header
    _
  $region3: #{fwd.10} parent=0 // loop_header
    %s12 = sphi 0, %s16
    %p13 = scmp.ge.s32.totalorder %s12, 10
    %s22 = sphi 0, %s24
    %s25 = sphi 0, %s22
    %s26 = sphi 0, %s25
    %s42 = sphi 0, %s26
    %s50 = sphi 0, %s52
    %s53 = sphi 0, %s50
    %s54 = sphi 0, %s53
    %s70 = sphi 0, %s54
    %s74 = sphi 0, %s74
    %s76 = sphi 0, %s74
    %s77 = sphi 0, %s76
    %s91 = sphi 0, %s77
    %s95 = sphi 0, %s95
    %s97 = sphi 0, %s95
    %s98 = sphi 0, %s97
    %s112 = sphi 0, %s98
    %s118 = sphi 0, %s120
    %s121 = sphi 0, %s118
    %s122 = sphi 0, %s121
    %s138 = sphi 0, %s122
    %s146 = sphi 0, %s148
    %s149 = sphi 0, %s146
    %s150 = sphi 0, %s149
    %s166 = sphi 0, %s150
  $region4: #{fwd.10} parent=0 // loop_header_branch
    %15 = sbr.rel (%p13) target = $region8
  $region5: #{fwd.10} parent=0 // loop_body
    %s17 = ssub.s32 %s12, 1
    %s18 = ssub.s32 %s12, 2
    %s19 = sadd.s32 %s12, 1
    %s20 = ssub.s32 %s12, %s19
    %p21 = scmp.eq.s32.totalorder %s20, 0
    %s23 = sadd.s32 %s22, 1
    %s24 = scalar_select %p21, %s22, %s23
    %p27 = pneg %p21
    %p28 = scmp.eq.s32.totalorder %s12, 7
    %p29 = por %p27, %p28
    %p30 = scmp.ne.s32.totalorder %s22, %s25
    %p31 = scmp.eq.s32.totalorder %s12, 0
    %p32 = por %p30, %p31
    %p33 = scmp.ne.s32.totalorder %s22, %s25
    %p34 = scmp.eq.s32.totalorder %s17, 7
    %p35 = por %p33, %p34
    %p36 = scmp.ne.s32.totalorder %s25, %s26
    %p37 = scmp.eq.s32.totalorder %s17, 0
    %p38 = por %p36, %p37
    %p39 = scmp.ne.s32.totalorder %s25, %s26
    %p40 = scmp.eq.s32.totalorder %s18, 7
    %p41 = por %p39, %p40
    %p43 = scmp.ne.s32.totalorder %s26, %s42
    %p44 = scmp.eq.s32.totalorder %s18, 0
    %p45 = por %p43, %p44
    %s46 = ssub.s32 7, %s12
    %s47 = ssub.s32 7, %s19
    %s48 = ssub.s32 %s46, %s47
    %p49 = scmp.eq.s32.totalorder %s48, 0
    %s51 = sadd.s32 %s50, 1
    %s52 = scalar_select %p49, %s50, %s51
    %p55 = pneg %p49
    %p56 = scmp.eq.s32.totalorder %s12, 7
    %p57 = por %p55, %p56
    %p58 = scmp.ne.s32.totalorder %s50, %s53
    %p59 = scmp.eq.s32.totalorder %s12, 0
    %p60 = por %p58, %p59
    %p61 = scmp.ne.s32.totalorder %s50, %s53
    %p62 = scmp.eq.s32.totalorder %s17, 7
    %p63 = por %p61, %p62
    %p64 = scmp.ne.s32.totalorder %s53, %s54
    %p65 = scmp.eq.s32.totalorder %s17, 0
    %p66 = por %p64, %p65
    %p67 = scmp.ne.s32.totalorder %s53, %s54
    %p68 = scmp.eq.s32.totalorder %s18, 7
    %p69 = por %p67, %p68
    %p71 = scmp.ne.s32.totalorder %s54, %s70
    %p72 = scmp.eq.s32.totalorder %s18, 0
    %p73 = por %p71, %p72
    %s75 = sadd.s32 %s74, 1
    %p78 = scmp.eq.s32.totalorder %s12, 7
    %p79 = scmp.ne.s32.totalorder %s74, %s76
    %p80 = scmp.eq.s32.totalorder %s12, 0
    %p81 = por %p79, %p80
    %p82 = scmp.ne.s32.totalorder %s74, %s76
    %p83 = scmp.eq.s32.totalorder %s17, 7
    %p84 = por %p82, %p83
    %p85 = scmp.ne.s32.totalorder %s76, %s77
    %p86 = scmp.eq.s32.totalorder %s17, 0
    %p87 = por %p85, %p86
    %p88 = scmp.ne.s32.totalorder %s76, %s77
    %p89 = scmp.eq.s32.totalorder %s18, 7
    %p90 = por %p88, %p89
    %p92 = scmp.ne.s32.totalorder %s77, %s91
    %p93 = scmp.eq.s32.totalorder %s18, 0
    %p94 = por %p92, %p93
    %s96 = sadd.s32 %s95, 1
    %p99 = scmp.eq.s32.totalorder %s12, 7
    %p100 = scmp.ne.s32.totalorder %s95, %s97
    %p101 = scmp.eq.s32.totalorder %s12, 0
    %p102 = por %p100, %p101
    %p103 = scmp.ne.s32.totalorder %s95, %s97
    %p104 = scmp.eq.s32.totalorder %s17, 7
    %p105 = por %p103, %p104
    %p106 = scmp.ne.s32.totalorder %s97, %s98
    %p107 = scmp.eq.s32.totalorder %s17, 0
    %p108 = por %p106, %p107
    %p109 = scmp.ne.s32.totalorder %s97, %s98
    %p110 = scmp.eq.s32.totalorder %s18, 7
    %p111 = por %p109, %p110
    %p113 = scmp.ne.s32.totalorder %s98, %s112
    %p114 = scmp.eq.s32.totalorder %s18, 0
    %p115 = por %p113, %p114
    %s116 = ssub.s32 %s12, %s19
    %p117 = scmp.eq.s32.totalorder %s116, 0
    %s119 = sadd.s32 %s118, 1
    %s120 = scalar_select %p117, %s118, %s119
    %p123 = pneg %p117
    %p124 = scmp.eq.s32.totalorder %s12, 7
    %p125 = por %p123, %p124
    %p126 = scmp.ne.s32.totalorder %s118, %s121
    %p127 = scmp.eq.s32.totalorder %s12, 0
    %p128 = por %p126, %p127
    %p129 = scmp.ne.s32.totalorder %s118, %s121
    %p130 = scmp.eq.s32.totalorder %s17, 7
    %p131 = por %p129, %p130
    %p132 = scmp.ne.s32.totalorder %s121, %s122
    %p133 = scmp.eq.s32.totalorder %s17, 0
    %p134 = por %p132, %p133
    %p135 = scmp.ne.s32.totalorder %s121, %s122
    %p136 = scmp.eq.s32.totalorder %s18, 7
    %p137 = por %p135, %p136
    %p139 = scmp.ne.s32.totalorder %s122, %s138
    %p140 = scmp.eq.s32.totalorder %s18, 0
    %p141 = por %p139, %p140
    %s142 = ssub.s32 7, %s12
    %s143 = ssub.s32 7, %s19
    %s144 = ssub.s32 %s142, %s143
    %p145 = scmp.eq.s32.totalorder %s144, 0
    %s147 = sadd.s32 %s146, 1
    %s148 = scalar_select %p145, %s146, %s147
    %p151 = pneg %p145
    %p152 = scmp.eq.s32.totalorder %s12, 7
    %p153 = por %p151, %p152
    %p154 = scmp.ne.s32.totalorder %s146, %s149
    %p155 = scmp.eq.s32.totalorder %s12, 0
    %p156 = por %p154, %p155
    %p157 = scmp.ne.s32.totalorder %s146, %s149
    %p158 = scmp.eq.s32.totalorder %s17, 7
    %p159 = por %p157, %p158
    %p160 = scmp.ne.s32.totalorder %s149, %s150
    %p161 = scmp.eq.s32.totalorder %s17, 0
    %p162 = por %p160, %p161
    %p163 = scmp.ne.s32.totalorder %s149, %s150
    %p164 = scmp.eq.s32.totalorder %s18, 7
    %p165 = por %p163, %p164
    %p167 = scmp.ne.s32.totalorder %s150, %s166
    %p168 = scmp.eq.s32.totalorder %s18, 0
    %p169 = por %p167, %p168
    %p170 = scmp.le.s32.totalorder 1, %s12
    %p171 = scmp.lt.s32.totalorder %s12, 9
    %p172 = pnand %p170, %p171
    %p173 = pneg %p172
    // Predicated region
    $region9: #{fwd.10} parent=5 // pred_check
      _
    $region10: #{fwd.10} parent=5 // pred_check_branch
      %175 = sbr.rel (%p172) target = $region12
    $region11: #{fwd.10} parent=5 // pred_region
      %s176 = ssub.s32 %s12, 1
      // Predicated region
      $region13: #{fwd.10} parent=11 // pred_check
        %p177 = pneg %p87
      $region14: #{fwd.10} parent=11 // pred_check_branch
        %179 = sbr.rel (%p177) target = $region16
      $region15: #{fwd.10} parent=11 // pred_region
        _
      $region16: #{fwd.10} parent=11 // pred_fallthru
        _
      // Predicated region
      $region17: #{fwd.10} parent=11 // pred_check
        %p180 = pneg %p108
      $region18: #{fwd.10} parent=11 // pred_check_branch
        %182 = sbr.rel (%p180) target = $region20
      $region19: #{fwd.10} parent=11 // pred_region
        _
      $region20: #{fwd.10} parent=11 // pred_fallthru
        _
    $region12: #{fwd.10} parent=5 // pred_fallthru
      _
    %p183 = scmp.lt.s32.totalorder %s12, 8
    // Predicated region
    $region21: #{fwd.10} parent=5 // pred_check
      %p184 = pneg %p183
    $region22: #{fwd.10} parent=5 // pred_check_branch
      %186 = sbr.rel (%p184) target = $region24
    $region23: #{fwd.10} parent=5 // pred_region
      // Predicated region
      $region25: #{fwd.10} parent=23 // pred_check
        %p187 = pneg %p32
      $region26: #{fwd.10} parent=23 // pred_check_branch
        %189 = sbr.rel (%p187) target = $region28
      $region27: #{fwd.10} parent=23 // pred_region
        %p190 = scmp.lt.s32.totalorder %s12, 7
        %s191 = scalar_select %p190, %s12, 7
        %s192 = smul.addr %s191, 2
        %s193 = scalar_lea.vmem %s0, %s192
      $region28: #{fwd.10} parent=23 // pred_fallthru
        _
      // Predicated region
      $region29: #{fwd.10} parent=23 // pred_check
        %p194 = pneg %p60
      $region30: #{fwd.10} parent=23 // pred_check_branch
        %196 = sbr.rel (%p194) target = $region32
      $region31: #{fwd.10} parent=23 // pred_region
        %s197 = ssub.s32 7, %s12
        %p198 = scmp.lt.s32.totalorder %s197, 7
        %s199 = scalar_select %p198, %s197, 7
        %s200 = smul.addr %s199, 2
        %s201 = scalar_lea.vmem %s1, %s200
        %s202 = ssub.s32 7, %s12
      $region32: #{fwd.10} parent=23 // pred_fallthru
        _
    $region24: #{fwd.10} parent=5 // pred_fallthru
      _
    %p203 = scmp.le.s32.totalorder 1, %s12
    %p204 = scmp.lt.s32.totalorder %s12, 9
    %p205 = pnand %p203, %p204
    %p206 = pneg %p205
    // Predicated region
    $region33: #{fwd.10} parent=5 // pred_check
      _
    $region34: #{fwd.10} parent=5 // pred_check_branch
      %208 = sbr.rel (%p205) target = $region36
    $region35: #{fwd.10} parent=5 // pred_region
      %s209 = ssub.s32 %s12, 1
      %p210 = scmp.lt.s32.totalorder %s17, 7
      %s211 = scalar_select %p210, %s17, 7
      %s212 = smul.addr %s211, 2
      %s213 = scalar_lea.vmem %s0, %s212
      %p214 = pneg %p38
      %p215 = pneg %p35
      %s216 = ssub.s32 7, %s17
      %p217 = scmp.lt.s32.totalorder %s216, 7
      %s218 = scalar_select %p217, %s216, 7
      %s219 = smul.addr %s218, 2
      %s220 = scalar_lea.vmem %s1, %s219
      %p221 = pneg %p66
      %p222 = pneg %p63
      %p223 = pneg %p87
      %p224 = pneg %p84
      %p225 = pneg %p108
      %p226 = pneg %p105
      %p227 = pneg %p134
      %p228 = pneg %p131
      %p229 = scmp.lt.s32.totalorder %s17, 7
      %s230 = scalar_select %p229, %s17, 7
      %s231 = smul.addr %s230, 2
      %s232 = scalar_lea.vmem %s4, %s231
      %p233 = pneg %p162
      %p234 = pneg %p159
      %s235 = ssub.s32 7, %s17
      %p236 = scmp.lt.s32.totalorder %s235, 7
      %s237 = scalar_select %p236, %s235, 7
      %s238 = smul.addr %s237, 2
      %s239 = scalar_lea.vmem %s5, %s238
      %p240 = scmp.lt.s32.totalorder %s17, 7
      %s241 = scalar_select %p240, %s17, 7
      %s242 = smul.addr %s241, 2
      %s243 = scalar_lea.vmem %s0, %s242
      %s244 = ssub.s32 7, %s17
      %p245 = scmp.lt.s32.totalorder %s244, 7
      %s246 = scalar_select %p245, %s244, 7
      %s247 = smul.addr %s246, 2
      %s248 = scalar_lea.vmem %s1, %s247
      %s249 = ssub.s32 7, %s17
      %p250 = scmp.lt.s32.totalorder %s17, 7
      %s251 = scalar_select %p250, %s17, 7
      %s252 = smul.addr %s251, 2
      %s253 = scalar_lea.vmem %s4, %s252
      %s254 = ssub.s32 7, %s17
      %p255 = scmp.lt.s32.totalorder %s254, 7
      %s256 = scalar_select %p255, %s254, 7
      %s257 = smul.addr %s256, 2
      %s258 = scalar_lea.vmem %s5, %s257
      %s259 = ssub.s32 7, %s17
      %p260 = scmp.eq.s32.totalorder %s17, 0
      // Predicated region
      $region37: #{fwd.10} parent=35 // pred_check
        %p261 = pneg %p260
      $region38: #{fwd.10} parent=35 // pred_check_branch
        %263 = sbr.rel (%p261) target = $region40
      $region39: #{fwd.10} parent=35 // pred_region
        %vm264 = vcmask 254976
        %265 = vst.msk [vmem:[#allocation2] sm:$0x3] %vm264, 0.0
      $region40: #{fwd.10} parent=35 // pred_fallthru
        _
      %v266 = vld [vmem:[#allocation2] sm:$0x3]
      %v267 = vld [vmem:[%s2] sm:$0xff]
      %v268 = vld [vmem:[%s2 + $0x8] sm:$0xff]
      %v269 = vld [vmem:[%s2 + $0x10] sm:$0xff]
      %v270 = vld [vmem:[%s2 + $0x18] sm:$0xff]
      %v271 = vld [vmem:[%s3] sm:$0x1]
      %v273 = vlaneseq
      %v274 = vshrl.u32 %v273, 7
      %v275 = vsub.s32 0, %v274
      %v276 = vrot.slane %v271, %v275
      %vm278 = vcmask 261120
      %v280 = vsel %vm278, %v266, 0
      %282 = vmatprep.subr.mxu0 0.0
      %283 = vmatpush1.msra.mxu0 %v267
      %284 = vmatprep.subr.mxu0 0.0
      %285 = vmatpush1.msra.mxu0 %v268
      %286 = vmatprep.subr.mxu0 0.0
      %287 = vmatpush1.msra.mxu0 %v269
      %288 = vmatprep.subr.mxu0 0.0
      %289 = vmatpush1.msra.mxu0 %v270
      %290 = vmatprep.subr.mxu0 0.0
      %291 = vmatpush1.msra.mxu0 0.0
      %292 = vmatprep.subr.mxu0 0.0
      %293 = vmatpush1.msra.mxu0 0.0
      %294 = vmatprep.subr.mxu0 0.0
      %295 = vmatpush1.msra.mxu0 0.0
      %296 = vmatprep.subr.mxu0 0.0
      %297 = vmatpush1.msra.mxu0 0.0
      %298 = vmatprep.subr.mxu0 0.0
      %299 = vmatpush1.msra.mxu0 0.0
      %300 = vmatprep.subr.mxu0 0.0
      %301 = vmatpush1.msra.mxu0 0.0
      %302 = vmatprep.subr.mxu0 0.0
      %303 = vmatpush1.msra.mxu0 0.0
      %304 = vmatprep.subr.mxu0 0.0
      %305 = vmatpush1.msra.mxu0 0.0
      %306 = vmatprep.subr.mxu0 0.0
      %307 = vmatpush1.msra.mxu0 0.0
      %308 = vmatprep.subr.mxu0 0.0
      %309 = vmatpush1.msra.mxu0 0.0
      %310 = vmatprep.subr.mxu0 0.0
      %311 = vmatpush1.msra.mxu0 0.0
      %312 = vmatprep.subr.mxu0 0.0
      %313 = vmatpush1.msra.mxu0 0.0
      %314 = vmatprep.subr.mxu0 0.0
      %315 = vmatpush1.msra.mxu0 0.0
      %316 = vmatprep.subr.mxu0 0.0
      %317 = vmatpush1.msra.mxu0 0.0
      %318 = vmatprep.subr.mxu0 0.0
      %319 = vmatpush1.msra.mxu0 0.0
      %320 = vmatprep.subr.mxu0 0.0
      %321 = vmatpush1.msra.mxu0 0.0
      %322 = vmatprep.subr.mxu0 0.0
      %323 = vmatpush1.msra.mxu0 0.0
      %324 = vmatprep.subr.mxu0 0.0
      %325 = vmatpush1.msra.mxu0 0.0
      %326 = vmatprep.subr.mxu0 0.0
      %327 = vmatpush1.msra.mxu0 0.0
      %328 = vmatprep.subr.mxu0 0.0
      %329 = vmatpush1.msra.mxu0 0.0
      %330 = vmatprep.subr.mxu0 0.0
      %331 = vmatpush1.msra.mxu0 0.0
      %332 = vmatprep.subr.mxu0 0.0
      %333 = vmatpush1.msra.mxu0 0.0
      %334 = vmatprep.subr.mxu0 0.0
      %335 = vmatpush1.msra.mxu0 0.0
      %336 = vmatprep.subr.mxu0 0.0
      %337 = vmatpush1.msra.mxu0 0.0
      %338 = vmatprep.subr.mxu0 0.0
      %339 = vmatpush1.msra.mxu0 0.0
      %340 = vmatprep.subr.mxu0 0.0
      %341 = vmatpush1.msra.mxu0 0.0
      %342 = vmatprep.subr.mxu0 0.0
      %343 = vmatpush1.msra.mxu0 0.0
      %344 = vmatprep.subr.mxu0 0.0
      %345 = vmatpush1.msra.mxu0 0.0
      %346 = vmatprep.mubr.f32.mxu0 0.0
      %347 = vmatmul.mubr.f32.gmra.mrb[0].mxu0 %v280
      %v348 = vpop.f32.mrb[0].mxu0
      %v349 = vadd.f32 %v276, %v348
      %v350 = vpop.f32.mrb[0].mxu0
      %351 = vdwg.mxu0
      %v352 = vld [vmem:[%s243] sm:$0x3]
      %v353 = vld [vmem:[%s248] sm:$0x3]
      %v354 = vadd.f32 %v352, %v349
      %v355 = vxor.u32 %v354, 2147483648
      %v356 = vmul.f32 %v355, 1.442695
      %v357 = vpow.pop %v356
      %v358 = vadd.f32 %v357, 1.0
      %v359 = vrcp.pop %v358
      %v360 = vmul.f32 1.0, %v359
      %362 = vrot.lane.b32.xlu0 %v349, 96
      %v363 = vpop.permute.xlu0 %362
      %v365 = vmul.f32 %v360, %v363
      %367 = vrot.lane.b32.xlu0 %v365, 32
      %v368 = vpop.permute.xlu0 %367
      %v370 = vadd.f32 %v352, %v368
      %v371 = vtanh.pop %v370
      %372 = vrot.lane.b32.xlu0 %v349, 80
      %v373 = vpop.permute.xlu0 %372
      %v375 = vadd.f32 %v353, %v373
      %v376 = vxor.u32 %v375, 2147483648
      %v377 = vmul.f32 %v376, 1.442695
      %v378 = vpow.pop %v377
      %v379 = vadd.f32 %v378, 1.0
      %v380 = vrcp.pop %v379
      %v381 = vmul.f32 1.0, %v380
      %382 = vrot.lane.b32.xlu0 %v349, 48
      %v383 = vpop.permute.xlu0 %382
      %v385 = vmul.f32 %v381, %v383
      %387 = vrot.lane.b32.xlu0 %v385, 32
      %v388 = vpop.permute.xlu0 %387
      %v390 = vadd.f32 %v353, %v388
      %v391 = vtanh.pop %v390
      %v392 = vsub.f32 1.0, %v360
      %394 = vrot.lane.b32.xlu0 %v371, 112
      %v395 = vpop.permute.xlu0 %394
      %v397 = vmul.f32 %v392, %v395
      %398 = vrot.lane.b32.xlu0 %v266, 16
      %v399 = vpop.permute.xlu0 %398
      %v401 = vmul.f32 %v360, %v399
      %v402 = vadd.f32 %v397, %v401
      %v403 = vsub.f32 1.0, %v381
      %405 = vrot.lane.b32.xlu0 %v391, 112
      %v406 = vpop.permute.xlu0 %405
      %v408 = vmul.f32 %v403, %v406
      %v409 = vmul.f32 %v381, %v266
      %v410 = vadd.f32 %v408, %v409
      %412 = vrot.lane.b32.xlu0 %v402, 112
      %v413 = vpop.permute.xlu0 %412
      %vm415 = vcmask 130048
      %v416 = vsel %vm415, %v413, %v410
      %vm417 = vcmask 254976
      %418 = vst.msk [vmem:[#allocation2] sm:$0x3] %vm417, %v416
      %vm419 = vcmask 123904
      %420 = vst.msk [vmem:[%s253] sm:$0x3] %vm419, %v413
      %422 = vrot.lane.b32.xlu0 %v410, 112
      %v423 = vpop.permute.xlu0 %422
      %425 = vst.msk [vmem:[%s258] sm:$0x3] %vm419, %v423
      %p426 = scmp.lt.s32.totalorder %s17, 7
      %s427 = scalar_select %p426, %s17, 7
      %s428 = smul.addr %s427, 2
      %s429 = scalar_lea.vmem %s4, %s428
      %s430 = ssub.s32 7, %s17
      %p431 = scmp.lt.s32.totalorder %s430, 7
      %s432 = scalar_select %p431, %s430, 7
      %s433 = smul.addr %s432, 2
      %s434 = scalar_lea.vmem %s5, %s433
      // Predicated region
      $region41: #{fwd.10} parent=35 // pred_check
        %p435 = pneg %p131
      $region42: #{fwd.10} parent=35 // pred_check_branch
        %437 = sbr.rel (%p435) target = $region44
      $region43: #{fwd.10} parent=35 // pred_region
        _
      $region44: #{fwd.10} parent=35 // pred_fallthru
        _
      // Predicated region
      $region45: #{fwd.10} parent=35 // pred_check
        %p438 = pneg %p159
      $region46: #{fwd.10} parent=35 // pred_check_branch
        %440 = sbr.rel (%p438) target = $region48
      $region47: #{fwd.10} parent=35 // pred_region
        %s441 = ssub.s32 7, %s17
      $region48: #{fwd.10} parent=35 // pred_fallthru
        _
    $region36: #{fwd.10} parent=5 // pred_fallthru
      _
    %p442 = scmp.le.s32.totalorder 2, %s12
    // Predicated region
    $region49: #{fwd.10} parent=5 // pred_check
      %p443 = pneg %p442
    $region50: #{fwd.10} parent=5 // pred_check_branch
      %445 = sbr.rel (%p443) target = $region52
    $region51: #{fwd.10} parent=5 // pred_region
      %s446 = ssub.s32 %s12, 2
      // Predicated region
      $region53: #{fwd.10} parent=51 // pred_check
        %p447 = pneg %p137
      $region54: #{fwd.10} parent=51 // pred_check_branch
        %449 = sbr.rel (%p447) target = $region56
      $region55: #{fwd.10} parent=51 // pred_region
        %p450 = scmp.lt.s32.totalorder %s18, 7
        %s451 = scalar_select %p450, %s18, 7
        %s452 = smul.addr %s451, 2
        %s453 = scalar_lea.vmem %s4, %s452
      $region56: #{fwd.10} parent=51 // pred_fallthru
        _
      // Predicated region
      $region57: #{fwd.10} parent=51 // pred_check
        %p454 = pneg %p165
      $region58: #{fwd.10} parent=51 // pred_check_branch
        %456 = sbr.rel (%p454) target = $region60
      $region59: #{fwd.10} parent=51 // pred_region
        %s457 = ssub.s32 7, %s18
        %p458 = scmp.lt.s32.totalorder %s457, 7
        %s459 = scalar_select %p458, %s457, 7
        %s460 = smul.addr %s459, 2
        %s461 = scalar_lea.vmem %s5, %s460
      $region60: #{fwd.10} parent=51 // pred_fallthru
        _
    $region52: #{fwd.10} parent=5 // pred_fallthru
      _
  $region6: #{fwd.10} parent=0 // loop_footer
    %s16 = sadd.s32 1, %s12
  $region7: #{fwd.10} parent=0 // loop_footer_branch
    %11 = sbr.rel target = $region3
  $region8: #{fwd.10} parent=0 // loop_exit
    _

// kernel: fwd.14
$region0: #{fwd.14}
  #allocation0 [shape = 'u32[]', space=smem, size = 0x4, offset = 0x4, fixed_abs, tag = 'smem constant byte address 0x4 - core index']
  #allocation1 [shape = 'u32[144,128]{1,0:T(1,128)}', space=vmem, size = 0x12000, scoped, tag = 'internal scratch']
  %s0 = inlined_call_operand.vmem [shape: f32[12,16], index: 0, kind: input, shape index: {}]
  %s1 = inlined_call_operand.vmem [shape: f32[12,16], index: 1, kind: input, shape index: {}]
  %s2 = inlined_call_operand.vmem [shape: f32[16,32], index: 2, kind: input, shape index: {}]
  %s3 = inlined_call_operand.vmem [shape: f32[16,32], index: 3, kind: input, shape index: {}]
  %s4 = inlined_call_operand.vmem [shape: f32[1,32], index: 4, kind: input, shape index: {}]
  %s5 = inlined_call_operand.vmem [shape: f32[12,32], index: 5, kind: output, shape index: {}]
  %s6 = sld [smem:[#allocation0]]
  $region30: #{fwd.14} parent=0
    _
  %s8 = ssub.s32 1, %s6
  %s9 = scalar_select 0, %s8, %s6
  // Predicated region
  $region2: #{fwd.14} parent=0 // pred_check
    _
  $region3: #{fwd.14} parent=0 // pred_check_branch
    %11 = sbr.rel (0) target = $region5
  $region4: #{fwd.14} parent=0 // pred_region
    _
  $region5: #{fwd.14} parent=0 // pred_fallthru
    _
  // Predicated region
  $region6: #{fwd.14} parent=0 // pred_check
    _
  $region7: #{fwd.14} parent=0 // pred_check_branch
    %13 = sbr.rel (0) target = $region9
  $region8: #{fwd.14} parent=0 // pred_region
    _
  $region9: #{fwd.14} parent=0 // pred_fallthru
    _
  // Predicated region
  $region10: #{fwd.14} parent=0 // pred_check
    _
  $region11: #{fwd.14} parent=0 // pred_check_branch
    %15 = sbr.rel (0) target = $region13
  $region12: #{fwd.14} parent=0 // pred_region
    _
  $region13: #{fwd.14} parent=0 // pred_fallthru
    _
  // Predicated region
  $region14: #{fwd.14} parent=0 // pred_check
    _
  $region15: #{fwd.14} parent=0 // pred_check_branch
    %17 = sbr.rel (0) target = $region17
  $region16: #{fwd.14} parent=0 // pred_region
    _
  $region17: #{fwd.14} parent=0 // pred_fallthru
    _
  // Predicated region
  $region18: #{fwd.14} parent=0 // pred_check
    _
  $region19: #{fwd.14} parent=0 // pred_check_branch
    %19 = sbr.rel (0) target = $region21
  $region20: #{fwd.14} parent=0 // pred_region
    _
  $region21: #{fwd.14} parent=0 // pred_fallthru
    _
  %v21 = vld [vmem:[%s0] sm:$0xff]
  %v22 = vld [vmem:[%s0 + $0x8] sm:$0xf]
  %v23 = vld [vmem:[%s2] sm:$0xff]
  %v24 = vld [vmem:[%s2 + $0x8] sm:$0xff]
  %v25 = vpack.c.bf16 %v22, %v21
  %v26 = vpack.c.bf16 %v24, %v23
  %v27 = vld [vmem:[%s1] sm:$0xff]
  %v28 = vld [vmem:[%s1 + $0x8] sm:$0xf]
  %v29 = vld [vmem:[%s3] sm:$0xff]
  %v30 = vld [vmem:[%s3 + $0x8] sm:$0xff]
  %v31 = vpack.c.bf16 %v28, %v27
  %v32 = vpack.c.bf16 %v30, %v29
  %vm33 = vcmask 130048
  %v35 = vsel %vm33, %v31, 0
  %37 = vmatprep.subr.bf16.mxu0 0
  %38 = vmatpush1.bf16.msra.mxu0 %v32
  %39 = vmatprep.subr.bf16.mxu0 0
  %40 = vmatpush1.bf16.msra.mxu0 0
  %41 = vmatprep.subr.bf16.mxu0 0
  %42 = vmatpush1.bf16.msra.mxu0 0
  %43 = vmatprep.subr.bf16.mxu0 0
  %44 = vmatpush1.bf16.msra.mxu0 0
  %45 = vmatprep.subr.bf16.mxu0 0
  %46 = vmatpush1.bf16.msra.mxu0 0
  %47 = vmatprep.subr.bf16.mxu0 0
  %48 = vmatpush1.bf16.msra.mxu0 0
  %49 = vmatprep.subr.bf16.mxu0 0
  %50 = vmatpush1.bf16.msra.mxu0 0
  %51 = vmatprep.subr.bf16.mxu0 0
  %52 = vmatpush1.bf16.msra.mxu0 0
  %53 = vmatprep.subr.bf16.mxu0 0
  %54 = vmatpush1.bf16.msra.mxu0 0
  %55 = vmatprep.subr.bf16.mxu0 0
  %56 = vmatpush1.bf16.msra.mxu0 0
  %57 = vmatprep.subr.bf16.mxu0 0
  %58 = vmatpush1.bf16.msra.mxu0 0
  %59 = vmatprep.subr.bf16.mxu0 0
  %60 = vmatpush1.bf16.msra.mxu0 0
  %61 = vmatprep.subr.bf16.mxu0 0
  %62 = vmatpush1.bf16.msra.mxu0 0
  %63 = vmatprep.subr.bf16.mxu0 0
  %64 = vmatpush1.bf16.msra.mxu0 0
  %65 = vmatprep.subr.bf16.mxu0 0
  %66 = vmatpush1.bf16.msra.mxu0 0
  %67 = vmatprep.subr.bf16.mxu0 0
  %68 = vmatpush1.bf16.msra.mxu0 0
  %69 = vmatprep.mubr.bf16.mxu0 0
  %70 = vmatmul.mubr.bf16.gmra.mrb[0].mxu0 %v35
  %v71 = vpop.f32.mrb[0].mxu0
  %v72 = vadd.f32 0.0, %v71
  %v73 = vpop.f32.mrb[0].mxu0
  %v74 = vpop.f32.mrb[0].mxu0
  %v75 = vadd.f32 0.0, %v74
  %v76 = vpop.f32.mrb[0].mxu0
  %77 = vdwg.mxu0
  %v79 = vsel %vm33, %v25, 0
  %81 = vmatprep.subr.bf16.mxu0 0
  %82 = vmatpush1.bf16.msra.mxu0 %v26
  %83 = vmatprep.subr.bf16.mxu0 0
  %84 = vmatpush1.bf16.msra.mxu0 0
  %85 = vmatprep.subr.bf16.mxu0 0
  %86 = vmatpush1.bf16.msra.mxu0 0
  %87 = vmatprep.subr.bf16.mxu0 0
  %88 = vmatpush1.bf16.msra.mxu0 0
  %89 = vmatprep.subr.bf16.mxu0 0
  %90 = vmatpush1.bf16.msra.mxu0 0
  %91 = vmatprep.subr.bf16.mxu0 0
  %92 = vmatpush1.bf16.msra.mxu0 0
  %93 = vmatprep.subr.bf16.mxu0 0
  %94 = vmatpush1.bf16.msra.mxu0 0
  %95 = vmatprep.subr.bf16.mxu0 0
  %96 = vmatpush1.bf16.msra.mxu0 0
  %97 = vmatprep.subr.bf16.mxu0 0
  %98 = vmatpush1.bf16.msra.mxu0 0
  %99 = vmatprep.subr.bf16.mxu0 0
  %100 = vmatpush1.bf16.msra.mxu0 0
  %101 = vmatprep.subr.bf16.mxu0 0
  %102 = vmatpush1.bf16.msra.mxu0 0
  %103 = vmatprep.subr.bf16.mxu0 0
  %104 = vmatpush1.bf16.msra.mxu0 0
  %105 = vmatprep.subr.bf16.mxu0 0
  %106 = vmatpush1.bf16.msra.mxu0 0
  %107 = vmatprep.subr.bf16.mxu0 0
  %108 = vmatpush1.bf16.msra.mxu0 0
  %109 = vmatprep.subr.bf16.mxu0 0
  %110 = vmatpush1.bf16.msra.mxu0 0
  %111 = vmatprep.subr.bf16.mxu0 0
  %112 = vmatpush1.bf16.msra.mxu0 0
  %113 = vmatprep.mubr.bf16.mxu0 0
  %114 = vmatmul.mubr.bf16.gmra.mrb[0].mxu0 %v79
  %v115 = vpop.f32.mrb[0].mxu0
  %v116 = vadd.f32 %v72, %v115
  %v117 = vpop.f32.mrb[0].mxu0
  %v118 = vpop.f32.mrb[0].mxu0
  %v119 = vadd.f32 %v75, %v118
  %v120 = vpop.f32.mrb[0].mxu0
  %121 = vdwg.mxu0
  %v122 = vld [vmem:[%s4] sm:$0x1]
  %v124 = vlaneseq
  %v125 = vshrl.u32 %v124, 7
  %v126 = vsub.s32 0, %v125
  %v127 = vrot.slane %v122, %v126
  %v129 = vadd.f32 %v116, %v127
  %v130 = vadd.f32 %v119, %v127
  %vm131 = vcmask 261120
  %132 = vst.msk [vmem:[%s5] sm:$0xff] %vm131, %v129
  %vm133 = vcmask 257024
  %134 = vst.msk [vmem:[%s5 + $0x8] sm:$0xf] %vm133, %v130
  // Predicated region
  $region22: #{fwd.14} parent=0 // pred_check
    _
  $region23: #{fwd.14} parent=0 // pred_check_branch
    %136 = sbr.rel (0) target = $region25
  $region24: #{fwd.14} parent=0 // pred_region
    _
  $region25: #{fwd.14} parent=0 // pred_fallthru
    _
  // Predicated region
  $region26: #{fwd.14} parent=0 // pred_check
    _
  $region27: #{fwd.14} parent=0 // pred_check_branch
    %138 = sbr.rel (0) target = $region29
  $region28: #{fwd.14} parent=0 // pred_region
    _
  $region29: #{fwd.14} parent=0 // pred_fallthru
    _

// kernel: fwd.13
$region0: #{fwd.13}
  #allocation0 [shape = 'u32[]', space=smem, size = 0x4, offset = 0x4, fixed_abs, tag = 'smem constant byte address 0x4 - core index']
  #allocation1 [shape = 'u32[144,128]{1,0:T(1,128)}', space=vmem, size = 0x12000, scoped, tag = 'internal scratch']
  #allocation2 [shape = 'f32[2,32]{1,0:T(2,128)}', space=vmem, size = 0x400, scoped, tag = 'scratch operand']
  %s0 = inlined_call_operand.vmem [shape: f32[6,2,48], index: 0, kind: input, shape index: {}]
  %s1 = inlined_call_operand.vmem [shape: f32[6,2,48], index: 1, kind: input, shape index: {}]
  %s2 = inlined_call_operand.vmem [shape: f32[32,96], index: 2, kind: input, shape index: {}]
  %s3 = inlined_call_operand.vmem [shape: f32[1,96], index: 3, kind: input, shape index: {}]
  %s4 = inlined_call_operand.vmem [shape: f32[6,2,16], index: 4, kind: output, shape index: {0}]
  %s5 = inlined_call_operand.vmem [shape: f32[6,2,16], index: 5, kind: output, shape index: {1}]
  %6 = xla_tuple %s4, %s5
  %s7 = sld [smem:[#allocation0]]
  $region61: #{fwd.13} parent=0
    _
  %s9 = ssub.s32 1, %s7
  %s10 = scalar_select 0, %s9, %s7
  loop: start=0, step=1, limit=8
  $region2: #{fwd.13} parent=0 // loop_pre_header
    _
  $region3: #{fwd.13} parent=0 // loop_header
    %s12 = sphi 0, %s16
    %p13 = scmp.ge.s32.totalorder %s12, 8
    %s22 = sphi 0, %s24
    %s25 = sphi 0, %s22
    %s26 = sphi 0, %s25
    %s42 = sphi 0, %s26
    %s50 = sphi 0, %s52
    %s53 = sphi 0, %s50
    %s54 = sphi 0, %s53
    %s70 = sphi 0, %s54
    %s74 = sphi 0, %s74
    %s76 = sphi 0, %s74
    %s77 = sphi 0, %s76
    %s91 = sphi 0, %s77
    %s95 = sphi 0, %s95
    %s97 = sphi 0, %s95
    %s98 = sphi 0, %s97
    %s112 = sphi 0, %s98
    %s118 = sphi 0, %s120
    %s121 = sphi 0, %s118
    %s122 = sphi 0, %s121
    %s138 = sphi 0, %s122
    %s146 = sphi 0, %s148
    %s149 = sphi 0, %s146
    %s150 = sphi 0, %s149
    %s166 = sphi 0, %s150
  $region4: #{fwd.13} parent=0 // loop_header_branch
    %15 = sbr.rel (%p13) target = $region8
  $region5: #{fwd.13} parent=0 // loop_body
    %s17 = ssub.s32 %s12, 1
    %s18 = ssub.s32 %s12, 2
    %s19 = sadd.s32 %s12, 1
    %s20 = ssub.s32 %s12, %s19
    %p21 = scmp.eq.s32.totalorder %s20, 0
    %s23 = sadd.s32 %s22, 1
    %s24 = scalar_select %p21, %s22, %s23
    %p27 = pneg %p21
    %p28 = scmp.eq.s32.totalorder %s12, 5
    %p29 = por %p27, %p28
    %p30 = scmp.ne.s32.totalorder %s22, %s25
    %p31 = scmp.eq.s32.totalorder %s12, 0
    %p32 = por %p30, %p31
    %p33 = scmp.ne.s32.totalorder %s22, %s25
    %p34 = scmp.eq.s32.totalorder %s17, 5
    %p35 = por %p33, %p34
    %p36 = scmp.ne.s32.totalorder %s25, %s26
    %p37 = scmp.eq.s32.totalorder %s17, 0
    %p38 = por %p36, %p37
    %p39 = scmp.ne.s32.totalorder %s25, %s26
    %p40 = scmp.eq.s32.totalorder %s18, 5
    %p41 = por %p39, %p40
    %p43 = scmp.ne.s32.totalorder %s26, %s42
    %p44 = scmp.eq.s32.totalorder %s18, 0
    %p45 = por %p43, %p44
    %s46 = ssub.s32 5, %s12
    %s47 = ssub.s32 5, %s19
    %s48 = ssub.s32 %s46, %s47
    %p49 = scmp.eq.s32.totalorder %s48, 0
    %s51 = sadd.s32 %s50, 1
    %s52 = scalar_select %p49, %s50, %s51
    %p55 = pneg %p49
    %p56 = scmp.eq.s32.totalorder %s12, 5
    %p57 = por %p55, %p56
    %p58 = scmp.ne.s32.totalorder %s50, %s53
    %p59 = scmp.eq.s32.totalorder %s12, 0
    %p60 = por %p58, %p59
    %p61 = scmp.ne.s32.totalorder %s50, %s53
    %p62 = scmp.eq.s32.totalorder %s17, 5
    %p63 = por %p61, %p62
    %p64 = scmp.ne.s32.totalorder %s53, %s54
    %p65 = scmp.eq.s32.totalorder %s17, 0
    %p66 = por %p64, %p65
    %p67 = scmp.ne.s32.totalorder %s53, %s54
    %p68 = scmp.eq.s32.totalorder %s18, 5
    %p69 = por %p67, %p68
    %p71 = scmp.ne.s32.totalorder %s54, %s70
    %p72 = scmp.eq.s32.totalorder %s18, 0
    %p73 = por %p71, %p72
    %s75 = sadd.s32 %s74, 1
    %p78 = scmp.eq.s32.totalorder %s12, 5
    %p79 = scmp.ne.s32.totalorder %s74, %s76
    %p80 = scmp.eq.s32.totalorder %s12, 0
    %p81 = por %p79, %p80
    %p82 = scmp.ne.s32.totalorder %s74, %s76
    %p83 = scmp.eq.s32.totalorder %s17, 5
    %p84 = por %p82, %p83
    %p85 = scmp.ne.s32.totalorder %s76, %s77
    %p86 = scmp.eq.s32.totalorder %s17, 0
    %p87 = por %p85, %p86
    %p88 = scmp.ne.s32.totalorder %s76, %s77
    %p89 = scmp.eq.s32.totalorder %s18, 5
    %p90 = por %p88, %p89
    %p92 = scmp.ne.s32.totalorder %s77, %s91
    %p93 = scmp.eq.s32.totalorder %s18, 0
    %p94 = por %p92, %p93
    %s96 = sadd.s32 %s95, 1
    %p99 = scmp.eq.s32.totalorder %s12, 5
    %p100 = scmp.ne.s32.totalorder %s95, %s97
    %p101 = scmp.eq.s32.totalorder %s12, 0
    %p102 = por %p100, %p101
    %p103 = scmp.ne.s32.totalorder %s95, %s97
    %p104 = scmp.eq.s32.totalorder %s17, 5
    %p105 = por %p103, %p104
    %p106 = scmp.ne.s32.totalorder %s97, %s98
    %p107 = scmp.eq.s32.totalorder %s17, 0
    %p108 = por %p106, %p107
    %p109 = scmp.ne.s32.totalorder %s97, %s98
    %p110 = scmp.eq.s32.totalorder %s18, 5
    %p111 = por %p109, %p110
    %p113 = scmp.ne.s32.totalorder %s98, %s112
    %p114 = scmp.eq.s32.totalorder %s18, 0
    %p115 = por %p113, %p114
    %s116 = ssub.s32 %s12, %s19
    %p117 = scmp.eq.s32.totalorder %s116, 0
    %s119 = sadd.s32 %s118, 1
    %s120 = scalar_select %p117, %s118, %s119
    %p123 = pneg %p117
    %p124 = scmp.eq.s32.totalorder %s12, 5
    %p125 = por %p123, %p124
    %p126 = scmp.ne.s32.totalorder %s118, %s121
    %p127 = scmp.eq.s32.totalorder %s12, 0
    %p128 = por %p126, %p127
    %p129 = scmp.ne.s32.totalorder %s118, %s121
    %p130 = scmp.eq.s32.totalorder %s17, 5
    %p131 = por %p129, %p130
    %p132 = scmp.ne.s32.totalorder %s121, %s122
    %p133 = scmp.eq.s32.totalorder %s17, 0
    %p134 = por %p132, %p133
    %p135 = scmp.ne.s32.totalorder %s121, %s122
    %p136 = scmp.eq.s32.totalorder %s18, 5
    %p137 = por %p135, %p136
    %p139 = scmp.ne.s32.totalorder %s122, %s138
    %p140 = scmp.eq.s32.totalorder %s18, 0
    %p141 = por %p139, %p140
    %s142 = ssub.s32 5, %s12
    %s143 = ssub.s32 5, %s19
    %s144 = ssub.s32 %s142, %s143
    %p145 = scmp.eq.s32.totalorder %s144, 0
    %s147 = sadd.s32 %s146, 1
    %s148 = scalar_select %p145, %s146, %s147
    %p151 = pneg %p145
    %p152 = scmp.eq.s32.totalorder %s12, 5
    %p153 = por %p151, %p152
    %p154 = scmp.ne.s32.totalorder %s146, %s149
    %p155 = scmp.eq.s32.totalorder %s12, 0
    %p156 = por %p154, %p155
    %p157 = scmp.ne.s32.totalorder %s146, %s149
    %p158 = scmp.eq.s32.totalorder %s17, 5
    %p159 = por %p157, %p158
    %p160 = scmp.ne.s32.totalorder %s149, %s150
    %p161 = scmp.eq.s32.totalorder %s17, 0
    %p162 = por %p160, %p161
    %p163 = scmp.ne.s32.totalorder %s149, %s150
    %p164 = scmp.eq.s32.totalorder %s18, 5
    %p165 = por %p163, %p164
    %p167 = scmp.ne.s32.totalorder %s150, %s166
    %p168 = scmp.eq.s32.totalorder %s18, 0
    %p169 = por %p167, %p168
    %p170 = scmp.le.s32.totalorder 1, %s12
    %p171 = scmp.lt.s32.totalorder %s12, 7
    %p172 = pnand %p170, %p171
    %p173 = pneg %p172
    // Predicated region
    $region9: #{fwd.13} parent=5 // pred_check
      _
    $region10: #{fwd.13} parent=5 // pred_check_branch
      %175 = sbr.rel (%p172) target = $region12
    $region11: #{fwd.13} parent=5 // pred_region
      %s176 = ssub.s32 %s12, 1
      // Predicated region
      $region13: #{fwd.13} parent=11 // pred_check
        %p177 = pneg %p87
      $region14: #{fwd.13} parent=11 // pred_check_branch
        %179 = sbr.rel (%p177) target = $region16
      $region15: #{fwd.13} parent=11 // pred_region
        _
      $region16: #{fwd.13} parent=11 // pred_fallthru
        _
      // Predicated region
      $region17: #{fwd.13} parent=11 // pred_check
        %p180 = pneg %p108
      $region18: #{fwd.13} parent=11 // pred_check_branch
        %182 = sbr.rel (%p180) target = $region20
      $region19: #{fwd.13} parent=11 // pred_region
        _
      $region20: #{fwd.13} parent=11 // pred_fallthru
        _
    $region12: #{fwd.13} parent=5 // pred_fallthru
      _
    %p183 = scmp.lt.s32.totalorder %s12, 6
    // Predicated region
    $region21: #{fwd.13} parent=5 // pred_check
      %p184 = pneg %p183
    $region22: #{fwd.13} parent=5 // pred_check_branch
      %186 = sbr.rel (%p184) target = $region24
    $region23: #{fwd.13} parent=5 // pred_region
      // Predicated region
      $region25: #{fwd.13} parent=23 // pred_check
        %p187 = pneg %p32
      $region26: #{fwd.13} parent=23 // pred_check_branch
        %189 = sbr.rel (%p187) target = $region28
      $region27: #{fwd.13} parent=23 // pred_region
        %p190 = scmp.lt.s32.totalorder %s12, 5
        %s191 = scalar_select %p190, %s12, 5
        %s192 = smul.addr %s191, 2
        %s193 = scalar_lea.vmem %s0, %s192
      $region28: #{fwd.13} parent=23 // pred_fallthru
        _
      // Predicated region
      $region29: #{fwd.13} parent=23 // pred_check
        %p194 = pneg %p60
      $region30: #{fwd.13} parent=23 // pred_check_branch
        %196 = sbr.rel (%p194) target = $region32
      $region31: #{fwd.13} parent=23 // pred_region
        %s197 = ssub.s32 5, %s12
        %p198 = scmp.lt.s32.totalorder %s197, 5
        %s199 = scalar_select %p198, %s197, 5
        %s200 = smul.addr %s199, 2
        %s201 = scalar_lea.vmem %s1, %s200
        %s202 = ssub.s32 5, %s12
      $region32: #{fwd.13} parent=23 // pred_fallthru
        _
    $region24: #{fwd.13} parent=5 // pred_fallthru
      _
    %p203 = scmp.le.s32.totalorder 1, %s12
    %p204 = scmp.lt.s32.totalorder %s12, 7
    %p205 = pnand %p203, %p204
    %p206 = pneg %p205
    // Predicated region
    $region33: #{fwd.13} parent=5 // pred_check
      _
    $region34: #{fwd.13} parent=5 // pred_check_branch
      %208 = sbr.rel (%p205) target = $region36
    $region35: #{fwd.13} parent=5 // pred_region
      %s209 = ssub.s32 %s12, 1
      %p210 = scmp.lt.s32.totalorder %s17, 5
      %s211 = scalar_select %p210, %s17, 5
      %s212 = smul.addr %s211, 2
      %s213 = scalar_lea.vmem %s0, %s212
      %p214 = pneg %p38
      %p215 = pneg %p35
      %s216 = ssub.s32 5, %s17
      %p217 = scmp.lt.s32.totalorder %s216, 5
      %s218 = scalar_select %p217, %s216, 5
      %s219 = smul.addr %s218, 2
      %s220 = scalar_lea.vmem %s1, %s219
      %p221 = pneg %p66
      %p222 = pneg %p63
      %p223 = pneg %p87
      %p224 = pneg %p84
      %p225 = pneg %p108
      %p226 = pneg %p105
      %p227 = pneg %p134
      %p228 = pneg %p131
      %p229 = scmp.lt.s32.totalorder %s17, 5
      %s230 = scalar_select %p229, %s17, 5
      %s231 = smul.addr %s230, 2
      %s232 = scalar_lea.vmem %s4, %s231
      %p233 = pneg %p162
      %p234 = pneg %p159
      %s235 = ssub.s32 5, %s17
      %p236 = scmp.lt.s32.totalorder %s235, 5
      %s237 = scalar_select %p236, %s235, 5
      %s238 = smul.addr %s237, 2
      %s239 = scalar_lea.vmem %s5, %s238
      %p240 = scmp.lt.s32.totalorder %s17, 5
      %s241 = scalar_select %p240, %s17, 5
      %s242 = smul.addr %s241, 2
      %s243 = scalar_lea.vmem %s0, %s242
      %s244 = ssub.s32 5, %s17
      %p245 = scmp.lt.s32.totalorder %s244, 5
      %s246 = scalar_select %p245, %s244, 5
      %s247 = smul.addr %s246, 2
      %s248 = scalar_lea.vmem %s1, %s247
      %s249 = ssub.s32 5, %s17
      %p250 = scmp.lt.s32.totalorder %s17, 5
      %s251 = scalar_select %p250, %s17, 5
      %s252 = smul.addr %s251, 2
      %s253 = scalar_lea.vmem %s4, %s252
      %s254 = ssub.s32 5, %s17
      %p255 = scmp.lt.s32.totalorder %s254, 5
      %s256 = scalar_select %p255, %s254, 5
      %s257 = smul.addr %s256, 2
      %s258 = scalar_lea.vmem %s5, %s257
      %s259 = ssub.s32 5, %s17
      %p260 = scmp.eq.s32.totalorder %s17, 0
      // Predicated region
      $region37: #{fwd.13} parent=35 // pred_check
        %p261 = pneg %p260
      $region38: #{fwd.13} parent=35 // pred_check_branch
        %263 = sbr.rel (%p261) target = $region40
      $region39: #{fwd.13} parent=35 // pred_region
        %vm264 = vcmask 254976
        %265 = vst.msk [vmem:[#allocation2] sm:$0x3] %vm264, 0.0
      $region40: #{fwd.13} parent=35 // pred_fallthru
        _
      %v266 = vld [vmem:[#allocation2] sm:$0x3]
      %v267 = vld [vmem:[%s2] sm:$0xff]
      %v268 = vld [vmem:[%s2 + $0x8] sm:$0xff]
      %v269 = vld [vmem:[%s2 + $0x10] sm:$0xff]
      %v270 = vld [vmem:[%s2 + $0x18] sm:$0xff]
      %v271 = vld [vmem:[%s3] sm:$0x1]
      %v273 = vlaneseq
      %v274 = vshrl.u32 %v273, 7
      %v275 = vsub.s32 0, %v274
      %v276 = vrot.slane %v271, %v275
      %vm278 = vcmask 261120
      %v280 = vsel %vm278, %v266, 0
      %282 = vmatprep.subr.mxu0 0.0
      %283 = vmatpush1.msra.mxu0 %v267
      %284 = vmatprep.subr.mxu0 0.0
      %285 = vmatpush1.msra.mxu0 %v268
      %286 = vmatprep.subr.mxu0 0.0
      %287 = vmatpush1.msra.mxu0 %v269
      %288 = vmatprep.subr.mxu0 0.0
      %289 = vmatpush1.msra.mxu0 %v270
      %290 = vmatprep.subr.mxu0 0.0
      %291 = vmatpush1.msra.mxu0 0.0
      %292 = vmatprep.subr.mxu0 0.0
      %293 = vmatpush1.msra.mxu0 0.0
      %294 = vmatprep.subr.mxu0 0.0
      %295 = vmatpush1.msra.mxu0 0.0
      %296 = vmatprep.subr.mxu0 0.0
      %297 = vmatpush1.msra.mxu0 0.0
      %298 = vmatprep.subr.mxu0 0.0
      %299 = vmatpush1.msra.mxu0 0.0
      %300 = vmatprep.subr.mxu0 0.0
      %301 = vmatpush1.msra.mxu0 0.0
      %302 = vmatprep.subr.mxu0 0.0
      %303 = vmatpush1.msra.mxu0 0.0
      %304 = vmatprep.subr.mxu0 0.0
      %305 = vmatpush1.msra.mxu0 0.0
      %306 = vmatprep.subr.mxu0 0.0
      %307 = vmatpush1.msra.mxu0 0.0
      %308 = vmatprep.subr.mxu0 0.0
      %309 = vmatpush1.msra.mxu0 0.0
      %310 = vmatprep.subr.mxu0 0.0
      %311 = vmatpush1.msra.mxu0 0.0
      %312 = vmatprep.subr.mxu0 0.0
      %313 = vmatpush1.msra.mxu0 0.0
      %314 = vmatprep.subr.mxu0 0.0
      %315 = vmatpush1.msra.mxu0 0.0
      %316 = vmatprep.subr.mxu0 0.0
      %317 = vmatpush1.msra.mxu0 0.0
      %318 = vmatprep.subr.mxu0 0.0
      %319 = vmatpush1.msra.mxu0 0.0
      %320 = vmatprep.subr.mxu0 0.0
      %321 = vmatpush1.msra.mxu0 0.0
      %322 = vmatprep.subr.mxu0 0.0
      %323 = vmatpush1.msra.mxu0 0.0
      %324 = vmatprep.subr.mxu0 0.0
      %325 = vmatpush1.msra.mxu0 0.0
      %326 = vmatprep.subr.mxu0 0.0
      %327 = vmatpush1.msra.mxu0 0.0
      %328 = vmatprep.subr.mxu0 0.0
      %329 = vmatpush1.msra.mxu0 0.0
      %330 = vmatprep.subr.mxu0 0.0
      %331 = vmatpush1.msra.mxu0 0.0
      %332 = vmatprep.subr.mxu0 0.0
      %333 = vmatpush1.msra.mxu0 0.0
      %334 = vmatprep.subr.mxu0 0.0
      %335 = vmatpush1.msra.mxu0 0.0
      %336 = vmatprep.subr.mxu0 0.0
      %337 = vmatpush1.msra.mxu0 0.0
      %338 = vmatprep.subr.mxu0 0.0
      %339 = vmatpush1.msra.mxu0 0.0
      %340 = vmatprep.subr.mxu0 0.0
      %341 = vmatpush1.msra.mxu0 0.0
      %342 = vmatprep.subr.mxu0 0.0
      %343 = vmatpush1.msra.mxu0 0.0
      %344 = vmatprep.subr.mxu0 0.0
      %345 = vmatpush1.msra.mxu0 0.0
      %346 = vmatprep.mubr.f32.mxu0 0.0
      %347 = vmatmul.mubr.f32.gmra.mrb[0].mxu0 %v280
      %v348 = vpop.f32.mrb[0].mxu0
      %v349 = vadd.f32 %v276, %v348
      %v350 = vpop.f32.mrb[0].mxu0
      %351 = vdwg.mxu0
      %v352 = vld [vmem:[%s243] sm:$0x3]
      %v353 = vld [vmem:[%s248] sm:$0x3]
      %v354 = vadd.f32 %v352, %v349
      %v355 = vxor.u32 %v354, 2147483648
      %v356 = vmul.f32 %v355, 1.442695
      %v357 = vpow.pop %v356
      %v358 = vadd.f32 %v357, 1.0
      %v359 = vrcp.pop %v358
      %v360 = vmul.f32 1.0, %v359
      %362 = vrot.lane.b32.xlu0 %v349, 96
      %v363 = vpop.permute.xlu0 %362
      %v365 = vmul.f32 %v360, %v363
      %367 = vrot.lane.b32.xlu0 %v365, 32
      %v368 = vpop.permute.xlu0 %367
      %v370 = vadd.f32 %v352, %v368
      %v371 = vtanh.pop %v370
      %372 = vrot.lane.b32.xlu0 %v349, 80
      %v373 = vpop.permute.xlu0 %372
      %v375 = vadd.f32 %v353, %v373
      %v376 = vxor.u32 %v375, 2147483648
      %v377 = vmul.f32 %v376, 1.442695
      %v378 = vpow.pop %v377
      %v379 = vadd.f32 %v378, 1.0
      %v380 = vrcp.pop %v379
      %v381 = vmul.f32 1.0, %v380
      %382 = vrot.lane.b32.xlu0 %v349, 48
      %v383 = vpop.permute.xlu0 %382
      %v385 = vmul.f32 %v381, %v383
      %387 = vrot.lane.b32.xlu0 %v385, 32
      %v388 = vpop.permute.xlu0 %387
      %v390 = vadd.f32 %v353, %v388
      %v391 = vtanh.pop %v390
      %v392 = vsub.f32 1.0, %v360
      %394 = vrot.lane.b32.xlu0 %v371, 112
      %v395 = vpop.permute.xlu0 %394
      %v397 = vmul.f32 %v392, %v395
      %398 = vrot.lane.b32.xlu0 %v266, 16
      %v399 = vpop.permute.xlu0 %398
      %v401 = vmul.f32 %v360, %v399
      %v402 = vadd.f32 %v397, %v401
      %v403 = vsub.f32 1.0, %v381
      %405 = vrot.lane.b32.xlu0 %v391, 112
      %v406 = vpop.permute.xlu0 %405
      %v408 = vmul.f32 %v403, %v406
      %v409 = vmul.f32 %v381, %v266
      %v410 = vadd.f32 %v408, %v409
      %412 = vrot.lane.b32.xlu0 %v402, 112
      %v413 = vpop.permute.xlu0 %412
      %vm415 = vcmask 130048
      %v416 = vsel %vm415, %v413, %v410
      %vm417 = vcmask 254976
      %418 = vst.msk [vmem:[#allocation2] sm:$0x3] %vm417, %v416
      %vm419 = vcmask 123904
      %420 = vst.msk [vmem:[%s253] sm:$0x3] %vm419, %v413
      %422 = vrot.lane.b32.xlu0 %v410, 112
      %v423 = vpop.permute.xlu0 %422
      %425 = vst.msk [vmem:[%s258] sm:$0x3] %vm419, %v423
      %p426 = scmp.lt.s32.totalorder %s17, 5
      %s427 = scalar_select %p426, %s17, 5
      %s428 = smul.addr %s427, 2
      %s429 = scalar_lea.vmem %s4, %s428
      %s430 = ssub.s32 5, %s17
      %p431 = scmp.lt.s32.totalorder %s430, 5
      %s432 = scalar_select %p431, %s430, 5
      %s433 = smul.addr %s432, 2
      %s434 = scalar_lea.vmem %s5, %s433
      // Predicated region
      $region41: #{fwd.13} parent=35 // pred_check
        %p435 = pneg %p131
      $region42: #{fwd.13} parent=35 // pred_check_branch
        %437 = sbr.rel (%p435) target = $region44
      $region43: #{fwd.13} parent=35 // pred_region
        _
      $region44: #{fwd.13} parent=35 // pred_fallthru
        _
      // Predicated region
      $region45: #{fwd.13} parent=35 // pred_check
        %p438 = pneg %p159
      $region46: #{fwd.13} parent=35 // pred_check_branch
        %440 = sbr.rel (%p438) target = $region48
      $region47: #{fwd.13} parent=35 // pred_region
        %s441 = ssub.s32 5, %s17
      $region48: #{fwd.13} parent=35 // pred_fallthru
        _
    $region36: #{fwd.13} parent=5 // pred_fallthru
      _
    %p442 = scmp.le.s32.totalorder 2, %s12
    // Predicated region
    $region49: #{fwd.13} parent=5 // pred_check
      %p443 = pneg %p442
    $region50: #{fwd.13} parent=5 // pred_check_branch
      %445 = sbr.rel (%p443) target = $region52
    $region51: #{fwd.13} parent=5 // pred_region
      %s446 = ssub.s32 %s12, 2
      // Predicated region
      $region53: #{fwd.13} parent=51 // pred_check
        %p447 = pneg %p137
      $region54: #{fwd.13} parent=51 // pred_check_branch
        %449 = sbr.rel (%p447) target = $region56
      $region55: #{fwd.13} parent=51 // pred_region
        %p450 = scmp.lt.s32.totalorder %s18, 5
        %s451 = scalar_select %p450, %s18, 5
        %s452 = smul.addr %s451, 2
        %s453 = scalar_lea.vmem %s4, %s452
      $region56: #{fwd.13} parent=51 // pred_fallthru
        _
      // Predicated region
      $region57: #{fwd.13} parent=51 // pred_check
        %p454 = pneg %p165
      $region58: #{fwd.13} parent=51 // pred_check_branch
        %456 = sbr.rel (%p454) target = $region60
      $region59: #{fwd.13} parent=51 // pred_region
        %s457 = ssub.s32 5, %s18
        %p458 = scmp.lt.s32.totalorder %s457, 5
        %s459 = scalar_select %p458, %s457, 5
        %s460 = smul.addr %s459, 2
        %s461 = scalar_lea.vmem %s5, %s460
      $region60: #{fwd.13} parent=51 // pred_fallthru
        _
    $region52: #{fwd.13} parent=5 // pred_fallthru
      _
  $region6: #{fwd.13} parent=0 // loop_footer
    %s16 = sadd.s32 1, %s12
  $region7: #{fwd.13} parent=0 // loop_footer_branch
    %11 = sbr.rel target = $region3
  $region8: #{fwd.13} parent=0 // loop_exit
    _

// kernel: fwd.8
$region0: #{fwd.8}
  #allocation0 [shape = 'u32[]', space=smem, size = 0x4, offset = 0x4, fixed_abs, tag = 'smem constant byte address 0x4 - core index']
  #allocation1 [shape = 'u32[144,128]{1,0:T(1,128)}', space=vmem, size = 0x12000, scoped, tag = 'internal scratch']
  %s0 = inlined_call_operand.vmem [shape: f32[2,8,32], index: 0, kind: input, shape index: {}]
  %s1 = inlined_call_operand.vmem [shape: f32[1,32], index: 1, kind: input, shape index: {}]
  %s2 = inlined_call_operand.vmem [shape: f32[32,8], index: 2, kind: input, shape index: {}]
  %s3 = inlined_call_operand.vmem [shape: f32[8,32], index: 3, kind: input, shape index: {}]
  %s4 = inlined_call_operand.vmem [shape: f32[32,32], index: 4, kind: input, shape index: {}]
  %s5 = inlined_call_operand.vmem [shape: f32[1,32], index: 5, kind: input, shape index: {}]
  %s6 = inlined_call_operand.vmem [shape: f32[32,64], index: 6, kind: input, shape index: {}]
  %s7 = inlined_call_operand.vmem [shape: f32[1,64], index: 7, kind: input, shape index: {}]
  %s8 = inlined_call_operand.vmem [shape: f32[32,32], index: 8, kind: input, shape index: {}]
  %s9 = inlined_call_operand.vmem [shape: f32[1,32], index: 9, kind: input, shape index: {}]
  %s10 = inlined_call_operand.vmem [shape: f32[1,32], index: 10, kind: input, shape index: {}]
  %s11 = inlined_call_operand.vmem [shape: f32[2,8,32], index: 11, kind: output, shape index: {}]
  %s12 = sld [smem:[#allocation0]]
  $region54: #{fwd.8} parent=0
    _
  %s14 = ssub.s32 1, %s12
  %s15 = scalar_select 0, %s14, %s12
  // Predicated region
  $region2: #{fwd.8} parent=0 // pred_check
    _
  $region3: #{fwd.8} parent=0 // pred_check_branch
    %17 = sbr.rel (0) target = $region5
  $region4: #{fwd.8} parent=0 // pred_region
    _
  $region5: #{fwd.8} parent=0 // pred_fallthru
    _
  // Predicated region
  $region6: #{fwd.8} parent=0 // pred_check
    _
  $region7: #{fwd.8} parent=0 // pred_check_branch
    %19 = sbr.rel (0) target = $region9
  $region8: #{fwd.8} parent=0 // pred_region
    _
  $region9: #{fwd.8} parent=0 // pred_fallthru
    _
  // Predicated region
  $region10: #{fwd.8} parent=0 // pred_check
    _
  $region11: #{fwd.8} parent=0 // pred_check_branch
    %21 = sbr.rel (0) target = $region13
  $region12: #{fwd.8} parent=0 // pred_region
    _
  $region13: #{fwd.8} parent=0 // pred_fallthru
    _
  // Predicated region
  $region14: #{fwd.8} parent=0 // pred_check
    _
  $region15: #{fwd.8} parent=0 // pred_check_branch
    %23 = sbr.rel (0) target = $region17
  $region16: #{fwd.8} parent=0 // pred_region
    _
  $region17: #{fwd.8} parent=0 // pred_fallthru
    _
  // Predicated region
  $region18: #{fwd.8} parent=0 // pred_check
    _
  $region19: #{fwd.8} parent=0 // pred_check_branch
    %25 = sbr.rel (0) target = $region21
  $region20: #{fwd.8} parent=0 // pred_region
    _
  $region21: #{fwd.8} parent=0 // pred_fallthru
    _
  // Predicated region
  $region22: #{fwd.8} parent=0 // pred_check
    _
  $region23: #{fwd.8} parent=0 // pred_check_branch
    %27 = sbr.rel (0) target = $region25
  $region24: #{fwd.8} parent=0 // pred_region
    _
  $region25: #{fwd.8} parent=0 // pred_fallthru
    _
  // Predicated region
  $region26: #{fwd.8} parent=0 // pred_check
    _
  $region27: #{fwd.8} parent=0 // pred_check_branch
    %29 = sbr.rel (0) target = $region29
  $region28: #{fwd.8} parent=0 // pred_region
    _
  $region29: #{fwd.8} parent=0 // pred_fallthru
    _
  // Predicated region
  $region30: #{fwd.8} parent=0 // pred_check
    _
  $region31: #{fwd.8} parent=0 // pred_check_branch
    %31 = sbr.rel (0) target = $region33
  $region32: #{fwd.8} parent=0 // pred_region
    _
  $region33: #{fwd.8} parent=0 // pred_fallthru
    _
  // Predicated region
  $region34: #{fwd.8} parent=0 // pred_check
    _
  $region35: #{fwd.8} parent=0 // pred_check_branch
    %33 = sbr.rel (0) target = $region37
  $region36: #{fwd.8} parent=0 // pred_region
    _
  $region37: #{fwd.8} parent=0 // pred_fallthru
    _
  // Predicated region
  $region38: #{fwd.8} parent=0 // pred_check
    _
  $region39: #{fwd.8} parent=0 // pred_check_branch
    %35 = sbr.rel (0) target = $region41
  $region40: #{fwd.8} parent=0 // pred_region
    _
  $region41: #{fwd.8} parent=0 // pred_fallthru
    _
  // Predicated region
  $region42: #{fwd.8} parent=0 // pred_check
    _
  $region43: #{fwd.8} parent=0 // pred_check_branch
    %37 = sbr.rel (0) target = $region45
  $region44: #{fwd.8} parent=0 // pred_region
    _
  $region45: #{fwd.8} parent=0 // pred_fallthru
    _
  %v39 = vld [vmem:[%s0] sm:$0xff]
  %v40 = vld [vmem:[%s0 + $0x8] sm:$0xff]
  %v41 = vld [vmem:[%s1] sm:$0x1]
  %v43 = vlaneseq
  %v44 = vshrl.u32 %v43, 7
  %v45 = vsub.s32 0, %v44
  %v46 = vrot.slane %v41, %v45
  %v48 = vmul.f32 %v39, %v46
  %v49 = vmul.f32 %v40, %v46
  %vm50 = vcmask 261120
  %v51 = vsel %vm50, %v48, 0.0
  %v52 = vsel %vm50, %v49, 0.0
  %v53 = vadd.f32 %v51, %v52
  %vm54 = vcmask 253952
  %v55 = vsel %vm54, %v41, 0.0
  %56 = vadd.xlane.f32.xlu0 %v55
  %v57 = vpop.xlane.xlu0 %56
  %v58 = vrot.slane %v57, 4
  %v59 = vadd.f32 %v57, %v58
  %v60 = vrot.slane %v59, 2
  %v61 = vadd.f32 %v59, %v60
  %v62 = vrot.slane %v61, 1
  %v63 = vadd.f32 %v61, %v62
  %s64 = vtos %v63
  %v65 = vstv %s64
  %v66 = vrcp.pop %v65
  %v67 = vmul.f32 %v53, %v66
  %v68 = vld [vmem:[%s4] sm:$0xff]
  %v69 = vld [vmem:[%s4 + $0x8] sm:$0xff]
  %v70 = vld [vmem:[%s4 + $0x10] sm:$0xff]
  %v71 = vld [vmem:[%s4 + $0x18] sm:$0xff]
  %v72 = vpack.c.bf16 %v67, %v67
  %v73 = vpack.c.bf16 %v69, %v68
  %v74 = vpack.c.bf16 %v71, %v70
  %v75 = vld [vmem:[%s5] sm:$0x1]
  %v77 = vlaneseq
  %v78 = vshrl.u32 %v77, 7
  %v79 = vsub.s32 0, %v78
  %v80 = vrot.slane %v75, %v79
  %v83 = vsel %vm50, %v72, 0
  %85 = vmatprep.subr.bf16.mxu0 0
  %86 = vmatpush1.bf16.msra.mxu0 %v73
  %87 = vmatprep.subr.bf16.mxu0 0
  %88 = vmatpush1.bf16.msra.mxu0 %v74
  %89 = vmatprep.subr.bf16.mxu0 0
  %90 = vmatpush1.bf16.msra.mxu0 0
  %91 = vmatprep.subr.bf16.mxu0 0
  %92 = vmatpush1.bf16.msra.mxu0 0
  %93 = vmatprep.subr.bf16.mxu0 0
  %94 = vmatpush1.bf16.msra.mxu0 0
  %95 = vmatprep.subr.bf16.mxu0 0
  %96 = vmatpush1.bf16.msra.mxu0 0
  %97 = vmatprep.subr.bf16.mxu0 0
  %98 = vmatpush1.bf16.msra.mxu0 0
  %99 = vmatprep.subr.bf16.mxu0 0
  %100 = vmatpush1.bf16.msra.mxu0 0
  %101 = vmatprep.subr.bf16.mxu0 0
  %102 = vmatpush1.bf16.msra.mxu0 0
  %103 = vmatprep.subr.bf16.mxu0 0
  %104 = vmatpush1.bf16.msra.mxu0 0
  %105 = vmatprep.subr.bf16.mxu0 0
  %106 = vmatpush1.bf16.msra.mxu0 0
  %107 = vmatprep.subr.bf16.mxu0 0
  %108 = vmatpush1.bf16.msra.mxu0 0
  %109 = vmatprep.subr.bf16.mxu0 0
  %110 = vmatpush1.bf16.msra.mxu0 0
  %111 = vmatprep.subr.bf16.mxu0 0
  %112 = vmatpush1.bf16.msra.mxu0 0
  %113 = vmatprep.subr.bf16.mxu0 0
  %114 = vmatpush1.bf16.msra.mxu0 0
  %115 = vmatprep.subr.bf16.mxu0 0
  %116 = vmatpush1.bf16.msra.mxu0 0
  %117 = vmatprep.mubr.bf16.mxu0 0
  %118 = vmatmul.mubr.bf16.gmra.mrb[0].mxu0 %v83
  %v119 = vpop.f32.mrb[0].mxu0
  %v120 = vadd.f32 %v80, %v119
  %v121 = vpop.f32.mrb[0].mxu0
  %v122 = vpop.f32.mrb[0].mxu0
  %v123 = vpop.f32.mrb[0].mxu0
  %124 = vdwg.mxu0
  %v125 = vld [vmem:[%s6] sm:$0xff]
  %v126 = vld [vmem:[%s6 + $0x8] sm:$0xff]
  %v127 = vld [vmem:[%s6 + $0x10] sm:$0xff]
  %v128 = vld [vmem:[%s6 + $0x18] sm:$0xff]
  %v129 = vpack.c.bf16 %v40, %v39
  %v130 = vpack.c.bf16 %v126, %v125
  %v131 = vpack.c.bf16 %v128, %v127
  %v132 = vld [vmem:[%s7] sm:$0x1]
  %v134 = vlaneseq
  %v135 = vshrl.u32 %v134, 7
  %v136 = vsub.s32 0, %v135
  %v137 = vrot.slane %v132, %v136
  %v140 = vsel %vm50, %v129, 0
  %142 = vmatprep.subr.bf16.mxu0 0
  %143 = vmatpush1.bf16.msra.mxu0 %v130
  %144 = vmatprep.subr.bf16.mxu0 0
  %145 = vmatpush1.bf16.msra.mxu0 %v131
  %146 = vmatprep.subr.bf16.mxu0 0
  %147 = vmatpush1.bf16.msra.mxu0 0
  %148 = vmatprep.subr.bf16.mxu0 0
  %149 = vmatpush1.bf16.msra.mxu0 0
  %150 = vmatprep.subr.bf16.mxu0 0
  %151 = vmatpush1.bf16.msra.mxu0 0
  %152 = vmatprep.subr.bf16.mxu0 0
  %153 = vmatpush1.bf16.msra.mxu0 0
  %154 = vmatprep.subr.bf16.mxu0 0
  %155 = vmatpush1.bf16.msra.mxu0 0
  %156 = vmatprep.subr.bf16.mxu0 0
  %157 = vmatpush1.bf16.msra.mxu0 0
  %158 = vmatprep.subr.bf16.mxu0 0
  %159 = vmatpush1.bf16.msra.mxu0 0
  %160 = vmatprep.subr.bf16.mxu0 0
  %161 = vmatpush1.bf16.msra.mxu0 0
  %162 = vmatprep.subr.bf16.mxu0 0
  %163 = vmatpush1.bf16.msra.mxu0 0
  %164 = vmatprep.subr.bf16.mxu0 0
  %165 = vmatpush1.bf16.msra.mxu0 0
  %166 = vmatprep.subr.bf16.mxu0 0
  %167 = vmatpush1.bf16.msra.mxu0 0
  %168 = vmatprep.subr.bf16.mxu0 0
  %169 = vmatpush1.bf16.msra.mxu0 0
  %170 = vmatprep.subr.bf16.mxu0 0
  %171 = vmatpush1.bf16.msra.mxu0 0
  %172 = vmatprep.subr.bf16.mxu0 0
  %173 = vmatpush1.bf16.msra.mxu0 0
  %174 = vmatprep.mubr.bf16.mxu0 0
  %175 = vmatmul.mubr.bf16.gmra.mrb[0].mxu0 %v140
  %v176 = vpop.f32.mrb[0].mxu0
  %v177 = vadd.f32 %v137, %v176
  %v178 = vpop.f32.mrb[0].mxu0
  %v179 = vpop.f32.mrb[0].mxu0
  %v180 = vadd.f32 %v137, %v179
  %v181 = vpop.f32.mrb[0].mxu0
  %182 = vdwg.mxu0
  %v183 = vld [vmem:[%s2] sm:$0xff]
  %v184 = vld [vmem:[%s2 + $0x8] sm:$0xff]
  %v185 = vld [vmem:[%s2 + $0x10] sm:$0xff]
  %v186 = vld [vmem:[%s2 + $0x18] sm:$0xff]
  %v187 = vld [vmem:[%s3] sm:$0xff]
  %v188 = vmul.f32 %v120, %v177
  %v189 = vmul.f32 %v120, %v180
  %v191 = vsel %vm50, %v188, 0
  %v194 = vsel %vm50, %v189, 0
  %196 = vmatprep.subr.mxu0 0.0
  %197 = vmatpush1.msra.mxu0 %v183
  %198 = vmatprep.subr.mxu0 0.0
  %199 = vmatpush1.msra.mxu0 %v184
  %200 = vmatprep.subr.mxu0 0.0
  %201 = vmatpush1.msra.mxu0 %v185
  %202 = vmatprep.subr.mxu0 0.0
  %203 = vmatpush1.msra.mxu0 %v186
  %204 = vmatprep.subr.mxu0 0.0
  %205 = vmatpush1.msra.mxu0 0.0
  %206 = vmatprep.subr.mxu0 0.0
  %207 = vmatpush1.msra.mxu0 0.0
  %208 = vmatprep.subr.mxu0 0.0
  %209 = vmatpush1.msra.mxu0 0.0
  %210 = vmatprep.subr.mxu0 0.0
  %211 = vmatpush1.msra.mxu0 0.0
  %212 = vmatprep.subr.mxu0 0.0
  %213 = vmatpush1.msra.mxu0 0.0
  %214 = vmatprep.subr.mxu0 0.0
  %215 = vmatpush1.msra.mxu0 0.0
  %216 = vmatprep.subr.mxu0 0.0
  %217 = vmatpush1.msra.mxu0 0.0
  %218 = vmatprep.subr.mxu0 0.0
  %219 = vmatpush1.msra.mxu0 0.0
  %220 = vmatprep.subr.mxu0 0.0
  %221 = vmatpush1.msra.mxu0 0.0
  %222 = vmatprep.subr.mxu0 0.0
  %223 = vmatpush1.msra.mxu0 0.0
  %224 = vmatprep.subr.mxu0 0.0
  %225 = vmatpush1.msra.mxu0 0.0
  %226 = vmatprep.subr.mxu0 0.0
  %227 = vmatpush1.msra.mxu0 0.0
  %228 = vmatprep.subr.mxu0 0.0
  %229 = vmatpush1.msra.mxu0 0.0
  %230 = vmatprep.subr.mxu0 0.0
  %231 = vmatpush1.msra.mxu0 0.0
  %232 = vmatprep.subr.mxu0 0.0
  %233 = vmatpush1.msra.mxu0 0.0
  %234 = vmatprep.subr.mxu0 0.0
  %235 = vmatpush1.msra.mxu0 0.0
  %236 = vmatprep.subr.mxu0 0.0
  %237 = vmatpush1.msra.mxu0 0.0
  %238 = vmatprep.subr.mxu0 0.0
  %239 = vmatpush1.msra.mxu0 0.0
  %240 = vmatprep.subr.mxu0 0.0
  %241 = vmatpush1.msra.mxu0 0.0
  %242 = vmatprep.subr.mxu0 0.0
  %243 = vmatpush1.msra.mxu0 0.0
  %244 = vmatprep.subr.mxu0 0.0
  %245 = vmatpush1.msra.mxu0 0.0
  %246 = vmatprep.subr.mxu0 0.0
  %247 = vmatpush1.msra.mxu0 0.0
  %248 = vmatprep.subr.mxu0 0.0
  %249 = vmatpush1.msra.mxu0 0.0
  %250 = vmatprep.subr.mxu0 0.0
  %251 = vmatpush1.msra.mxu0 0.0
  %252 = vmatprep.subr.mxu0 0.0
  %253 = vmatpush1.msra.mxu0 0.0
  %254 = vmatprep.subr.mxu0 0.0
  %255 = vmatpush1.msra.mxu0 0.0
  %256 = vmatprep.subr.mxu0 0.0
  %257 = vmatpush1.msra.mxu0 0.0
  %258 = vmatprep.subr.mxu0 0.0
  %259 = vmatpush1.msra.mxu0 0.0
  %260 = vmatprep.mubr.f32.mxu0 0.0
  %261 = vmatmul.mubr.f32.gmra.mrb[0].mxu0 %v191
  %v262 = vpop.f32.mrb[0].mxu0
  %v263 = vadd.f32 0.0, %v262
  %v264 = vpop.f32.mrb[0].mxu0
  %265 = vmatprep.mubr.f32.mxu0 0.0
  %266 = vmatmul.mubr.f32.gmra.mrb[0].mxu0 %v194
  %v267 = vpop.f32.mrb[0].mxu0
  %v268 = vadd.f32 0.0, %v267
  %v269 = vpop.f32.mrb[0].mxu0
  %270 = vdwg.mxu0
  %v271 = vmul.f32 %v263, 0.5
  %v272 = vmul.f32 %v268, 0.5
  %vm273 = vcmask 64512
  %v274 = vsel %vm273, %v271, -inf
  %v275 = vsel %vm273, %v272, -inf
  %v276 = vmax.f32 %v274, %v275
  %v277 = vsub.f32 %v271, %v276
  %v278 = vsub.f32 %v272, %v276
  %v279 = vmul.f32 %v277, 1.442695
  %v280 = vpow.pop %v279
  %v281 = vmul.f32 %v278, 1.442695
  %v282 = vpow.pop %v281
  %v283 = vsel %vm273, %v280, 0.0
  %v284 = vsel %vm273, %v282, 0.0
  %v285 = vadd.f32 %v283, %v284
  %v286 = vrcp.pop %v285
  %v287 = vmul.f32 %v280, %v286
  %v288 = vmul.f32 %v282, %v286
  %v290 = vsel %vm273, %v287, 0
  %v293 = vsel %vm273, %v288, 0
  %295 = vmatprep.subr.mxu0 0.0
  %296 = vmatpush1.msra.mxu0 %v187
  %297 = vmatprep.subr.mxu0 0.0
  %298 = vmatpush1.msra.mxu0 0.0
  %299 = vmatprep.subr.mxu0 0.0
  %300 = vmatpush1.msra.mxu0 0.0
  %301 = vmatprep.subr.mxu0 0.0
  %302 = vmatpush1.msra.mxu0 0.0
  %303 = vmatprep.subr.mxu0 0.0
  %304 = vmatpush1.msra.mxu0 0.0
  %305 = vmatprep.subr.mxu0 0.0
  %306 = vmatpush1.msra.mxu0 0.0
  %307 = vmatprep.subr.mxu0 0.0
  %308 = vmatpush1.msra.mxu0 0.0
  %309 = vmatprep.subr.mxu0 0.0
  %310 = vmatpush1.msra.mxu0 0.0
  %311 = vmatprep.subr.mxu0 0.0
  %312 = vmatpush1.msra.mxu0 0.0
  %313 = vmatprep.subr.mxu0 0.0
  %314 = vmatpush1.msra.mxu0 0.0
  %315 = vmatprep.subr.mxu0 0.0
  %316 = vmatpush1.msra.mxu0 0.0
  %317 = vmatprep.subr.mxu0 0.0
  %318 = vmatpush1.msra.mxu0 0.0
  %319 = vmatprep.subr.mxu0 0.0
  %320 = vmatpush1.msra.mxu0 0.0
  %321 = vmatprep.subr.mxu0 0.0
  %322 = vmatpush1.msra.mxu0 0.0
  %323 = vmatprep.subr.mxu0 0.0
  %324 = vmatpush1.msra.mxu0 0.0
  %325 = vmatprep.subr.mxu0 0.0
  %326 = vmatpush1.msra.mxu0 0.0
  %327 = vmatprep.subr.mxu0 0.0
  %328 = vmatpush1.msra.mxu0 0.0
  %329 = vmatprep.subr.mxu0 0.0
  %330 = vmatpush1.msra.mxu0 0.0
  %331 = vmatprep.subr.mxu0 0.0
  %332 = vmatpush1.msra.mxu0 0.0
  %333 = vmatprep.subr.mxu0 0.0
  %334 = vmatpush1.msra.mxu0 0.0
  %335 = vmatprep.subr.mxu0 0.0
  %336 = vmatpush1.msra.mxu0 0.0
  %337 = vmatprep.subr.mxu0 0.0
  %338 = vmatpush1.msra.mxu0 0.0
  %339 = vmatprep.subr.mxu0 0.0
  %340 = vmatpush1.msra.mxu0 0.0
  %341 = vmatprep.subr.mxu0 0.0
  %342 = vmatpush1.msra.mxu0 0.0
  %343 = vmatprep.subr.mxu0 0.0
  %344 = vmatpush1.msra.mxu0 0.0
  %345 = vmatprep.subr.mxu0 0.0
  %346 = vmatpush1.msra.mxu0 0.0
  %347 = vmatprep.subr.mxu0 0.0
  %348 = vmatpush1.msra.mxu0 0.0
  %349 = vmatprep.subr.mxu0 0.0
  %350 = vmatpush1.msra.mxu0 0.0
  %351 = vmatprep.subr.mxu0 0.0
  %352 = vmatpush1.msra.mxu0 0.0
  %353 = vmatprep.subr.mxu0 0.0
  %354 = vmatpush1.msra.mxu0 0.0
  %355 = vmatprep.subr.mxu0 0.0
  %356 = vmatpush1.msra.mxu0 0.0
  %357 = vmatprep.subr.mxu0 0.0
  %358 = vmatpush1.msra.mxu0 0.0
  %359 = vmatprep.mubr.f32.mxu0 0.0
  %360 = vmatmul.mubr.f32.gmra.mrb[0].mxu0 %v290
  %v361 = vpop.f32.mrb[0].mxu0
  %v362 = vadd.f32 0.0, %v361
  %v363 = vpop.f32.mrb[0].mxu0
  %364 = vmatprep.mubr.f32.mxu0 0.0
  %365 = vmatmul.mubr.f32.gmra.mrb[0].mxu0 %v293
  %v366 = vpop.f32.mrb[0].mxu0
  %v367 = vadd.f32 0.0, %v366
  %v368 = vpop.f32.mrb[0].mxu0
  %369 = vdwg.mxu0
  %372 = vrot.lane.b32.xlu0 %v177, 96
  %v373 = vpop.permute.xlu0 %372
  %374 = vrot.lane.b32.xlu0 %v180, 96
  %v375 = vpop.permute.xlu0 %374
  %v378 = vmul.f32 %v362, %v373
  %v379 = vmul.f32 %v367, %v375
  %v380 = vsel %vm50, %v378, 0.0
  %v381 = vsel %vm50, %v379, 0.0
  %v382 = vadd.f32 %v380, %v381
  %v383 = vld [vmem:[%s8] sm:$0xff]
  %v384 = vld [vmem:[%s8 + $0x8] sm:$0xff]
  %v385 = vld [vmem:[%s8 + $0x10] sm:$0xff]
  %v386 = vld [vmem:[%s8 + $0x18] sm:$0xff]
  %v387 = vpack.c.bf16 %v382, %v382
  %v388 = vpack.c.bf16 %v384, %v383
  %v389 = vpack.c.bf16 %v386, %v385
  %v390 = vld [vmem:[%s9] sm:$0x1]
  %v392 = vlaneseq
  %v393 = vshrl.u32 %v392, 7
  %v394 = vsub.s32 0, %v393
  %v395 = vrot.slane %v390, %v394
  %v398 = vsel %vm50, %v387, 0
  %400 = vmatprep.subr.bf16.mxu0 0
  %401 = vmatpush1.bf16.msra.mxu0 %v388
  %402 = vmatprep.subr.bf16.mxu0 0
  %403 = vmatpush1.bf16.msra.mxu0 %v389
  %404 = vmatprep.subr.bf16.mxu0 0
  %405 = vmatpush1.bf16.msra.mxu0 0
  %406 = vmatprep.subr.bf16.mxu0 0
  %407 = vmatpush1.bf16.msra.mxu0 0
  %408 = vmatprep.subr.bf16.mxu0 0
  %409 = vmatpush1.bf16.msra.mxu0 0
  %410 = vmatprep.subr.bf16.mxu0 0
  %411 = vmatpush1.bf16.msra.mxu0 0
  %412 = vmatprep.subr.bf16.mxu0 0
  %413 = vmatpush1.bf16.msra.mxu0 0
  %414 = vmatprep.subr.bf16.mxu0 0
  %415 = vmatpush1.bf16.msra.mxu0 0
  %416 = vmatprep.subr.bf16.mxu0 0
  %417 = vmatpush1.bf16.msra.mxu0 0
  %418 = vmatprep.subr.bf16.mxu0 0
  %419 = vmatpush1.bf16.msra.mxu0 0
  %420 = vmatprep.subr.bf16.mxu0 0
  %421 = vmatpush1.bf16.msra.mxu0 0
  %422 = vmatprep.subr.bf16.mxu0 0
  %423 = vmatpush1.bf16.msra.mxu0 0
  %424 = vmatprep.subr.bf16.mxu0 0
  %425 = vmatpush1.bf16.msra.mxu0 0
  %426 = vmatprep.subr.bf16.mxu0 0
  %427 = vmatpush1.bf16.msra.mxu0 0
  %428 = vmatprep.subr.bf16.mxu0 0
  %429 = vmatpush1.bf16.msra.mxu0 0
  %430 = vmatprep.subr.bf16.mxu0 0
  %431 = vmatpush1.bf16.msra.mxu0 0
  %432 = vmatprep.mubr.bf16.mxu0 0
  %433 = vmatmul.mubr.bf16.gmra.mrb[0].mxu0 %v398
  %v434 = vpop.f32.mrb[0].mxu0
  %v435 = vadd.f32 %v395, %v434
  %v436 = vpop.f32.mrb[0].mxu0
  %v437 = vpop.f32.mrb[0].mxu0
  %v438 = vpop.f32.mrb[0].mxu0
  %439 = vdwg.mxu0
  %v440 = vadd.f32 %v435, %v39
  %v441 = vadd.f32 %v435, %v40
  %v442 = vld [vmem:[%s10] sm:$0x1]
  %v443 = vmul.f32 %v440, %v440
  %v444 = vmul.f32 %v441, %v441
  %v445 = vsel %vm50, %v443, 0.0
  %446 = vadd.xlane.f32.xlu0 %v445
  %v447 = vpop.xlane.xlu0 %446
  %v448 = vsel %vm50, %v444, 0.0
  %449 = vadd.xlane.f32.xlu0 %v448
  %v450 = vpop.xlane.xlu0 %449
  %v451 = vrcp.pop 32.0
  %v452 = vmul.f32 %v447, %v451
  %v453 = vmul.f32 %v450, %v451
  %v454 = vadd.f32 %v452, 1e-08
  %v455 = vadd.f32 %v453, 1e-08
  %v456 = vrsqrt.pop %v454
  %v457 = vrsqrt.pop %v455
  %v458 = vmul.f32 %v440, %v456
  %v459 = vmul.f32 %v441, %v457
  %v461 = vlaneseq
  %v462 = vshrl.u32 %v461, 7
  %v463 = vsub.s32 0, %v462
  %v464 = vrot.slane %v442, %v463
  %v466 = vmul.f32 %v464, %v458
  %v467 = vmul.f32 %v464, %v459
  %v468 = vadd.f32 %v39, %v466
  %v469 = vadd.f32 %v40, %v467
  %470 = vst.msk [vmem:[%s11] sm:$0xff] %vm50, %v468
  %471 = vst.msk [vmem:[%s11 + $0x8] sm:$0xff] %vm50, %v469
  // Predicated region
  $region46: #{fwd.8} parent=0 // pred_check
    _
  $region47: #{fwd.8} parent=0 // pred_check_branch
    %473 = sbr.rel (0) target = $region49
  $region48: #{fwd.8} parent=0 // pred_region
    _
  $region49: #{fwd.8} parent=0 // pred_fallthru
    _
  // Predicated region
  $region50: #{fwd.8} parent=0 // pred_check
    _
  $region51: #{fwd.8} parent=0 // pred_check_branch
    %475 = sbr.rel (0) target = $region53
  $region52: #{fwd.8} parent=0 // pred_region
    _
  $region53: #{fwd.8} parent=0 // pred_fallthru
    _

// kernel: fwd.15
$region0: #{fwd.15}
  #allocation0 [shape = 'u32[]', space=smem, size = 0x4, offset = 0x4, fixed_abs, tag = 'smem constant byte address 0x4 - core index']
  #allocation1 [shape = 'u32[144,128]{1,0:T(1,128)}', space=vmem, size = 0x12000, scoped, tag = 'internal scratch']
  %s0 = inlined_call_operand.vmem [shape: f32[2,8,32], index: 0, kind: input, shape index: {}]
  %s1 = inlined_call_operand.vmem [shape: f32[2,8,32], index: 1, kind: input, shape index: {}]
  %s2 = inlined_call_operand.vmem [shape: f32[2,8,32], index: 2, kind: input, shape index: {}]
  %s3 = inlined_call_operand.vmem [shape: f32[2,6,32], index: 3, kind: input, shape index: {}]
  %s4 = inlined_call_operand.vmem [shape: f32[32,32], index: 4, kind: input, shape index: {}]
  %s5 = inlined_call_operand.vmem [shape: f32[1,32], index: 5, kind: input, shape index: {}]
  %s6 = inlined_call_operand.vmem [shape: f32[32,64], index: 6, kind: input, shape index: {}]
  %s7 = inlined_call_operand.vmem [shape: f32[1,64], index: 7, kind: input, shape index: {}]
  %s8 = inlined_call_operand.vmem [shape: f32[32,32], index: 8, kind: input, shape index: {}]
  %s9 = inlined_call_operand.vmem [shape: f32[1,32], index: 9, kind: input, shape index: {}]
  %s10 = inlined_call_operand.vmem [shape: f32[1,32], index: 10, kind: input, shape index: {}]
  %s11 = inlined_call_operand.vmem [shape: f32[32,32], index: 11, kind: input, shape index: {}]
  %s12 = inlined_call_operand.vmem [shape: f32[32,32], index: 12, kind: input, shape index: {}]
  %s13 = inlined_call_operand.vmem [shape: f32[1,32], index: 13, kind: input, shape index: {}]
  %s14 = inlined_call_operand.vmem [shape: f32[1,32], index: 14, kind: input, shape index: {}]
  %s15 = inlined_call_operand.hbm [shape: f32[2,8,32], index: 15, kind: output, shape index: {}]
  %s16 = sld [smem:[#allocation0]]
  $region70: #{fwd.15} parent=0
    _
  %s18 = ssub.s32 1, %s16
  %s19 = scalar_select 0, %s18, %s16
  $region1: #{fwd.15} parent=0
    #allocation2 [shape = 'u8[8192]{0}', space=vmem, size = 0x2000, scoped, tag = 'output window, operand 0, single buffered']
    #allocation3 [shape = 's32[1]{0}', space=sflag, size = 0x4, scoped, tag = 'scoped memory for fwd.15']
    %20 = vsyncpa [#allocation3], 0
    // Predicated region
    $region2: #{fwd.15} parent=1 // pred_check
      _
    $region3: #{fwd.15} parent=1 // pred_check_branch
      %22 = sbr.rel (0) target = $region5
    $region4: #{fwd.15} parent=1 // pred_region
      _
    $region5: #{fwd.15} parent=1 // pred_fallthru
      _
    // Predicated region
    $region6: #{fwd.15} parent=1 // pred_check
      _
    $region7: #{fwd.15} parent=1 // pred_check_branch
      %24 = sbr.rel (0) target = $region9
    $region8: #{fwd.15} parent=1 // pred_region
      _
    $region9: #{fwd.15} parent=1 // pred_fallthru
      _
    // Predicated region
    $region10: #{fwd.15} parent=1 // pred_check
      _
    $region11: #{fwd.15} parent=1 // pred_check_branch
      %26 = sbr.rel (0) target = $region13
    $region12: #{fwd.15} parent=1 // pred_region
      _
    $region13: #{fwd.15} parent=1 // pred_fallthru
      _
    // Predicated region
    $region14: #{fwd.15} parent=1 // pred_check
      _
    $region15: #{fwd.15} parent=1 // pred_check_branch
      %28 = sbr.rel (0) target = $region17
    $region16: #{fwd.15} parent=1 // pred_region
      _
    $region17: #{fwd.15} parent=1 // pred_fallthru
      _
    // Predicated region
    $region18: #{fwd.15} parent=1 // pred_check
      _
    $region19: #{fwd.15} parent=1 // pred_check_branch
      %30 = sbr.rel (0) target = $region21
    $region20: #{fwd.15} parent=1 // pred_region
      _
    $region21: #{fwd.15} parent=1 // pred_fallthru
      _
    // Predicated region
    $region22: #{fwd.15} parent=1 // pred_check
      _
    $region23: #{fwd.15} parent=1 // pred_check_branch
      %32 = sbr.rel (0) target = $region25
    $region24: #{fwd.15} parent=1 // pred_region
      _
    $region25: #{fwd.15} parent=1 // pred_fallthru
      _
    // Predicated region
    $region26: #{fwd.15} parent=1 // pred_check
      _
    $region27: #{fwd.15} parent=1 // pred_check_branch
      %34 = sbr.rel (0) target = $region29
    $region28: #{fwd.15} parent=1 // pred_region
      _
    $region29: #{fwd.15} parent=1 // pred_fallthru
      _
    // Predicated region
    $region30: #{fwd.15} parent=1 // pred_check
      _
    $region31: #{fwd.15} parent=1 // pred_check_branch
      %36 = sbr.rel (0) target = $region33
    $region32: #{fwd.15} parent=1 // pred_region
      _
    $region33: #{fwd.15} parent=1 // pred_fallthru
      _
    // Predicated region
    $region34: #{fwd.15} parent=1 // pred_check
      _
    $region35: #{fwd.15} parent=1 // pred_check_branch
      %38 = sbr.rel (0) target = $region37
    $region36: #{fwd.15} parent=1 // pred_region
      _
    $region37: #{fwd.15} parent=1 // pred_fallthru
      _
    // Predicated region
    $region38: #{fwd.15} parent=1 // pred_check
      _
    $region39: #{fwd.15} parent=1 // pred_check_branch
      %40 = sbr.rel (0) target = $region41
    $region40: #{fwd.15} parent=1 // pred_region
      _
    $region41: #{fwd.15} parent=1 // pred_fallthru
      _
    // Predicated region
    $region42: #{fwd.15} parent=1 // pred_check
      _
    $region43: #{fwd.15} parent=1 // pred_check_branch
      %42 = sbr.rel (0) target = $region45
    $region44: #{fwd.15} parent=1 // pred_region
      _
    $region45: #{fwd.15} parent=1 // pred_fallthru
      _
    // Predicated region
    $region46: #{fwd.15} parent=1 // pred_check
      _
    $region47: #{fwd.15} parent=1 // pred_check_branch
      %44 = sbr.rel (0) target = $region49
    $region48: #{fwd.15} parent=1 // pred_region
      _
    $region49: #{fwd.15} parent=1 // pred_fallthru
      _
    // Predicated region
    $region50: #{fwd.15} parent=1 // pred_check
      _
    $region51: #{fwd.15} parent=1 // pred_check_branch
      %46 = sbr.rel (0) target = $region53
    $region52: #{fwd.15} parent=1 // pred_region
      _
    $region53: #{fwd.15} parent=1 // pred_fallthru
      _
    // Predicated region
    $region54: #{fwd.15} parent=1 // pred_check
      _
    $region55: #{fwd.15} parent=1 // pred_check_branch
      %48 = sbr.rel (0) target = $region57
    $region56: #{fwd.15} parent=1 // pred_region
      _
    $region57: #{fwd.15} parent=1 // pred_fallthru
      _
    // Predicated region
    $region58: #{fwd.15} parent=1 // pred_check
      _
    $region59: #{fwd.15} parent=1 // pred_check_branch
      %50 = sbr.rel (0) target = $region61
    $region60: #{fwd.15} parent=1 // pred_region
      _
    $region61: #{fwd.15} parent=1 // pred_fallthru
      _
    %v52 = vld [vmem:[%s0] sm:$0xff]
    %v53 = vld [vmem:[%s0 + $0x8] sm:$0xff]
    %v54 = vld [vmem:[%s4] sm:$0xff]
    %v55 = vld [vmem:[%s4 + $0x8] sm:$0xff]
    %v56 = vld [vmem:[%s4 + $0x10] sm:$0xff]
    %v57 = vld [vmem:[%s4 + $0x18] sm:$0xff]
    %v58 = vpack.c.bf16 %v53, %v52
    %v59 = vpack.c.bf16 %v55, %v54
    %v60 = vpack.c.bf16 %v57, %v56
    %v61 = vld [vmem:[%s5] sm:$0x1]
    %v63 = vlaneseq
    %v64 = vshrl.u32 %v63, 7
    %v65 = vsub.s32 0, %v64
    %v66 = vrot.slane %v61, %v65
    %vm68 = vcmask 261120
    %v70 = vsel %vm68, %v58, 0
    %72 = vmatprep.subr.bf16.mxu0 0
    %73 = vmatpush1.bf16.msra.mxu0 %v59
    %74 = vmatprep.subr.bf16.mxu0 0
    %75 = vmatpush1.bf16.msra.mxu0 %v60
    %76 = vmatprep.subr.bf16.mxu0 0
    %77 = vmatpush1.bf16.msra.mxu0 0
    %78 = vmatprep.subr.bf16.mxu0 0
    %79 = vmatpush1.bf16.msra.mxu0 0
    %80 = vmatprep.subr.bf16.mxu0 0
    %81 = vmatpush1.bf16.msra.mxu0 0
    %82 = vmatprep.subr.bf16.mxu0 0
    %83 = vmatpush1.bf16.msra.mxu0 0
    %84 = vmatprep.subr.bf16.mxu0 0
    %85 = vmatpush1.bf16.msra.mxu0 0
    %86 = vmatprep.subr.bf16.mxu0 0
    %87 = vmatpush1.bf16.msra.mxu0 0
    %88 = vmatprep.subr.bf16.mxu0 0
    %89 = vmatpush1.bf16.msra.mxu0 0
    %90 = vmatprep.subr.bf16.mxu0 0
    %91 = vmatpush1.bf16.msra.mxu0 0
    %92 = vmatprep.subr.bf16.mxu0 0
    %93 = vmatpush1.bf16.msra.mxu0 0
    %94 = vmatprep.subr.bf16.mxu0 0
    %95 = vmatpush1.bf16.msra.mxu0 0
    %96 = vmatprep.subr.bf16.mxu0 0
    %97 = vmatpush1.bf16.msra.mxu0 0
    %98 = vmatprep.subr.bf16.mxu0 0
    %99 = vmatpush1.bf16.msra.mxu0 0
    %100 = vmatprep.subr.bf16.mxu0 0
    %101 = vmatpush1.bf16.msra.mxu0 0
    %102 = vmatprep.subr.bf16.mxu0 0
    %103 = vmatpush1.bf16.msra.mxu0 0
    %104 = vmatprep.mubr.bf16.mxu0 0
    %105 = vmatmul.mubr.bf16.gmra.mrb[0].mxu0 %v70
    %v106 = vpop.f32.mrb[0].mxu0
    %v107 = vadd.f32 %v66, %v106
    %v108 = vpop.f32.mrb[0].mxu0
    %v109 = vpop.f32.mrb[0].mxu0
    %v110 = vadd.f32 %v66, %v109
    %v111 = vpop.f32.mrb[0].mxu0
    %112 = vdwg.mxu0
    %v113 = vpack.c.bf16 %v107, %v107
    %v114 = vpack.c.bf16 %v110, %v110
    %v115 = vld [vmem:[%s10] sm:$0x1]
    %v116 = vld [vmem:[%s2] sm:$0xff]
    %v117 = vld [vmem:[%s2 + $0x8] sm:$0xff]
    %v118 = vld [vmem:[%s6] sm:$0xff]
    %v119 = vld [vmem:[%s6 + $0x8] sm:$0xff]
    %v120 = vld [vmem:[%s6 + $0x10] sm:$0xff]
    %v121 = vld [vmem:[%s6 + $0x18] sm:$0xff]
    %v122 = vpack.c.bf16 %v117, %v116
    %v123 = vpack.c.bf16 %v119, %v118
    %v124 = vpack.c.bf16 %v121, %v120
    %v125 = vld [vmem:[%s7] sm:$0x1]
    %v127 = vlaneseq
    %v128 = vshrl.u32 %v127, 7
    %v129 = vsub.s32 0, %v128
    %v130 = vrot.slane %v125, %v129
    %v133 = vsel %vm68, %v122, 0
    %135 = vmatprep.subr.bf16.mxu0 0
    %136 = vmatpush1.bf16.msra.mxu0 %v123
    %137 = vmatprep.subr.bf16.mxu0 0
    %138 = vmatpush1.bf16.msra.mxu0 %v124
    %139 = vmatprep.subr.bf16.mxu0 0
    %140 = vmatpush1.bf16.msra.mxu0 0
    %141 = vmatprep.subr.bf16.mxu0 0
    %142 = vmatpush1.bf16.msra.mxu0 0
    %143 = vmatprep.subr.bf16.mxu0 0
    %144 = vmatpush1.bf16.msra.mxu0 0
    %145 = vmatprep.subr.bf16.mxu0 0
    %146 = vmatpush1.bf16.msra.mxu0 0
    %147 = vmatprep.subr.bf16.mxu0 0
    %148 = vmatpush1.bf16.msra.mxu0 0
    %149 = vmatprep.subr.bf16.mxu0 0
    %150 = vmatpush1.bf16.msra.mxu0 0
    %151 = vmatprep.subr.bf16.mxu0 0
    %152 = vmatpush1.bf16.msra.mxu0 0
    %153 = vmatprep.subr.bf16.mxu0 0
    %154 = vmatpush1.bf16.msra.mxu0 0
    %155 = vmatprep.subr.bf16.mxu0 0
    %156 = vmatpush1.bf16.msra.mxu0 0
    %157 = vmatprep.subr.bf16.mxu0 0
    %158 = vmatpush1.bf16.msra.mxu0 0
    %159 = vmatprep.subr.bf16.mxu0 0
    %160 = vmatpush1.bf16.msra.mxu0 0
    %161 = vmatprep.subr.bf16.mxu0 0
    %162 = vmatpush1.bf16.msra.mxu0 0
    %163 = vmatprep.subr.bf16.mxu0 0
    %164 = vmatpush1.bf16.msra.mxu0 0
    %165 = vmatprep.subr.bf16.mxu0 0
    %166 = vmatpush1.bf16.msra.mxu0 0
    %167 = vmatprep.mubr.bf16.mxu0 0
    %168 = vmatmul.mubr.bf16.gmra.mrb[0].mxu0 %v133
    %v169 = vpop.f32.mrb[0].mxu0
    %v170 = vadd.f32 %v130, %v169
    %v171 = vpop.f32.mrb[0].mxu0
    %v172 = vpop.f32.mrb[0].mxu0
    %v173 = vadd.f32 %v130, %v172
    %v174 = vpop.f32.mrb[0].mxu0
    %175 = vdwg.mxu0
    %v176 = vpack.c.bf16 %v170, %v170
    %v177 = vpack.c.bf16 %v173, %v173
    %v179 = vsel %vm68, %v113, 0
    %v182 = vsel %vm68, %v176, 0
    %184 = vmatprep.subr.bf16.mxu0 0
    %185 = vmatpush1.bf16.xpose.msra.mxu0 %v182
    %186 = vmatprep.subr.bf16.mxu0 0
    %187 = vmatpush1.bf16.xpose.msra.mxu0 0
    %188 = vmatprep.subr.bf16.mxu0 0
    %189 = vmatpush1.bf16.xpose.msra.mxu0 0
    %190 = vmatprep.subr.bf16.mxu0 0
    %191 = vmatpush1.bf16.xpose.msra.mxu0 0
    %192 = vmatprep.subr.bf16.mxu0 0
    %193 = vmatpush1.bf16.xpose.msra.mxu0 0
    %194 = vmatprep.subr.bf16.mxu0 0
    %195 = vmatpush1.bf16.xpose.msra.mxu0 0
    %196 = vmatprep.subr.bf16.mxu0 0
    %197 = vmatpush1.bf16.xpose.msra.mxu0 0
    %198 = vmatprep.subr.bf16.mxu0 0
    %199 = vmatpush1.bf16.xpose.msra.mxu0 0
    %200 = vmatprep.subr.bf16.mxu0 0
    %201 = vmatpush1.bf16.xpose.msra.mxu0 0
    %202 = vmatprep.subr.bf16.mxu0 0
    %203 = vmatpush1.bf16.xpose.msra.mxu0 0
    %204 = vmatprep.subr.bf16.mxu0 0
    %205 = vmatpush1.bf16.xpose.msra.mxu0 0
    %206 = vmatprep.subr.bf16.mxu0 0
    %207 = vmatpush1.bf16.xpose.msra.mxu0 0
    %208 = vmatprep.subr.bf16.mxu0 0
    %209 = vmatpush1.bf16.xpose.msra.mxu0 0
    %210 = vmatprep.subr.bf16.mxu0 0
    %211 = vmatpush1.bf16.xpose.msra.mxu0 0
    %212 = vmatprep.subr.bf16.mxu0 0
    %213 = vmatpush1.bf16.xpose.msra.mxu0 0
    %214 = vmatprep.subr.bf16.mxu0 0
    %215 = vmatpush1.bf16.xpose.msra.mxu0 0
    %216 = vmatprep.mubr.bf16.mxu0 0
    %217 = vmatmul.mubr.bf16.gmra.mrb[0].mxu0 %v179
    %v218 = vpop.f32.mrb[0].mxu0
    %v219 = vadd.f32 0.0, %v218
    %v220 = vpop.f32.mrb[0].mxu0
    %v221 = vpop.f32.mrb[0].mxu0
    %v222 = vpop.f32.mrb[0].mxu0
    %223 = vdwg.mxu0
    %v225 = vsel %vm68, %v114, 0
    %v228 = vsel %vm68, %v177, 0
    %230 = vmatprep.subr.bf16.mxu0 0
    %231 = vmatpush1.bf16.xpose.msra.mxu0 %v228
    %232 = vmatprep.subr.bf16.mxu0 0
    %233 = vmatpush1.bf16.xpose.msra.mxu0 0
    %234 = vmatprep.subr.bf16.mxu0 0
    %235 = vmatpush1.bf16.xpose.msra.mxu0 0
    %236 = vmatprep.subr.bf16.mxu0 0
    %237 = vmatpush1.bf16.xpose.msra.mxu0 0
    %238 = vmatprep.subr.bf16.mxu0 0
    %239 = vmatpush1.bf16.xpose.msra.mxu0 0
    %240 = vmatprep.subr.bf16.mxu0 0
    %241 = vmatpush1.bf16.xpose.msra.mxu0 0
    %242 = vmatprep.subr.bf16.mxu0 0
    %243 = vmatpush1.bf16.xpose.msra.mxu0 0
    %244 = vmatprep.subr.bf16.mxu0 0
    %245 = vmatpush1.bf16.xpose.msra.mxu0 0
    %246 = vmatprep.subr.bf16.mxu0 0
    %247 = vmatpush1.bf16.xpose.msra.mxu0 0
    %248 = vmatprep.subr.bf16.mxu0 0
    %249 = vmatpush1.bf16.xpose.msra.mxu0 0
    %250 = vmatprep.subr.bf16.mxu0 0
    %251 = vmatpush1.bf16.xpose.msra.mxu0 0
    %252 = vmatprep.subr.bf16.mxu0 0
    %253 = vmatpush1.bf16.xpose.msra.mxu0 0
    %254 = vmatprep.subr.bf16.mxu0 0
    %255 = vmatpush1.bf16.xpose.msra.mxu0 0
    %256 = vmatprep.subr.bf16.mxu0 0
    %257 = vmatpush1.bf16.xpose.msra.mxu0 0
    %258 = vmatprep.subr.bf16.mxu0 0
    %259 = vmatpush1.bf16.xpose.msra.mxu0 0
    %260 = vmatprep.subr.bf16.mxu0 0
    %261 = vmatpush1.bf16.xpose.msra.mxu0 0
    %262 = vmatprep.mubr.bf16.mxu0 0
    %263 = vmatmul.mubr.bf16.gmra.mrb[0].mxu0 %v225
    %v264 = vpop.f32.mrb[0].mxu0
    %v265 = vadd.f32 0.0, %v264
    %v266 = vpop.f32.mrb[0].mxu0
    %v267 = vpop.f32.mrb[0].mxu0
    %v268 = vpop.f32.mrb[0].mxu0
    %269 = vdwg.mxu0
    %v270 = vmul.f32 %v219, 0.17677669
    %v271 = vmul.f32 %v265, 0.17677669
    %vm272 = vcmask 64512
    %v273 = vsel %vm272, %v270, -inf
    %274 = vmax.xlane.f32.xlu0 %v273
    %v275 = vpop.xlane.xlu0 %274
    %v276 = vsel %vm272, %v271, -inf
    %277 = vmax.xlane.f32.xlu0 %v276
    %v278 = vpop.xlane.xlu0 %277
    %v279 = vsub.f32 %v270, %v275
    %v280 = vsub.f32 %v271, %v278
    %v281 = vmul.f32 %v279, 1.442695
    %v282 = vpow.pop %v281
    %v283 = vmul.f32 %v280, 1.442695
    %v284 = vpow.pop %v283
    %v285 = vsel %vm272, %v282, 0.0
    %286 = vadd.xlane.f32.xlu0 %v285
    %v287 = vpop.xlane.xlu0 %286
    %v288 = vsel %vm272, %v284, 0.0
    %289 = vadd.xlane.f32.xlu0 %v288
    %v290 = vpop.xlane.xlu0 %289
    %v291 = vrcp.pop %v287
    %v292 = vrcp.pop %v290
    %v293 = vmul.f32 %v282, %v291
    %v294 = vmul.f32 %v284, %v292
    %v295 = vpack.c.bf16 %v293, %v293
    %v296 = vpack.c.bf16 %v294, %v294
    %298 = vrot.lane.b32.xlu0 %v176, 96
    %v299 = vpop.permute.xlu0 %298
    %v301 = vsel %vm272, %v295, 0
    %vm303 = vcmask 1043456
    %v305 = vsel %vm303, %v299, 0
    %307 = vmatprep.subr.bf16.mxu0 0
    %308 = vmatpush1.bf16.msra.mxu0 %v305
    %309 = vmatprep.subr.bf16.mxu0 0
    %310 = vmatpush1.bf16.msra.mxu0 0
    %311 = vmatprep.subr.bf16.mxu0 0
    %312 = vmatpush1.bf16.msra.mxu0 0
    %313 = vmatprep.subr.bf16.mxu0 0
    %314 = vmatpush1.bf16.msra.mxu0 0
    %315 = vmatprep.subr.bf16.mxu0 0
    %316 = vmatpush1.bf16.msra.mxu0 0
    %317 = vmatprep.subr.bf16.mxu0 0
    %318 = vmatpush1.bf16.msra.mxu0 0
    %319 = vmatprep.subr.bf16.mxu0 0
    %320 = vmatpush1.bf16.msra.mxu0 0
    %321 = vmatprep.subr.bf16.mxu0 0
    %322 = vmatpush1.bf16.msra.mxu0 0
    %323 = vmatprep.subr.bf16.mxu0 0
    %324 = vmatpush1.bf16.msra.mxu0 0
    %325 = vmatprep.subr.bf16.mxu0 0
    %326 = vmatpush1.bf16.msra.mxu0 0
    %327 = vmatprep.subr.bf16.mxu0 0
    %328 = vmatpush1.bf16.msra.mxu0 0
    %329 = vmatprep.subr.bf16.mxu0 0
    %330 = vmatpush1.bf16.msra.mxu0 0
    %331 = vmatprep.subr.bf16.mxu0 0
    %332 = vmatpush1.bf16.msra.mxu0 0
    %333 = vmatprep.subr.bf16.mxu0 0
    %334 = vmatpush1.bf16.msra.mxu0 0
    %335 = vmatprep.subr.bf16.mxu0 0
    %336 = vmatpush1.bf16.msra.mxu0 0
    %337 = vmatprep.subr.bf16.mxu0 0
    %338 = vmatpush1.bf16.msra.mxu0 0
    %339 = vmatprep.mubr.bf16.mxu0 0
    %340 = vmatmul.mubr.bf16.gmra.mrb[0].mxu0 %v301
    %v341 = vpop.f32.mrb[0].mxu0
    %v342 = vadd.f32 0.0, %v341
    %v343 = vpop.f32.mrb[0].mxu0
    %v344 = vpop.f32.mrb[0].mxu0
    %v345 = vpop.f32.mrb[0].mxu0
    %346 = vdwg.mxu0
    %348 = vrot.lane.b32.xlu0 %v177, 96
    %v349 = vpop.permute.xlu0 %348
    %v351 = vsel %vm272, %v296, 0
    %v354 = vsel %vm303, %v349, 0
    %356 = vmatprep.subr.bf16.mxu0 0
    %357 = vmatpush1.bf16.msra.mxu0 %v354
    %358 = vmatprep.subr.bf16.mxu0 0
    %359 = vmatpush1.bf16.msra.mxu0 0
    %360 = vmatprep.subr.bf16.mxu0 0
    %361 = vmatpush1.bf16.msra.mxu0 0
    %362 = vmatprep.subr.bf16.mxu0 0
    %363 = vmatpush1.bf16.msra.mxu0 0
    %364 = vmatprep.subr.bf16.mxu0 0
    %365 = vmatpush1.bf16.msra.mxu0 0
    %366 = vmatprep.subr.bf16.mxu0 0
    %367 = vmatpush1.bf16.msra.mxu0 0
    %368 = vmatprep.subr.bf16.mxu0 0
    %369 = vmatpush1.bf16.msra.mxu0 0
    %370 = vmatprep.subr.bf16.mxu0 0
    %371 = vmatpush1.bf16.msra.mxu0 0
    %372 = vmatprep.subr.bf16.mxu0 0
    %373 = vmatpush1.bf16.msra.mxu0 0
    %374 = vmatprep.subr.bf16.mxu0 0
    %375 = vmatpush1.bf16.msra.mxu0 0
    %376 = vmatprep.subr.bf16.mxu0 0
    %377 = vmatpush1.bf16.msra.mxu0 0
    %378 = vmatprep.subr.bf16.mxu0 0
    %379 = vmatpush1.bf16.msra.mxu0 0
    %380 = vmatprep.subr.bf16.mxu0 0
    %381 = vmatpush1.bf16.msra.mxu0 0
    %382 = vmatprep.subr.bf16.mxu0 0
    %383 = vmatpush1.bf16.msra.mxu0 0
    %384 = vmatprep.subr.bf16.mxu0 0
    %385 = vmatpush1.bf16.msra.mxu0 0
    %386 = vmatprep.subr.bf16.mxu0 0
    %387 = vmatpush1.bf16.msra.mxu0 0
    %388 = vmatprep.mubr.bf16.mxu0 0
    %389 = vmatmul.mubr.bf16.gmra.mrb[0].mxu0 %v351
    %v390 = vpop.f32.mrb[0].mxu0
    %v391 = vadd.f32 0.0, %v390
    %v392 = vpop.f32.mrb[0].mxu0
    %v393 = vpop.f32.mrb[0].mxu0
    %v394 = vpop.f32.mrb[0].mxu0
    %395 = vdwg.mxu0
    %v396 = vld [vmem:[%s8] sm:$0xff]
    %v397 = vld [vmem:[%s8 + $0x8] sm:$0xff]
    %v398 = vld [vmem:[%s8 + $0x10] sm:$0xff]
    %v399 = vld [vmem:[%s8 + $0x18] sm:$0xff]
    %v400 = vpack.c.bf16 %v391, %v342
    %v401 = vpack.c.bf16 %v397, %v396
    %v402 = vpack.c.bf16 %v399, %v398
    %v403 = vld [vmem:[%s9] sm:$0x1]
    %v405 = vlaneseq
    %v406 = vshrl.u32 %v405, 7
    %v407 = vsub.s32 0, %v406
    %v408 = vrot.slane %v403, %v407
    %v411 = vsel %vm68, %v400, 0
    %413 = vmatprep.subr.bf16.mxu0 0
    %414 = vmatpush1.bf16.msra.mxu0 %v401
    %415 = vmatprep.subr.bf16.mxu0 0
    %416 = vmatpush1.bf16.msra.mxu0 %v402
    %417 = vmatprep.subr.bf16.mxu0 0
    %418 = vmatpush1.bf16.msra.mxu0 0
    %419 = vmatprep.subr.bf16.mxu0 0
    %420 = vmatpush1.bf16.msra.mxu0 0
    %421 = vmatprep.subr.bf16.mxu0 0
    %422 = vmatpush1.bf16.msra.mxu0 0
    %423 = vmatprep.subr.bf16.mxu0 0
    %424 = vmatpush1.bf16.msra.mxu0 0
    %425 = vmatprep.subr.bf16.mxu0 0
    %426 = vmatpush1.bf16.msra.mxu0 0
    %427 = vmatprep.subr.bf16.mxu0 0
    %428 = vmatpush1.bf16.msra.mxu0 0
    %429 = vmatprep.subr.bf16.mxu0 0
    %430 = vmatpush1.bf16.msra.mxu0 0
    %431 = vmatprep.subr.bf16.mxu0 0
    %432 = vmatpush1.bf16.msra.mxu0 0
    %433 = vmatprep.subr.bf16.mxu0 0
    %434 = vmatpush1.bf16.msra.mxu0 0
    %435 = vmatprep.subr.bf16.mxu0 0
    %436 = vmatpush1.bf16.msra.mxu0 0
    %437 = vmatprep.subr.bf16.mxu0 0
    %438 = vmatpush1.bf16.msra.mxu0 0
    %439 = vmatprep.subr.bf16.mxu0 0
    %440 = vmatpush1.bf16.msra.mxu0 0
    %441 = vmatprep.subr.bf16.mxu0 0
    %442 = vmatpush1.bf16.msra.mxu0 0
    %443 = vmatprep.subr.bf16.mxu0 0
    %444 = vmatpush1.bf16.msra.mxu0 0
    %445 = vmatprep.mubr.bf16.mxu0 0
    %446 = vmatmul.mubr.bf16.gmra.mrb[0].mxu0 %v411
    %v447 = vpop.f32.mrb[0].mxu0
    %v448 = vadd.f32 %v408, %v447
    %v449 = vpop.f32.mrb[0].mxu0
    %v450 = vpop.f32.mrb[0].mxu0
    %v451 = vadd.f32 %v408, %v450
    %v452 = vpop.f32.mrb[0].mxu0
    %453 = vdwg.mxu0
    %v454 = vadd.f32 %v448, %v52
    %v455 = vadd.f32 %v451, %v53
    %v456 = vmul.f32 %v454, %v454
    %v457 = vmul.f32 %v455, %v455
    %v458 = vsel %vm68, %v456, 0.0
    %459 = vadd.xlane.f32.xlu0 %v458
    %v460 = vpop.xlane.xlu0 %459
    %v461 = vsel %vm68, %v457, 0.0
    %462 = vadd.xlane.f32.xlu0 %v461
    %v463 = vpop.xlane.xlu0 %462
    %v464 = vrcp.pop 32.0
    %v465 = vmul.f32 %v460, %v464
    %v466 = vmul.f32 %v463, %v464
    %v467 = vadd.f32 %v465, 1e-08
    %v468 = vadd.f32 %v466, 1e-08
    %v469 = vrsqrt.pop %v467
    %v470 = vrsqrt.pop %v468
    %v471 = vmul.f32 %v454, %v469
    %v472 = vmul.f32 %v455, %v470
    %v474 = vlaneseq
    %v475 = vshrl.u32 %v474, 7
    %v476 = vsub.s32 0, %v475
    %v477 = vrot.slane %v115, %v476
    %v479 = vmul.f32 %v477, %v471
    %v480 = vmul.f32 %v477, %v472
    %v481 = vld [vmem:[%s3] sm:$0x3f]
    %v482 = vld [vmem:[%s3 + $0x8] sm:$0x3f]
    %v485 = vcombine.high %v481, %v481
    %v487 = vunpack.c.l.s4 1983009808
    %v488 = vunpack.c.0.s8 %v487
    %v489 = vlaneseq
    %v490 = vshrl.u32 %v489, 7
    %v491 = vsub.s32 %v488, %v490
    %v492 = vrot.slane %v481, %v491
    %v494 = vunpack.c.l.s4 1983009808
    %v495 = vunpack.c.0.s8 %v494
    %v496 = vlaneseq
    %v497 = vshrl.u32 %v496, 7
    %v498 = vsub.s32 %v495, %v497
    %v499 = vrot.slane %v485, %v498
    %v500 = vcombine.high %v492, %v492
    %v501 = vcombine.high %v482, %v482
    %v503 = vunpack.c.l.s4 1983009808
    %v504 = vunpack.c.0.s8 %v503
    %v505 = vlaneseq
    %v506 = vshrl.u32 %v505, 7
    %v507 = vsub.s32 %v504, %v506
    %v508 = vrot.slane %v482, %v507
    %v510 = vunpack.c.l.s4 1983009808
    %v511 = vunpack.c.0.s8 %v510
    %v512 = vlaneseq
    %v513 = vshrl.u32 %v512, 7
    %v514 = vsub.s32 %v511, %v513
    %v515 = vrot.slane %v501, %v514
    %v516 = vcombine.high %v508, %v508
    %v517 = vld [vmem:[%s6] sm:$0xff]
    %v518 = vld [vmem:[%s6 + $0x8] sm:$0xff]
    %v519 = vld [vmem:[%s6 + $0x10] sm:$0xff]
    %v520 = vld [vmem:[%s6 + $0x18] sm:$0xff]
    %v521 = vcombine.low %v492, %v500
    %v522 = vcombine.low %v499, %v508
    %v524 = vunpack.c.l.s4 1983009808
    %v525 = vunpack.c.0.s8 %v524
    %v526 = vlaneseq
    %v527 = vshrl.u32 %v526, 7
    %v528 = vsub.s32 %v525, %v527
    %v529 = vrot.slane %v521, %v528
    %v531 = vunpack.c.l.s4 1983009808
    %v532 = vunpack.c.0.s8 %v531
    %v533 = vlaneseq
    %v534 = vshrl.u32 %v533, 7
    %v535 = vsub.s32 %v532, %v534
    %v536 = vrot.slane %v522, %v535
    %v537 = vcombine.low %v529, %v536
    %v538 = vcombine.low %v516, %v515
    %v540 = vunpack.c.l.s4 1983009808
    %v541 = vunpack.c.0.s8 %v540
    %v542 = vlaneseq
    %v543 = vshrl.u32 %v542, 7
    %v544 = vsub.s32 %v541, %v543
    %v545 = vrot.slane %v538, %v544
    %v548 = vpack.c.bf16 %v545, %v537
    %v549 = vpack.c.bf16 %v518, %v517
    %v550 = vpack.c.bf16 %v520, %v519
    %v551 = vld [vmem:[%s7] sm:$0x1]
    %v553 = vlaneseq
    %v554 = vshrl.u32 %v553, 7
    %v555 = vsub.s32 0, %v554
    %v556 = vrot.slane %v551, %v555
    %v559 = vsel %vm68, %v548, 0
    %561 = vmatprep.subr.bf16.mxu0 0
    %562 = vmatpush1.bf16.msra.mxu0 %v549
    %563 = vmatprep.subr.bf16.mxu0 0
    %564 = vmatpush1.bf16.msra.mxu0 %v550
    %565 = vmatprep.subr.bf16.mxu0 0
    %566 = vmatpush1.bf16.msra.mxu0 0
    %567 = vmatprep.subr.bf16.mxu0 0
    %568 = vmatpush1.bf16.msra.mxu0 0
    %569 = vmatprep.subr.bf16.mxu0 0
    %570 = vmatpush1.bf16.msra.mxu0 0
    %571 = vmatprep.subr.bf16.mxu0 0
    %572 = vmatpush1.bf16.msra.mxu0 0
    %573 = vmatprep.subr.bf16.mxu0 0
    %574 = vmatpush1.bf16.msra.mxu0 0
    %575 = vmatprep.subr.bf16.mxu0 0
    %576 = vmatpush1.bf16.msra.mxu0 0
    %577 = vmatprep.subr.bf16.mxu0 0
    %578 = vmatpush1.bf16.msra.mxu0 0
    %579 = vmatprep.subr.bf16.mxu0 0
    %580 = vmatpush1.bf16.msra.mxu0 0
    %581 = vmatprep.subr.bf16.mxu0 0
    %582 = vmatpush1.bf16.msra.mxu0 0
    %583 = vmatprep.subr.bf16.mxu0 0
    %584 = vmatpush1.bf16.msra.mxu0 0
    %585 = vmatprep.subr.bf16.mxu0 0
    %586 = vmatpush1.bf16.msra.mxu0 0
    %587 = vmatprep.subr.bf16.mxu0 0
    %588 = vmatpush1.bf16.msra.mxu0 0
    %589 = vmatprep.subr.bf16.mxu0 0
    %590 = vmatpush1.bf16.msra.mxu0 0
    %591 = vmatprep.subr.bf16.mxu0 0
    %592 = vmatpush1.bf16.msra.mxu0 0
    %593 = vmatprep.mubr.bf16.mxu0 0
    %594 = vmatmul.mubr.bf16.gmra.mrb[0].mxu0 %v559
    %v595 = vpop.f32.mrb[0].mxu0
    %v596 = vadd.f32 %v556, %v595
    %v597 = vpop.f32.mrb[0].mxu0
    %v598 = vpop.f32.mrb[0].mxu0
    %v599 = vadd.f32 %v556, %v598
    %v600 = vpop.f32.mrb[0].mxu0
    %601 = vdwg.mxu0
    %v604 = vcombine.high %v596, %v596
    %v606 = vunpack.c.l.s4 1983009808
    %v607 = vunpack.c.0.s8 %v606
    %v608 = vlaneseq
    %v609 = vshrl.u32 %v608, 7
    %v610 = vsub.s32 %v607, %v609
    %v611 = vrot.slane %v596, %v610
    %v613 = vunpack.c.l.s4 1983009808
    %v614 = vunpack.c.0.s8 %v613
    %v615 = vlaneseq
    %v616 = vshrl.u32 %v615, 7
    %v617 = vsub.s32 %v614, %v616
    %v618 = vrot.slane %v604, %v617
    %v619 = vcombine.high %v611, %v611
    %v620 = vcombine.high %v618, %v618
    %v622 = vunpack.c.l.s4 1983009808
    %v623 = vunpack.c.0.s8 %v622
    %v624 = vlaneseq
    %v625 = vshrl.u32 %v624, 7
    %v626 = vsub.s32 %v623, %v625
    %v627 = vrot.slane %v599, %v626
    %v628 = vcombine.high %v627, %v627
    %v629 = vcombine.low %v611, %v619
    %v631 = vunpack.c.l.s4 1983009808
    %v632 = vunpack.c.0.s8 %v631
    %v633 = vlaneseq
    %v634 = vshrl.u32 %v633, 7
    %v635 = vsub.s32 %v632, %v634
    %v636 = vrot.slane %v629, %v635
    %v638 = vunpack.c.l.s4 1983009808
    %v639 = vunpack.c.0.s8 %v638
    %v640 = vlaneseq
    %v641 = vshrl.u32 %v640, 7
    %v642 = vsub.s32 %v639, %v641
    %v643 = vrot.slane %v618, %v642
    %v644 = vcombine.low %v636, %v643
    %v645 = vcombine.low %v620, %v627
    %v647 = vunpack.c.l.s4 1983009808
    %v648 = vunpack.c.0.s8 %v647
    %v649 = vlaneseq
    %v650 = vshrl.u32 %v649, 7
    %v651 = vsub.s32 %v648, %v650
    %v652 = vrot.slane %v645, %v651
    %v654 = vunpack.c.l.s4 1983009808
    %v655 = vunpack.c.0.s8 %v654
    %v656 = vlaneseq
    %v657 = vshrl.u32 %v656, 7
    %v658 = vsub.s32 %v655, %v657
    %v659 = vrot.slane %v628, %v658
    %v660 = vcombine.low %v652, %v659
    %v663 = vpack.c.bf16 %v644, %v644
    %v664 = vpack.c.bf16 %v660, %v660
    %v666 = vsel %vm68, %v663, 0
    %668 = vmatprep.subr.bf16.mxu0 0
    %669 = vmatpush1.bf16.xpose.msra.mxu0 %v666
    %670 = vmatprep.subr.bf16.mxu0 0
    %671 = vmatpush1.bf16.xpose.msra.mxu0 0
    %672 = vmatprep.subr.bf16.mxu0 0
    %673 = vmatpush1.bf16.xpose.msra.mxu0 0
    %674 = vmatprep.subr.bf16.mxu0 0
    %675 = vmatpush1.bf16.xpose.msra.mxu0 0
    %676 = vmatprep.subr.bf16.mxu0 0
    %677 = vmatpush1.bf16.xpose.msra.mxu0 0
    %678 = vmatprep.subr.bf16.mxu0 0
    %679 = vmatpush1.bf16.xpose.msra.mxu0 0
    %680 = vmatprep.subr.bf16.mxu0 0
    %681 = vmatpush1.bf16.xpose.msra.mxu0 0
    %682 = vmatprep.subr.bf16.mxu0 0
    %683 = vmatpush1.bf16.xpose.msra.mxu0 0
    %684 = vmatprep.subr.bf16.mxu0 0
    %685 = vmatpush1.bf16.xpose.msra.mxu0 0
    %686 = vmatprep.subr.bf16.mxu0 0
    %687 = vmatpush1.bf16.xpose.msra.mxu0 0
    %688 = vmatprep.subr.bf16.mxu0 0
    %689 = vmatpush1.bf16.xpose.msra.mxu0 0
    %690 = vmatprep.subr.bf16.mxu0 0
    %691 = vmatpush1.bf16.xpose.msra.mxu0 0
    %692 = vmatprep.subr.bf16.mxu0 0
    %693 = vmatpush1.bf16.xpose.msra.mxu0 0
    %694 = vmatprep.subr.bf16.mxu0 0
    %695 = vmatpush1.bf16.xpose.msra.mxu0 0
    %696 = vmatprep.subr.bf16.mxu0 0
    %697 = vmatpush1.bf16.xpose.msra.mxu0 0
    %698 = vmatprep.subr.bf16.mxu0 0
    %699 = vmatpush1.bf16.xpose.msra.mxu0 0
    %700 = vmatprep.mubr.bf16.mxu0 0
    %701 = vmatmul.mubr.bf16.gmra.mrb[0].mxu0 %v179
    %v702 = vpop.f32.mrb[0].mxu0
    %v703 = vadd.f32 0.0, %v702
    %v704 = vpop.f32.mrb[0].mxu0
    %v705 = vpop.f32.mrb[0].mxu0
    %v706 = vpop.f32.mrb[0].mxu0
    %707 = vdwg.mxu0
    %v709 = vsel %vm68, %v664, 0
    %711 = vmatprep.subr.bf16.mxu0 0
    %712 = vmatpush1.bf16.xpose.msra.mxu0 %v709
    %713 = vmatprep.subr.bf16.mxu0 0
    %714 = vmatpush1.bf16.xpose.msra.mxu0 0
    %715 = vmatprep.subr.bf16.mxu0 0
    %716 = vmatpush1.bf16.xpose.msra.mxu0 0
    %717 = vmatprep.subr.bf16.mxu0 0
    %718 = vmatpush1.bf16.xpose.msra.mxu0 0
    %719 = vmatprep.subr.bf16.mxu0 0
    %720 = vmatpush1.bf16.xpose.msra.mxu0 0
    %721 = vmatprep.subr.bf16.mxu0 0
    %722 = vmatpush1.bf16.xpose.msra.mxu0 0
    %723 = vmatprep.subr.bf16.mxu0 0
    %724 = vmatpush1.bf16.xpose.msra.mxu0 0
    %725 = vmatprep.subr.bf16.mxu0 0
    %726 = vmatpush1.bf16.xpose.msra.mxu0 0
    %727 = vmatprep.subr.bf16.mxu0 0
    %728 = vmatpush1.bf16.xpose.msra.mxu0 0
    %729 = vmatprep.subr.bf16.mxu0 0
    %730 = vmatpush1.bf16.xpose.msra.mxu0 0
    %731 = vmatprep.subr.bf16.mxu0 0
    %732 = vmatpush1.bf16.xpose.msra.mxu0 0
    %733 = vmatprep.subr.bf16.mxu0 0
    %734 = vmatpush1.bf16.xpose.msra.mxu0 0
    %735 = vmatprep.subr.bf16.mxu0 0
    %736 = vmatpush1.bf16.xpose.msra.mxu0 0
    %737 = vmatprep.subr.bf16.mxu0 0
    %738 = vmatpush1.bf16.xpose.msra.mxu0 0
    %739 = vmatprep.subr.bf16.mxu0 0
    %740 = vmatpush1.bf16.xpose.msra.mxu0 0
    %741 = vmatprep.subr.bf16.mxu0 0
    %742 = vmatpush1.bf16.xpose.msra.mxu0 0
    %743 = vmatprep.mubr.bf16.mxu0 0
    %744 = vmatmul.mubr.bf16.gmra.mrb[0].mxu0 %v225
    %v745 = vpop.f32.mrb[0].mxu0
    %v746 = vadd.f32 0.0, %v745
    %v747 = vpop.f32.mrb[0].mxu0
    %v748 = vpop.f32.mrb[0].mxu0
    %v749 = vpop.f32.mrb[0].mxu0
    %750 = vdwg.mxu0
    %v751 = vmul.f32 %v703, 0.17677669
    %v752 = vmul.f32 %v746, 0.17677669
    %vm753 = vcmask 48128
    %v754 = vsel %vm753, %v751, -inf
    %755 = vmax.xlane.f32.xlu0 %v754
    %v756 = vpop.xlane.xlu0 %755
    %v757 = vsel %vm753, %v752, -inf
    %758 = vmax.xlane.f32.xlu0 %v757
    %v759 = vpop.xlane.xlu0 %758
    %v760 = vsub.f32 %v751, %v756
    %v761 = vsub.f32 %v752, %v759
    %v762 = vmul.f32 %v760, 1.442695
    %v763 = vpow.pop %v762
    %v764 = vmul.f32 %v761, 1.442695
    %v765 = vpow.pop %v764
    %v766 = vsel %vm753, %v763, 0.0
    %767 = vadd.xlane.f32.xlu0 %v766
    %v768 = vpop.xlane.xlu0 %767
    %v769 = vsel %vm753, %v765, 0.0
    %770 = vadd.xlane.f32.xlu0 %v769
    %v771 = vpop.xlane.xlu0 %770
    %v772 = vrcp.pop %v768
    %v773 = vrcp.pop %v771
    %v774 = vmul.f32 %v763, %v772
    %v775 = vmul.f32 %v765, %v773
    %v776 = vpack.c.bf16 %v774, %v774
    %v777 = vpack.c.bf16 %v775, %v775
    %779 = vrot.lane.b32.xlu0 %v663, 96
    %v780 = vpop.permute.xlu0 %779
    %v782 = vsel %vm753, %v776, 0
    %vm784 = vcmask 1042432
    %v786 = vsel %vm784, %v780, 0
    %788 = vmatprep.subr.bf16.mxu0 0
    %789 = vmatpush1.bf16.msra.mxu0 %v786
    %790 = vmatprep.subr.bf16.mxu0 0
    %791 = vmatpush1.bf16.msra.mxu0 0
    %792 = vmatprep.subr.bf16.mxu0 0
    %793 = vmatpush1.bf16.msra.mxu0 0
    %794 = vmatprep.subr.bf16.mxu0 0
    %795 = vmatpush1.bf16.msra.mxu0 0
    %796 = vmatprep.subr.bf16.mxu0 0
    %797 = vmatpush1.bf16.msra.mxu0 0
    %798 = vmatprep.subr.bf16.mxu0 0
    %799 = vmatpush1.bf16.msra.mxu0 0
    %800 = vmatprep.subr.bf16.mxu0 0
    %801 = vmatpush1.bf16.msra.mxu0 0
    %802 = vmatprep.subr.bf16.mxu0 0
    %803 = vmatpush1.bf16.msra.mxu0 0
    %804 = vmatprep.subr.bf16.mxu0 0
    %805 = vmatpush1.bf16.msra.mxu0 0
    %806 = vmatprep.subr.bf16.mxu0 0
    %807 = vmatpush1.bf16.msra.mxu0 0
    %808 = vmatprep.subr.bf16.mxu0 0
    %809 = vmatpush1.bf16.msra.mxu0 0
    %810 = vmatprep.subr.bf16.mxu0 0
    %811 = vmatpush1.bf16.msra.mxu0 0
    %812 = vmatprep.subr.bf16.mxu0 0
    %813 = vmatpush1.bf16.msra.mxu0 0
    %814 = vmatprep.subr.bf16.mxu0 0
    %815 = vmatpush1.bf16.msra.mxu0 0
    %816 = vmatprep.subr.bf16.mxu0 0
    %817 = vmatpush1.bf16.msra.mxu0 0
    %818 = vmatprep.subr.bf16.mxu0 0
    %819 = vmatpush1.bf16.msra.mxu0 0
    %820 = vmatprep.mubr.bf16.mxu0 0
    %821 = vmatmul.mubr.bf16.gmra.mrb[0].mxu0 %v782
    %v822 = vpop.f32.mrb[0].mxu0
    %v823 = vadd.f32 0.0, %v822
    %v824 = vpop.f32.mrb[0].mxu0
    %v825 = vpop.f32.mrb[0].mxu0
    %v826 = vpop.f32.mrb[0].mxu0
    %827 = vdwg.mxu0
    %829 = vrot.lane.b32.xlu0 %v664, 96
    %v830 = vpop.permute.xlu0 %829
    %v832 = vsel %vm753, %v777, 0
    %v835 = vsel %vm784, %v830, 0
    %837 = vmatprep.subr.bf16.mxu0 0
    %838 = vmatpush1.bf16.msra.mxu0 %v835
    %839 = vmatprep.subr.bf16.mxu0 0
    %840 = vmatpush1.bf16.msra.mxu0 0
    %841 = vmatprep.subr.bf16.mxu0 0
    %842 = vmatpush1.bf16.msra.mxu0 0
    %843 = vmatprep.subr.bf16.mxu0 0
    %844 = vmatpush1.bf16.msra.mxu0 0
    %845 = vmatprep.subr.bf16.mxu0 0
    %846 = vmatpush1.bf16.msra.mxu0 0
    %847 = vmatprep.subr.bf16.mxu0 0
    %848 = vmatpush1.bf16.msra.mxu0 0
    %849 = vmatprep.subr.bf16.mxu0 0
    %850 = vmatpush1.bf16.msra.mxu0 0
    %851 = vmatprep.subr.bf16.mxu0 0
    %852 = vmatpush1.bf16.msra.mxu0 0
    %853 = vmatprep.subr.bf16.mxu0 0
    %854 = vmatpush1.bf16.msra.mxu0 0
    %855 = vmatprep.subr.bf16.mxu0 0
    %856 = vmatpush1.bf16.msra.mxu0 0
    %857 = vmatprep.subr.bf16.mxu0 0
    %858 = vmatpush1.bf16.msra.mxu0 0
    %859 = vmatprep.subr.bf16.mxu0 0
    %860 = vmatpush1.bf16.msra.mxu0 0
    %861 = vmatprep.subr.bf16.mxu0 0
    %862 = vmatpush1.bf16.msra.mxu0 0
    %863 = vmatprep.subr.bf16.mxu0 0
    %864 = vmatpush1.bf16.msra.mxu0 0
    %865 = vmatprep.subr.bf16.mxu0 0
    %866 = vmatpush1.bf16.msra.mxu0 0
    %867 = vmatprep.subr.bf16.mxu0 0
    %868 = vmatpush1.bf16.msra.mxu0 0
    %869 = vmatprep.mubr.bf16.mxu0 0
    %870 = vmatmul.mubr.bf16.gmra.mrb[0].mxu0 %v832
    %v871 = vpop.f32.mrb[0].mxu0
    %v872 = vadd.f32 0.0, %v871
    %v873 = vpop.f32.mrb[0].mxu0
    %v874 = vpop.f32.mrb[0].mxu0
    %v875 = vpop.f32.mrb[0].mxu0
    %876 = vdwg.mxu0
    %v877 = vld [vmem:[%s8] sm:$0xff]
    %v878 = vld [vmem:[%s8 + $0x8] sm:$0xff]
    %v879 = vld [vmem:[%s8 + $0x10] sm:$0xff]
    %v880 = vld [vmem:[%s8 + $0x18] sm:$0xff]
    %v881 = vpack.c.bf16 %v872, %v823
    %v882 = vpack.c.bf16 %v878, %v877
    %v883 = vpack.c.bf16 %v880, %v879
    %v884 = vld [vmem:[%s9] sm:$0x1]
    %v886 = vlaneseq
    %v887 = vshrl.u32 %v886, 7
    %v888 = vsub.s32 0, %v887
    %v889 = vrot.slane %v884, %v888
    %v892 = vsel %vm68, %v881, 0
    %894 = vmatprep.subr.bf16.mxu0 0
    %895 = vmatpush1.bf16.msra.mxu0 %v882
    %896 = vmatprep.subr.bf16.mxu0 0
    %897 = vmatpush1.bf16.msra.mxu0 %v883
    %898 = vmatprep.subr.bf16.mxu0 0
    %899 = vmatpush1.bf16.msra.mxu0 0
    %900 = vmatprep.subr.bf16.mxu0 0
    %901 = vmatpush1.bf16.msra.mxu0 0
    %902 = vmatprep.subr.bf16.mxu0 0
    %903 = vmatpush1.bf16.msra.mxu0 0
    %904 = vmatprep.subr.bf16.mxu0 0
    %905 = vmatpush1.bf16.msra.mxu0 0
    %906 = vmatprep.subr.bf16.mxu0 0
    %907 = vmatpush1.bf16.msra.mxu0 0
    %908 = vmatprep.subr.bf16.mxu0 0
    %909 = vmatpush1.bf16.msra.mxu0 0
    %910 = vmatprep.subr.bf16.mxu0 0
    %911 = vmatpush1.bf16.msra.mxu0 0
    %912 = vmatprep.subr.bf16.mxu0 0
    %913 = vmatpush1.bf16.msra.mxu0 0
    %914 = vmatprep.subr.bf16.mxu0 0
    %915 = vmatpush1.bf16.msra.mxu0 0
    %916 = vmatprep.subr.bf16.mxu0 0
    %917 = vmatpush1.bf16.msra.mxu0 0
    %918 = vmatprep.subr.bf16.mxu0 0
    %919 = vmatpush1.bf16.msra.mxu0 0
    %920 = vmatprep.subr.bf16.mxu0 0
    %921 = vmatpush1.bf16.msra.mxu0 0
    %922 = vmatprep.subr.bf16.mxu0 0
    %923 = vmatpush1.bf16.msra.mxu0 0
    %924 = vmatprep.subr.bf16.mxu0 0
    %925 = vmatpush1.bf16.msra.mxu0 0
    %926 = vmatprep.mubr.bf16.mxu0 0
    %927 = vmatmul.mubr.bf16.gmra.mrb[0].mxu0 %v892
    %v928 = vpop.f32.mrb[0].mxu0
    %v929 = vadd.f32 %v889, %v928
    %v930 = vpop.f32.mrb[0].mxu0
    %v931 = vpop.f32.mrb[0].mxu0
    %v932 = vadd.f32 %v889, %v931
    %v933 = vpop.f32.mrb[0].mxu0
    %934 = vdwg.mxu0
    %v935 = vadd.f32 %v929, %v52
    %v936 = vadd.f32 %v932, %v53
    %v937 = vmul.f32 %v935, %v935
    %v938 = vmul.f32 %v936, %v936
    %v939 = vsel %vm68, %v937, 0.0
    %940 = vadd.xlane.f32.xlu0 %v939
    %v941 = vpop.xlane.xlu0 %940
    %v942 = vsel %vm68, %v938, 0.0
    %943 = vadd.xlane.f32.xlu0 %v942
    %v944 = vpop.xlane.xlu0 %943
    %v945 = vmul.f32 %v941, %v464
    %v946 = vmul.f32 %v944, %v464
    %v947 = vadd.f32 %v945, 1e-08
    %v948 = vadd.f32 %v946, 1e-08
    %v949 = vrsqrt.pop %v947
    %v950 = vrsqrt.pop %v948
    %v951 = vmul.f32 %v935, %v949
    %v952 = vmul.f32 %v936, %v950
    %v953 = vmul.f32 %v477, %v951
    %v954 = vmul.f32 %v477, %v952
    %v955 = vld [vmem:[%s11] sm:$0xff]
    %v956 = vld [vmem:[%s11 + $0x8] sm:$0xff]
    %v957 = vld [vmem:[%s11 + $0x10] sm:$0xff]
    %v958 = vld [vmem:[%s11 + $0x18] sm:$0xff]
    %v959 = vpack.c.bf16 %v480, %v479
    %v960 = vpack.c.bf16 %v956, %v955
    %v961 = vpack.c.bf16 %v958, %v957
    %v962 = vld [vmem:[%s12] sm:$0xff]
    %v963 = vld [vmem:[%s12 + $0x8] sm:$0xff]
    %v964 = vld [vmem:[%s12 + $0x10] sm:$0xff]
    %v965 = vld [vmem:[%s12 + $0x18] sm:$0xff]
    %v966 = vpack.c.bf16 %v954, %v953
    %v967 = vpack.c.bf16 %v963, %v962
    %v968 = vpack.c.bf16 %v965, %v964
    %v970 = vsel %vm68, %v966, 0
    %972 = vmatprep.subr.bf16.mxu0 0
    %973 = vmatpush1.bf16.msra.mxu0 %v967
    %974 = vmatprep.subr.bf16.mxu0 0
    %975 = vmatpush1.bf16.msra.mxu0 %v968
    %976 = vmatprep.subr.bf16.mxu0 0
    %977 = vmatpush1.bf16.msra.mxu0 0
    %978 = vmatprep.subr.bf16.mxu0 0
    %979 = vmatpush1.bf16.msra.mxu0 0
    %980 = vmatprep.subr.bf16.mxu0 0
    %981 = vmatpush1.bf16.msra.mxu0 0
    %982 = vmatprep.subr.bf16.mxu0 0
    %983 = vmatpush1.bf16.msra.mxu0 0
    %984 = vmatprep.subr.bf16.mxu0 0
    %985 = vmatpush1.bf16.msra.mxu0 0
    %986 = vmatprep.subr.bf16.mxu0 0
    %987 = vmatpush1.bf16.msra.mxu0 0
    %988 = vmatprep.subr.bf16.mxu0 0
    %989 = vmatpush1.bf16.msra.mxu0 0
    %990 = vmatprep.subr.bf16.mxu0 0
    %991 = vmatpush1.bf16.msra.mxu0 0
    %992 = vmatprep.subr.bf16.mxu0 0
    %993 = vmatpush1.bf16.msra.mxu0 0
    %994 = vmatprep.subr.bf16.mxu0 0
    %995 = vmatpush1.bf16.msra.mxu0 0
    %996 = vmatprep.subr.bf16.mxu0 0
    %997 = vmatpush1.bf16.msra.mxu0 0
    %998 = vmatprep.subr.bf16.mxu0 0
    %999 = vmatpush1.bf16.msra.mxu0 0
    %1000 = vmatprep.subr.bf16.mxu0 0
    %1001 = vmatpush1.bf16.msra.mxu0 0
    %1002 = vmatprep.subr.bf16.mxu0 0
    %1003 = vmatpush1.bf16.msra.mxu0 0
    %1004 = vmatprep.mubr.bf16.mxu0 0
    %1005 = vmatmul.mubr.bf16.gmra.mrb[0].mxu0 %v970
    %v1006 = vpop.f32.mrb[0].mxu0
    %v1007 = vadd.f32 0.0, %v1006
    %v1008 = vpop.f32.mrb[0].mxu0
    %v1009 = vpop.f32.mrb[0].mxu0
    %v1010 = vadd.f32 0.0, %v1009
    %v1011 = vpop.f32.mrb[0].mxu0
    %1012 = vdwg.mxu0
    %v1014 = vsel %vm68, %v959, 0
    %1016 = vmatprep.subr.bf16.mxu0 0
    %1017 = vmatpush1.bf16.msra.mxu0 %v960
    %1018 = vmatprep.subr.bf16.mxu0 0
    %1019 = vmatpush1.bf16.msra.mxu0 %v961
    %1020 = vmatprep.subr.bf16.mxu0 0
    %1021 = vmatpush1.bf16.msra.mxu0 0
    %1022 = vmatprep.subr.bf16.mxu0 0
    %1023 = vmatpush1.bf16.msra.mxu0 0
    %1024 = vmatprep.subr.bf16.mxu0 0
    %1025 = vmatpush1.bf16.msra.mxu0 0
    %1026 = vmatprep.subr.bf16.mxu0 0
    %1027 = vmatpush1.bf16.msra.mxu0 0
    %1028 = vmatprep.subr.bf16.mxu0 0
    %1029 = vmatpush1.bf16.msra.mxu0 0
    %1030 = vmatprep.subr.bf16.mxu0 0
    %1031 = vmatpush1.bf16.msra.mxu0 0
    %1032 = vmatprep.subr.bf16.mxu0 0
    %1033 = vmatpush1.bf16.msra.mxu0 0
    %1034 = vmatprep.subr.bf16.mxu0 0
    %1035 = vmatpush1.bf16.msra.mxu0 0
    %1036 = vmatprep.subr.bf16.mxu0 0
    %1037 = vmatpush1.bf16.msra.mxu0 0
    %1038 = vmatprep.subr.bf16.mxu0 0
    %1039 = vmatpush1.bf16.msra.mxu0 0
    %1040 = vmatprep.subr.bf16.mxu0 0
    %1041 = vmatpush1.bf16.msra.mxu0 0
    %1042 = vmatprep.subr.bf16.mxu0 0
    %1043 = vmatpush1.bf16.msra.mxu0 0
    %1044 = vmatprep.subr.bf16.mxu0 0
    %1045 = vmatpush1.bf16.msra.mxu0 0
    %1046 = vmatprep.subr.bf16.mxu0 0
    %1047 = vmatpush1.bf16.msra.mxu0 0
    %1048 = vmatprep.mubr.bf16.mxu0 0
    %1049 = vmatmul.mubr.bf16.gmra.mrb[0].mxu0 %v1014
    %v1050 = vpop.f32.mrb[0].mxu0
    %v1051 = vadd.f32 %v1007, %v1050
    %v1052 = vpop.f32.mrb[0].mxu0
    %v1053 = vpop.f32.mrb[0].mxu0
    %v1054 = vadd.f32 %v1010, %v1053
    %v1055 = vpop.f32.mrb[0].mxu0
    %1056 = vdwg.mxu0
    %v1057 = vld [vmem:[%s13] sm:$0x1]
    %v1059 = vlaneseq
    %v1060 = vshrl.u32 %v1059, 7
    %v1061 = vsub.s32 0, %v1060
    %v1062 = vrot.slane %v1057, %v1061
    %v1064 = vadd.f32 %v1051, %v1062
    %v1065 = vadd.f32 %v1054, %v1062
    %v1066 = vld [vmem:[%s1] sm:$0xff]
    %v1067 = vld [vmem:[%s1 + $0x8] sm:$0xff]
    %v1068 = vadd.f32 %v1064, %v1066
    %v1069 = vadd.f32 %v1065, %v1067
    %v1070 = vld [vmem:[%s14] sm:$0x1]
    %v1071 = vmul.f32 %v1068, %v1068
    %v1072 = vmul.f32 %v1069, %v1069
    %v1073 = vsel %vm68, %v1071, 0.0
    %1074 = vadd.xlane.f32.xlu0 %v1073
    %v1075 = vpop.xlane.xlu0 %1074
    %v1076 = vsel %vm68, %v1072, 0.0
    %1077 = vadd.xlane.f32.xlu0 %v1076
    %v1078 = vpop.xlane.xlu0 %1077
    %v1079 = vmul.f32 %v1075, %v464
    %v1080 = vmul.f32 %v1078, %v464
    %v1081 = vadd.f32 %v1079, 1e-08
    %v1082 = vadd.f32 %v1080, 1e-08
    %v1083 = vrsqrt.pop %v1081
    %v1084 = vrsqrt.pop %v1082
    %v1085 = vmul.f32 %v1068, %v1083
    %v1086 = vmul.f32 %v1069, %v1084
    %v1088 = vlaneseq
    %v1089 = vshrl.u32 %v1088, 7
    %v1090 = vsub.s32 0, %v1089
    %v1091 = vrot.slane %v1070, %v1090
    %v1093 = vmul.f32 %v1091, %v1085
    %v1094 = vmul.f32 %v1091, %v1086
    %1095 = vst.msk [vmem:[#allocation2] sm:$0xff] %vm68, %v1093
    %1096 = vst.msk [vmem:[#allocation2 + $0x8] sm:$0xff] %vm68, %v1094
    // Predicated region
    $region62: #{fwd.15} parent=1 // pred_check
      _
    $region63: #{fwd.15} parent=1 // pred_check_branch
      %1098 = sbr.rel (0) target = $region65
    $region64: #{fwd.15} parent=1 // pred_region
      %s1100 = ssub.s32 256, 256
      %1101 = vsyncadd [#allocation3], %s1100
      %s1102 = sshll.u32 [#allocation2], 4
      %s1103 = int_to_ptr.vmem [resolvable:$true] %s1102
      %1108 = dma.vmem_to_hbm [thread:$0]  %s1103, 256, %s15, [#allocation3], 128, 128, 8
    $region65: #{fwd.15} parent=1 // pred_fallthru
      _
    // Predicated region
    $region66: #{fwd.15} parent=1 // pred_check
      _
    $region67: #{fwd.15} parent=1 // pred_check_branch
      %1110 = sbr.rel (0) target = $region69
    $region68: #{fwd.15} parent=1 // pred_region
      %1111 = dma.done [#allocation3], 256
    $region69: #{fwd.15} parent=1 // pred_fallthru
      _
    %1112 = vsyncpa [#allocation3], 1

</llo_original>
